<compile_context>
chip_gen: v7x
topology: tpu7x:2x2x1
jax: 0.10.0
libtpu: 0.0.40
codegen_flags: <defaults>
</compile_context>

<pallas_src>
import math

import jax
import jax.numpy as jnp
from jax.experimental import pallas as pl
from jax.experimental.pallas import tpu as pltpu

INPUT_SIZE = 4
HIDDEN = 32
OUTPUT_SIZE = 3
NUM_HEADS = 4
HEAD_DIM = HIDDEN // NUM_HEADS

# (kernel_size, dilation, padding) for cnn1 / cnn2 / cnn3
CONV_CFG = ((7, 1, 1), (7, 2, 1), (3, 4, 1))


# --------------------------------------------------------------------------
# In-kernel helpers (operate on values; everything stays in vregs/VMEM)
# --------------------------------------------------------------------------
def _conv_bn_relu_pool(x, scale, shift, w2d, b, *, k_taps, dilation, padding):
    """BatchNorm(eval) -> dilated Conv1d (im2col matmul) -> ReLU -> MaxPool(2,2).

    x:   (L_in, C_in), length on sublanes / channels on lanes.
    w2d: (k_taps * C_in, C_out), row-blocks are taps.
    Returns (L_out // 2, C_out).
    """
    l_in, c_in = x.shape
    l_out = l_in + 2 * padding - dilation * (k_taps - 1)

    xb = x * scale + shift                                     # BatchNorm (eval)
    zp = jnp.zeros((padding, c_in), jnp.float32)
    xp = jnp.concatenate([zp, xb, zp], axis=0)                 # conv zero-pad (sublanes)

    # im2col: one MXU push per conv stage instead of one per tap.
    xcol = jnp.concatenate(
        [xp[k * dilation:k * dilation + l_out, :] for k in range(k_taps)], axis=1)
    y = jnp.dot(xcol, w2d, preferred_element_type=jnp.float32) + b
    y = jnp.maximum(y, 0.0)                                    # ReLU

    # MaxPool1d(k=2, s=2) over the length axis.  Even/odd rows are selected
    # with tiny constant 0/1 matmuls (robust: no strided slices / reshapes).
    p_len = l_out // 2
    row = jax.lax.broadcasted_iota(jnp.int32, (p_len, l_out), 0)
    col = jax.lax.broadcasted_iota(jnp.int32, (p_len, l_out), 1)
    sel_even = (col == 2 * row).astype(jnp.float32)
    sel_odd = (col == 2 * row + 1).astype(jnp.float32)
    return jnp.maximum(jnp.dot(sel_even, y, preferred_element_type=jnp.float32),
                       jnp.dot(sel_odd, y, preferred_element_type=jnp.float32))


# --------------------------------------------------------------------------
# Fully fused forward kernel (one grid step per batch element)
# --------------------------------------------------------------------------
def _mugru_kernel(x_ref,
                  bn1_s, bn1_b, w1, c1b,
                  bn2_s, bn2_b, w2, c2b,
                  bn3_s, bn3_b, w3, c3b,
                  wq, bq, wk, bk, wv, bv, wo, bo,
                  wih, bih, whh, bhh,
                  f1w, f1b, f2w, f2b, wscale,
                  o_ref):
    # ---- CNN stack ----
    h = x_ref[...]                                             # (L, input_size)
    h = _conv_bn_relu_pool(h, bn1_s[...], bn1_b[...], w1[...], c1b[...],
                           k_taps=CONV_CFG[0][0], dilation=CONV_CFG[0][1],
                           padding=CONV_CFG[0][2])
    h = _conv_bn_relu_pool(h, bn2_s[...], bn2_b[...], w2[...], c2b[...],
                           k_taps=CONV_CFG[1][0], dilation=CONV_CFG[1][1],
                           padding=CONV_CFG[1][2])
    h = _conv_bn_relu_pool(h, bn3_s[...], bn3_b[...], w3[...], c3b[...],
                           k_taps=CONV_CFG[2][0], dilation=CONV_CFG[2][1],
                           padding=CONV_CFG[2][2])
    # h: (L3, HIDDEN)  -- key == value == h; query_linear folded into wq/bq.

    # ---- multi-head attention ----
    q = jnp.dot(h, wq[...], preferred_element_type=jnp.float32) + bq[...]
    k = jnp.dot(h, wk[...], preferred_element_type=jnp.float32) + bk[...]
    v = jnp.dot(h, wv[...], preferred_element_type=jnp.float32) + bv[...]
    scl = 1.0 / math.sqrt(HEAD_DIM)
    heads = []
    for hh in range(NUM_HEADS):                                # static, unrolled
        sl = slice(hh * HEAD_DIM, (hh + 1) * HEAD_DIM)
        qh, kh, vh = q[:, sl], k[:, sl], v[:, sl]
        s = jax.lax.dot_general(qh, kh, (((1,), (1,)), ((), ())),
                                preferred_element_type=jnp.float32) * scl
        s = s - jnp.max(s, axis=-1, keepdims=True)
        e = jnp.exp(s)
        a = e / jnp.sum(e, axis=-1, keepdims=True)
        heads.append(jnp.dot(a, vh, preferred_element_type=jnp.float32))
    ctx = jnp.concatenate(heads, axis=-1)
    attn = jnp.dot(ctx, wo[...], preferred_element_type=jnp.float32) + bo[...]

    # ---- GRU: input projection hoisted out of the (unrolled) recurrence ----
    gi_all = jnp.dot(attn, wih[...], preferred_element_type=jnp.float32) + bih[...]
    whh_v, bhh_v = whh[...], bhh[...]
    hstate = jnp.zeros((1, HIDDEN), jnp.float32)
    for t in range(attn.shape[0]):                             # L3 = 6, static
        gi = gi_all[t:t + 1, :]
        gh = jnp.dot(hstate, whh_v, preferred_element_type=jnp.float32) + bhh_v
        r = jax.nn.sigmoid(gi[:, 0:HIDDEN] + gh[:, 0:HIDDEN])
        z = jax.nn.sigmoid(gi[:, HIDDEN:2 * HIDDEN] + gh[:, HIDDEN:2 * HIDDEN])
        n = jnp.tanh(gi[:, 2 * HIDDEN:3 * HIDDEN] + r * gh[:, 2 * HIDDEN:3 * HIDDEN])
        hstate = (1.0 - z) * n + z * hstate

    # ---- head: fc1 + ReLU + (dropout = identity) + fc2 + scalar weight ----
    y = jnp.maximum(jnp.dot(hstate, f1w[...],
                            preferred_element_type=jnp.float32) + f1b[...], 0.0)
    o = jnp.dot(y, f2w[...], preferred_element_type=jnp.float32) + f2b[...]
    o_ref[...] = o * wscale[...]


# --------------------------------------------------------------------------
# Wrapper
# --------------------------------------------------------------------------
def mugru_forward(x, p):
    # x: (B, L, input_size)
    B, L, C_in = x.shape

    # Fold query_linear into the Q projection (exact: composition of affines).
    wq_f = jnp.dot(p["q_lin_w"], p["wq"])
    bq_f = jnp.dot(p["q_lin_b"], p["wq"]) + p["bq"]

    def rep(shape):
        return pl.BlockSpec(shape, lambda b: (0,) * len(shape))

    in_specs = [
        pl.BlockSpec((None, L, C_in), lambda b: (b, 0, 0)),
        rep(p["bn1_scale"].shape), rep(p["bn1_shift"].shape),
        rep(p["conv1_w"].shape), rep(p["conv1_b"].shape),
        rep(p["bn2_scale"].shape), rep(p["bn2_shift"].shape),
        rep(p["conv2_w"].shape), rep(p["conv2_b"].shape),
        rep(p["bn3_scale"].shape), rep(p["bn3_shift"].shape),
        rep(p["conv3_w"].shape), rep(p["conv3_b"].shape),
        rep(wq_f.shape), rep(bq_f.shape),
        rep(p["wk"].shape), rep(p["bk"].shape),
        rep(p["wv"].shape), rep(p["bv"].shape),
        rep(p["wo"].shape), rep(p["bo"].shape),
        rep(p["gru_wih"].shape), rep(p["gru_bih"].shape),
        rep(p["gru_whh"].shape), rep(p["gru_bhh"].shape),
        rep(p["fc1_w"].shape), rep(p["fc1_b"].shape),
        rep(p["fc2_w"].shape), rep(p["fc2_b"].shape),
        rep(p["weight"].shape),
    ]

    out = pl.pallas_call(
        _mugru_kernel,
        out_shape=jax.ShapeDtypeStruct((B, 1, OUTPUT_SIZE), jnp.float32),
        grid=(B,),
        in_specs=in_specs,
        out_specs=pl.BlockSpec((None, 1, OUTPUT_SIZE), lambda b: (b, 0, 0)),
        compiler_params=pltpu.CompilerParams(dimension_semantics=("parallel",)),
    )(x,
      p["bn1_scale"], p["bn1_shift"], p["conv1_w"], p["conv1_b"],
      p["bn2_scale"], p["bn2_shift"], p["conv2_w"], p["conv2_b"],
      p["bn3_scale"], p["bn3_shift"], p["conv3_w"], p["conv3_b"],
      wq_f, bq_f, p["wk"], p["bk"], p["wv"], p["bv"], p["wo"], p["bo"],
      p["gru_wih"], p["gru_bih"], p["gru_whh"], p["gru_bhh"],
      p["fc1_w"], p["fc1_b"], p["fc2_w"], p["fc2_b"], p["weight"])
    return out[:, 0, :]


# --------------------------------------------------------------------------
# Parameter init (deterministic, PyTorch-style uniform bounds)
# --------------------------------------------------------------------------
def init_params(key):
    ks = jax.random.split(key, 24)
    ki = iter(range(24))

    def u(shape, fan_in):
        bound = 1.0 / math.sqrt(fan_in)
        return jax.random.uniform(ks[next(ki)], shape, jnp.float32, -bound, bound)

    eps = 1e-5
    bn_scale = 1.0 / math.sqrt(1.0 + eps)
    p = {
        # BatchNorm (eval mode, default running stats) as per-channel affine.
        "bn1_scale": jnp.full((1, INPUT_SIZE), bn_scale, jnp.float32),
        "bn1_shift": jnp.zeros((1, INPUT_SIZE), jnp.float32),
        "bn2_scale": jnp.full((1, HIDDEN), bn_scale, jnp.float32),
        "bn2_shift": jnp.zeros((1, HIDDEN), jnp.float32),
        "bn3_scale": jnp.full((1, HIDDEN), bn_scale, jnp.float32),
        "bn3_shift": jnp.zeros((1, HIDDEN), jnp.float32),
        # Conv weights stored im2col-ready: (K * C_in, C_out); biases (1, C_out).
        "conv1_w": u((7 * INPUT_SIZE, HIDDEN), INPUT_SIZE * 7),
        "conv1_b": u((1, HIDDEN), INPUT_SIZE * 7),
        "conv2_w": u((7 * HIDDEN, HIDDEN), HIDDEN * 7),
        "conv2_b": u((1, HIDDEN), HIDDEN * 7),
        "conv3_w": u((3 * HIDDEN, HIDDEN), HIDDEN * 3),
        "conv3_b": u((1, HIDDEN), HIDDEN * 3),
        # Linear weights stored as (in, out).
        "q_lin_w": u((HIDDEN, HIDDEN), HIDDEN), "q_lin_b": u((1, HIDDEN), HIDDEN),
        "wq": u((HIDDEN, HIDDEN), HIDDEN), "bq": u((1, HIDDEN), HIDDEN),
        "wk": u((HIDDEN, HIDDEN), HIDDEN), "bk": u((1, HIDDEN), HIDDEN),
        "wv": u((HIDDEN, HIDDEN), HIDDEN), "bv": u((1, HIDDEN), HIDDEN),
        "wo": u((HIDDEN, HIDDEN), HIDDEN), "bo": u((1, HIDDEN), HIDDEN),
        # GRU (PyTorch (3H, H) layout transposed to (H, 3H); gate order r,z,n).
        "gru_wih": u((HIDDEN, 3 * HIDDEN), HIDDEN),
        "gru_whh": u((HIDDEN, 3 * HIDDEN), HIDDEN),
        "gru_bih": u((1, 3 * HIDDEN), HIDDEN),
        "gru_bhh": u((1, 3 * HIDDEN), HIDDEN),
        "fc1_w": u((HIDDEN, HIDDEN), HIDDEN), "fc1_b": u((1, HIDDEN), HIDDEN),
        "fc2_w": u((HIDDEN, OUTPUT_SIZE), HIDDEN), "fc2_b": u((1, OUTPUT_SIZE), HIDDEN),
        "weight": jnp.array([[0.8]], jnp.float32),
    }
    return p


if __name__ == "__main__":
    root = jax.random.PRNGKey(0)
    pkey, xkey = jax.random.split(root)
    params = init_params(pkey)

    B, L = 2, 96                 # sequence shrinks 96 -> 46 -> 18 -> 6 over the CNN stack
    x = jax.random.normal(xkey, (B, L, INPUT_SIZE), jnp.float32)

    out = mugru_forward(x, params)
    out = jax.block_until_ready(out)
    assert out.shape == (B, OUTPUT_SIZE)
    assert bool(jnp.all(jnp.isfinite(out)))
    print("KERNEL_OK")
</pallas_src>

<mosaic_0001>
module attributes {stable_mosaic.version = 11 : i64} {
  func.func @_mugru_kernel(%arg0: i32, %arg1: memref<1x96x4xf32, #tpu.memory_space<vmem>>, %arg2: memref<1x4xf32, #tpu.memory_space<vmem>>, %arg3: memref<1x4xf32, #tpu.memory_space<vmem>>, %arg4: memref<28x32xf32, #tpu.memory_space<vmem>>, %arg5: memref<1x32xf32, #tpu.memory_space<vmem>>, %arg6: memref<1x32xf32, #tpu.memory_space<vmem>>, %arg7: memref<1x32xf32, #tpu.memory_space<vmem>>, %arg8: memref<224x32xf32, #tpu.memory_space<vmem>>, %arg9: memref<1x32xf32, #tpu.memory_space<vmem>>, %arg10: memref<1x32xf32, #tpu.memory_space<vmem>>, %arg11: memref<1x32xf32, #tpu.memory_space<vmem>>, %arg12: memref<96x32xf32, #tpu.memory_space<vmem>>, %arg13: memref<1x32xf32, #tpu.memory_space<vmem>>, %arg14: memref<32x32xf32, #tpu.memory_space<vmem>>, %arg15: memref<1x32xf32, #tpu.memory_space<vmem>>, %arg16: memref<32x32xf32, #tpu.memory_space<vmem>>, %arg17: memref<1x32xf32, #tpu.memory_space<vmem>>, %arg18: memref<32x32xf32, #tpu.memory_space<vmem>>, %arg19: memref<1x32xf32, #tpu.memory_space<vmem>>, %arg20: memref<32x32xf32, #tpu.memory_space<vmem>>, %arg21: memref<1x32xf32, #tpu.memory_space<vmem>>, %arg22: memref<32x96xf32, #tpu.memory_space<vmem>>, %arg23: memref<1x96xf32, #tpu.memory_space<vmem>>, %arg24: memref<32x96xf32, #tpu.memory_space<vmem>>, %arg25: memref<1x96xf32, #tpu.memory_space<vmem>>, %arg26: memref<32x32xf32, #tpu.memory_space<vmem>>, %arg27: memref<1x32xf32, #tpu.memory_space<vmem>>, %arg28: memref<32x3xf32, #tpu.memory_space<vmem>>, %arg29: memref<1x3xf32, #tpu.memory_space<vmem>>, %arg30: memref<1x1xf32, #tpu.memory_space<vmem>>, %arg31: memref<1x1x3xf32, #tpu.memory_space<vmem>>) attributes {dimension_semantics = [#tpu.dimension_semantics<parallel>], iteration_bounds = array<i64: 2>, scalar_prefetch = 0 : i64, scratch_operands = 0 : i64, tpu.core_type = #tpu.core_type<tc>, window_params = [{transform_indices = @transform_0, window_bounds = array<i64: 1, 96, 4>}, {pipeline_mode = #tpu.pipeline_mode<synchronous>, transform_indices = @transform_1, window_bounds = array<i64: 1, 4>}, {pipeline_mode = #tpu.pipeline_mode<synchronous>, transform_indices = @transform_2, window_bounds = array<i64: 1, 4>}, {pipeline_mode = #tpu.pipeline_mode<synchronous>, transform_indices = @transform_3, window_bounds = array<i64: 28, 32>}, {pipeline_mode = #tpu.pipeline_mode<synchronous>, transform_indices = @transform_4, window_bounds = array<i64: 1, 32>}, {pipeline_mode = #tpu.pipeline_mode<synchronous>, transform_indices = @transform_5, window_bounds = array<i64: 1, 32>}, {pipeline_mode = #tpu.pipeline_mode<synchronous>, transform_indices = @transform_6, window_bounds = array<i64: 1, 32>}, {pipeline_mode = #tpu.pipeline_mode<synchronous>, transform_indices = @transform_7, window_bounds = array<i64: 224, 32>}, {pipeline_mode = #tpu.pipeline_mode<synchronous>, transform_indices = @transform_8, window_bounds = array<i64: 1, 32>}, {pipeline_mode = #tpu.pipeline_mode<synchronous>, transform_indices = @transform_9, window_bounds = array<i64: 1, 32>}, {pipeline_mode = #tpu.pipeline_mode<synchronous>, transform_indices = @transform_10, window_bounds = array<i64: 1, 32>}, {pipeline_mode = #tpu.pipeline_mode<synchronous>, transform_indices = @transform_11, window_bounds = array<i64: 96, 32>}, {pipeline_mode = #tpu.pipeline_mode<synchronous>, transform_indices = @transform_12, window_bounds = array<i64: 1, 32>}, {pipeline_mode = #tpu.pipeline_mode<synchronous>, transform_indices = @transform_13, window_bounds = array<i64: 32, 32>}, {pipeline_mode = #tpu.pipeline_mode<synchronous>, transform_indices = @transform_14, window_bounds = array<i64: 1, 32>}, {pipeline_mode = #tpu.pipeline_mode<synchronous>, transform_indices = @transform_15, window_bounds = array<i64: 32, 32>}, {pipeline_mode = #tpu.pipeline_mode<synchronous>, transform_indices = @transform_16, window_bounds = array<i64: 1, 32>}, {pipeline_mode = #tpu.pipeline_mode<synchronous>, transform_indices = @transform_17, window_bounds = array<i64: 32, 32>}, {pipeline_mode = #tpu.pipeline_mode<synchronous>, transform_indices = @transform_18, window_bounds = array<i64: 1, 32>}, {pipeline_mode = #tpu.pipeline_mode<synchronous>, transform_indices = @transform_19, window_bounds = array<i64: 32, 32>}, {pipeline_mode = #tpu.pipeline_mode<synchronous>, transform_indices = @transform_20, window_bounds = array<i64: 1, 32>}, {pipeline_mode = #tpu.pipeline_mode<synchronous>, transform_indices = @transform_21, window_bounds = array<i64: 32, 96>}, {pipeline_mode = #tpu.pipeline_mode<synchronous>, transform_indices = @transform_22, window_bounds = array<i64: 1, 96>}, {pipeline_mode = #tpu.pipeline_mode<synchronous>, transform_indices = @transform_23, window_bounds = array<i64: 32, 96>}, {pipeline_mode = #tpu.pipeline_mode<synchronous>, transform_indices = @transform_24, window_bounds = array<i64: 1, 96>}, {pipeline_mode = #tpu.pipeline_mode<synchronous>, transform_indices = @transform_25, window_bounds = array<i64: 32, 32>}, {pipeline_mode = #tpu.pipeline_mode<synchronous>, transform_indices = @transform_26, window_bounds = array<i64: 1, 32>}, {pipeline_mode = #tpu.pipeline_mode<synchronous>, transform_indices = @transform_27, window_bounds = array<i64: 32, 3>}, {pipeline_mode = #tpu.pipeline_mode<synchronous>, transform_indices = @transform_28, window_bounds = array<i64: 1, 3>}, {pipeline_mode = #tpu.pipeline_mode<synchronous>, transform_indices = @transform_29, window_bounds = array<i64: 1, 1>}, {transform_indices = @transform_30, window_bounds = array<i64: 1, 1, 3>}]} {
    %c0 = arith.constant 0 : index
    %c0_0 = arith.constant 0 : index
    %c0_1 = arith.constant 0 : index
    %0 = vector.load %arg1[%c0, %c0_0, %c0_1] : memref<1x96x4xf32, #tpu.memory_space<vmem>>, vector<1x96x4xf32>
    %1 = vector.shape_cast %0 : vector<1x96x4xf32> to vector<96x4xf32>
    %c0_2 = arith.constant 0 : index
    %c0_3 = arith.constant 0 : index
    %2 = vector.load %arg2[%c0_2, %c0_3] : memref<1x4xf32, #tpu.memory_space<vmem>>, vector<1x4xf32>
    %c0_4 = arith.constant 0 : index
    %c0_5 = arith.constant 0 : index
    %3 = vector.load %arg3[%c0_4, %c0_5] : memref<1x4xf32, #tpu.memory_space<vmem>>, vector<1x4xf32>
    %c0_6 = arith.constant 0 : index
    %c0_7 = arith.constant 0 : index
    %4 = vector.load %arg4[%c0_6, %c0_7] : memref<28x32xf32, #tpu.memory_space<vmem>>, vector<28x32xf32>
    %c0_8 = arith.constant 0 : index
    %c0_9 = arith.constant 0 : index
    %5 = vector.load %arg5[%c0_8, %c0_9] : memref<1x32xf32, #tpu.memory_space<vmem>>, vector<1x32xf32>
    %6 = vector.broadcast %2 : vector<1x4xf32> to vector<96x4xf32>
    %7 = arith.mulf %1, %6 : vector<96x4xf32>
    %8 = vector.broadcast %3 : vector<1x4xf32> to vector<96x4xf32>
    %9 = arith.addf %7, %8 : vector<96x4xf32>
    %cst = arith.constant 0.000000e+00 : f32
    %10 = vector.broadcast %cst : f32 to vector<1x4xf32>
    %11 = tpu.concatenate %10, %9, %10 in 0 : vector<1x4xf32>, vector<96x4xf32>, vector<1x4xf32> -> vector<98x4xf32>
    %12 = vector.extract_strided_slice %11 {offsets = [0, 0], sizes = [92, 4], strides = [1, 1]} : vector<98x4xf32> to vector<92x4xf32>
    %13 = vector.extract_strided_slice %11 {offsets = [1, 0], sizes = [92, 4], strides = [1, 1]} : vector<98x4xf32> to vector<92x4xf32>
    %14 = vector.extract_strided_slice %11 {offsets = [2, 0], sizes = [92, 4], strides = [1, 1]} : vector<98x4xf32> to vector<92x4xf32>
    %15 = vector.extract_strided_slice %11 {offsets = [3, 0], sizes = [92, 4], strides = [1, 1]} : vector<98x4xf32> to vector<92x4xf32>
    %16 = vector.extract_strided_slice %11 {offsets = [4, 0], sizes = [92, 4], strides = [1, 1]} : vector<98x4xf32> to vector<92x4xf32>
    %17 = vector.extract_strided_slice %11 {offsets = [5, 0], sizes = [92, 4], strides = [1, 1]} : vector<98x4xf32> to vector<92x4xf32>
    %18 = vector.extract_strided_slice %11 {offsets = [6, 0], sizes = [92, 4], strides = [1, 1]} : vector<98x4xf32> to vector<92x4xf32>
    %19 = tpu.concatenate %12, %13, %14, %15, %16, %17, %18 in 1 : vector<92x4xf32>, vector<92x4xf32>, vector<92x4xf32>, vector<92x4xf32>, vector<92x4xf32>, vector<92x4xf32>, vector<92x4xf32> -> vector<92x28xf32>
    %cst_10 = arith.constant dense<0.000000e+00> : vector<92x32xf32>
    %20 = tpu.matmul %19, %4, %cst_10 {dimension_numbers = #tpu.dot_dimension_numbers<[1], [0], [0], [1], [0, 0, 1, 1], [], []>} : vector<92x28xf32>, vector<28x32xf32>, vector<92x32xf32> -> vector<92x32xf32>
    %21 = vector.broadcast %5 : vector<1x32xf32> to vector<92x32xf32>
    %22 = arith.addf %20, %21 : vector<92x32xf32>
    %cst_11 = arith.constant 0.000000e+00 : f32
    %23 = vector.broadcast %cst_11 : f32 to vector<92x32xf32>
    %24 = arith.maximumf %22, %23 : vector<92x32xf32>
    %25 = tpu.iota {dimensions = array<i32: 0>} : vector<46x92xi32>
    %26 = tpu.iota {dimensions = array<i32: 1>} : vector<46x92xi32>
    %c2_i32 = arith.constant 2 : i32
    %27 = vector.broadcast %c2_i32 : i32 to vector<46x92xi32>
    %28 = arith.muli %27, %25 : vector<46x92xi32>
    %29 = arith.cmpi eq, %26, %28 : vector<46x92xi32>
    %30 = arith.extui %29 : vector<46x92xi1> to vector<46x92xi32>
    %31 = arith.sitofp %30 : vector<46x92xi32> to vector<46x92xf32>
    %c2_i32_12 = arith.constant 2 : i32
    %32 = vector.broadcast %c2_i32_12 : i32 to vector<46x92xi32>
    %33 = arith.muli %32, %25 : vector<46x92xi32>
    %c1_i32 = arith.constant 1 : i32
    %34 = vector.broadcast %c1_i32 : i32 to vector<46x92xi32>
    %35 = arith.addi %33, %34 : vector<46x92xi32>
    %36 = arith.cmpi eq, %26, %35 : vector<46x92xi32>
    %37 = arith.extui %36 : vector<46x92xi1> to vector<46x92xi32>
    %38 = arith.sitofp %37 : vector<46x92xi32> to vector<46x92xf32>
    %cst_13 = arith.constant dense<0.000000e+00> : vector<46x32xf32>
    %39 = tpu.matmul %31, %24, %cst_13 {dimension_numbers = #tpu.dot_dimension_numbers<[1], [0], [0], [1], [0, 0, 1, 1], [], []>} : vector<46x92xf32>, vector<92x32xf32>, vector<46x32xf32> -> vector<46x32xf32>
    %cst_14 = arith.constant dense<0.000000e+00> : vector<46x32xf32>
    %40 = tpu.matmul %38, %24, %cst_14 {dimension_numbers = #tpu.dot_dimension_numbers<[1], [0], [0], [1], [0, 0, 1, 1], [], []>} : vector<46x92xf32>, vector<92x32xf32>, vector<46x32xf32> -> vector<46x32xf32>
    %41 = arith.maximumf %39, %40 : vector<46x32xf32>
    %c0_15 = arith.constant 0 : index
    %c0_16 = arith.constant 0 : index
    %42 = vector.load %arg6[%c0_15, %c0_16] : memref<1x32xf32, #tpu.memory_space<vmem>>, vector<1x32xf32>
    %c0_17 = arith.constant 0 : index
    %c0_18 = arith.constant 0 : index
    %43 = vector.load %arg7[%c0_17, %c0_18] : memref<1x32xf32, #tpu.memory_space<vmem>>, vector<1x32xf32>
    %c0_19 = arith.constant 0 : index
    %c0_20 = arith.constant 0 : index
    %44 = vector.load %arg8[%c0_19, %c0_20] : memref<224x32xf32, #tpu.memory_space<vmem>>, vector<224x32xf32>
    %c0_21 = arith.constant 0 : index
    %c0_22 = arith.constant 0 : index
    %45 = vector.load %arg9[%c0_21, %c0_22] : memref<1x32xf32, #tpu.memory_space<vmem>>, vector<1x32xf32>
    %46 = vector.broadcast %42 : vector<1x32xf32> to vector<46x32xf32>
    %47 = arith.mulf %41, %46 : vector<46x32xf32>
    %48 = vector.broadcast %43 : vector<1x32xf32> to vector<46x32xf32>
    %49 = arith.addf %47, %48 : vector<46x32xf32>
    %cst_23 = arith.constant 0.000000e+00 : f32
    %50 = vector.broadcast %cst_23 : f32 to vector<1x32xf32>
    %51 = tpu.concatenate %50, %49, %50 in 0 : vector<1x32xf32>, vector<46x32xf32>, vector<1x32xf32> -> vector<48x32xf32>
    %52 = vector.extract_strided_slice %51 {offsets = [0, 0], sizes = [36, 32], strides = [1, 1]} : vector<48x32xf32> to vector<36x32xf32>
    %53 = vector.extract_strided_slice %51 {offsets = [2, 0], sizes = [36, 32], strides = [1, 1]} : vector<48x32xf32> to vector<36x32xf32>
    %54 = vector.extract_strided_slice %51 {offsets = [4, 0], sizes = [36, 32], strides = [1, 1]} : vector<48x32xf32> to vector<36x32xf32>
    %55 = vector.extract_strided_slice %51 {offsets = [6, 0], sizes = [36, 32], strides = [1, 1]} : vector<48x32xf32> to vector<36x32xf32>
    %56 = vector.extract_strided_slice %51 {offsets = [8, 0], sizes = [36, 32], strides = [1, 1]} : vector<48x32xf32> to vector<36x32xf32>
    %57 = vector.extract_strided_slice %51 {offsets = [10, 0], sizes = [36, 32], strides = [1, 1]} : vector<48x32xf32> to vector<36x32xf32>
    %58 = vector.extract_strided_slice %51 {offsets = [12, 0], sizes = [36, 32], strides = [1, 1]} : vector<48x32xf32> to vector<36x32xf32>
    %59 = tpu.concatenate %52, %53, %54, %55, %56, %57, %58 in 1 : vector<36x32xf32>, vector<36x32xf32>, vector<36x32xf32>, vector<36x32xf32>, vector<36x32xf32>, vector<36x32xf32>, vector<36x32xf32> -> vector<36x224xf32>
    %cst_24 = arith.constant dense<0.000000e+00> : vector<36x32xf32>
    %60 = tpu.matmul %59, %44, %cst_24 {dimension_numbers = #tpu.dot_dimension_numbers<[1], [0], [0], [1], [0, 0, 1, 1], [], []>} : vector<36x224xf32>, vector<224x32xf32>, vector<36x32xf32> -> vector<36x32xf32>
    %61 = vector.broadcast %45 : vector<1x32xf32> to vector<36x32xf32>
    %62 = arith.addf %60, %61 : vector<36x32xf32>
    %cst_25 = arith.constant 0.000000e+00 : f32
    %63 = vector.broadcast %cst_25 : f32 to vector<36x32xf32>
    %64 = arith.maximumf %62, %63 : vector<36x32xf32>
    %65 = tpu.iota {dimensions = array<i32: 0>} : vector<18x36xi32>
    %66 = tpu.iota {dimensions = array<i32: 1>} : vector<18x36xi32>
    %c2_i32_26 = arith.constant 2 : i32
    %67 = vector.broadcast %c2_i32_26 : i32 to vector<18x36xi32>
    %68 = arith.muli %67, %65 : vector<18x36xi32>
    %69 = arith.cmpi eq, %66, %68 : vector<18x36xi32>
    %70 = arith.extui %69 : vector<18x36xi1> to vector<18x36xi32>
    %71 = arith.sitofp %70 : vector<18x36xi32> to vector<18x36xf32>
    %c2_i32_27 = arith.constant 2 : i32
    %72 = vector.broadcast %c2_i32_27 : i32 to vector<18x36xi32>
    %73 = arith.muli %72, %65 : vector<18x36xi32>
    %c1_i32_28 = arith.constant 1 : i32
    %74 = vector.broadcast %c1_i32_28 : i32 to vector<18x36xi32>
    %75 = arith.addi %73, %74 : vector<18x36xi32>
    %76 = arith.cmpi eq, %66, %75 : vector<18x36xi32>
    %77 = arith.extui %76 : vector<18x36xi1> to vector<18x36xi32>
    %78 = arith.sitofp %77 : vector<18x36xi32> to vector<18x36xf32>
    %cst_29 = arith.constant dense<0.000000e+00> : vector<18x32xf32>
    %79 = tpu.matmul %71, %64, %cst_29 {dimension_numbers = #tpu.dot_dimension_numbers<[1], [0], [0], [1], [0, 0, 1, 1], [], []>} : vector<18x36xf32>, vector<36x32xf32>, vector<18x32xf32> -> vector<18x32xf32>
    %cst_30 = arith.constant dense<0.000000e+00> : vector<18x32xf32>
    %80 = tpu.matmul %78, %64, %cst_30 {dimension_numbers = #tpu.dot_dimension_numbers<[1], [0], [0], [1], [0, 0, 1, 1], [], []>} : vector<18x36xf32>, vector<36x32xf32>, vector<18x32xf32> -> vector<18x32xf32>
    %81 = arith.maximumf %79, %80 : vector<18x32xf32>
    %c0_31 = arith.constant 0 : index
    %c0_32 = arith.constant 0 : index
    %82 = vector.load %arg10[%c0_31, %c0_32] : memref<1x32xf32, #tpu.memory_space<vmem>>, vector<1x32xf32>
    %c0_33 = arith.constant 0 : index
    %c0_34 = arith.constant 0 : index
    %83 = vector.load %arg11[%c0_33, %c0_34] : memref<1x32xf32, #tpu.memory_space<vmem>>, vector<1x32xf32>
    %c0_35 = arith.constant 0 : index
    %c0_36 = arith.constant 0 : index
    %84 = vector.load %arg12[%c0_35, %c0_36] : memref<96x32xf32, #tpu.memory_space<vmem>>, vector<96x32xf32>
    %c0_37 = arith.constant 0 : index
    %c0_38 = arith.constant 0 : index
    %85 = vector.load %arg13[%c0_37, %c0_38] : memref<1x32xf32, #tpu.memory_space<vmem>>, vector<1x32xf32>
    %86 = vector.broadcast %82 : vector<1x32xf32> to vector<18x32xf32>
    %87 = arith.mulf %81, %86 : vector<18x32xf32>
    %88 = vector.broadcast %83 : vector<1x32xf32> to vector<18x32xf32>
    %89 = arith.addf %87, %88 : vector<18x32xf32>
    %cst_39 = arith.constant 0.000000e+00 : f32
    %90 = vector.broadcast %cst_39 : f32 to vector<1x32xf32>
    %91 = tpu.concatenate %90, %89, %90 in 0 : vector<1x32xf32>, vector<18x32xf32>, vector<1x32xf32> -> vector<20x32xf32>
    %92 = vector.extract_strided_slice %91 {offsets = [0, 0], sizes = [12, 32], strides = [1, 1]} : vector<20x32xf32> to vector<12x32xf32>
    %93 = vector.extract_strided_slice %91 {offsets = [4, 0], sizes = [12, 32], strides = [1, 1]} : vector<20x32xf32> to vector<12x32xf32>
    %94 = vector.extract_strided_slice %91 {offsets = [8, 0], sizes = [12, 32], strides = [1, 1]} : vector<20x32xf32> to vector<12x32xf32>
    %95 = tpu.concatenate %92, %93, %94 in 1 : vector<12x32xf32>, vector<12x32xf32>, vector<12x32xf32> -> vector<12x96xf32>
    %cst_40 = arith.constant dense<0.000000e+00> : vector<12x32xf32>
    %96 = tpu.matmul %95, %84, %cst_40 {dimension_numbers = #tpu.dot_dimension_numbers<[1], [0], [0], [1], [0, 0, 1, 1], [], []>} : vector<12x96xf32>, vector<96x32xf32>, vector<12x32xf32> -> vector<12x32xf32>
    %97 = vector.broadcast %85 : vector<1x32xf32> to vector<12x32xf32>
    %98 = arith.addf %96, %97 : vector<12x32xf32>
    %cst_41 = arith.constant 0.000000e+00 : f32
    %99 = vector.broadcast %cst_41 : f32 to vector<12x32xf32>
    %100 = arith.maximumf %98, %99 : vector<12x32xf32>
    %101 = tpu.iota {dimensions = array<i32: 0>} : vector<6x12xi32>
    %102 = tpu.iota {dimensions = array<i32: 1>} : vector<6x12xi32>
    %c2_i32_42 = arith.constant 2 : i32
    %103 = vector.broadcast %c2_i32_42 : i32 to vector<6x12xi32>
    %104 = arith.muli %103, %101 : vector<6x12xi32>
    %105 = arith.cmpi eq, %102, %104 : vector<6x12xi32>
    %106 = arith.extui %105 : vector<6x12xi1> to vector<6x12xi32>
    %107 = arith.sitofp %106 : vector<6x12xi32> to vector<6x12xf32>
    %c2_i32_43 = arith.constant 2 : i32
    %108 = vector.broadcast %c2_i32_43 : i32 to vector<6x12xi32>
    %109 = arith.muli %108, %101 : vector<6x12xi32>
    %c1_i32_44 = arith.constant 1 : i32
    %110 = vector.broadcast %c1_i32_44 : i32 to vector<6x12xi32>
    %111 = arith.addi %109, %110 : vector<6x12xi32>
    %112 = arith.cmpi eq, %102, %111 : vector<6x12xi32>
    %113 = arith.extui %112 : vector<6x12xi1> to vector<6x12xi32>
    %114 = arith.sitofp %113 : vector<6x12xi32> to vector<6x12xf32>
    %cst_45 = arith.constant dense<0.000000e+00> : vector<6x32xf32>
    %115 = tpu.matmul %107, %100, %cst_45 {dimension_numbers = #tpu.dot_dimension_numbers<[1], [0], [0], [1], [0, 0, 1, 1], [], []>} : vector<6x12xf32>, vector<12x32xf32>, vector<6x32xf32> -> vector<6x32xf32>
    %cst_46 = arith.constant dense<0.000000e+00> : vector<6x32xf32>
    %116 = tpu.matmul %114, %100, %cst_46 {dimension_numbers = #tpu.dot_dimension_numbers<[1], [0], [0], [1], [0, 0, 1, 1], [], []>} : vector<6x12xf32>, vector<12x32xf32>, vector<6x32xf32> -> vector<6x32xf32>
    %117 = arith.maximumf %115, %116 : vector<6x32xf32>
    %c0_47 = arith.constant 0 : index
    %c0_48 = arith.constant 0 : index
    %118 = vector.load %arg14[%c0_47, %c0_48] : memref<32x32xf32, #tpu.memory_space<vmem>>, vector<32x32xf32>
    %cst_49 = arith.constant dense<0.000000e+00> : vector<6x32xf32>
    %119 = tpu.matmul %117, %118, %cst_49 {dimension_numbers = #tpu.dot_dimension_numbers<[1], [0], [0], [1], [0, 0, 1, 1], [], []>} : vector<6x32xf32>, vector<32x32xf32>, vector<6x32xf32> -> vector<6x32xf32>
    %c0_50 = arith.constant 0 : index
    %c0_51 = arith.constant 0 : index
    %120 = vector.load %arg15[%c0_50, %c0_51] : memref<1x32xf32, #tpu.memory_space<vmem>>, vector<1x32xf32>
    %121 = vector.broadcast %120 : vector<1x32xf32> to vector<6x32xf32>
    %122 = arith.addf %119, %121 : vector<6x32xf32>
    %c0_52 = arith.constant 0 : index
    %c0_53 = arith.constant 0 : index
    %123 = vector.load %arg16[%c0_52, %c0_53] : memref<32x32xf32, #tpu.memory_space<vmem>>, vector<32x32xf32>
    %cst_54 = arith.constant dense<0.000000e+00> : vector<6x32xf32>
    %124 = tpu.matmul %117, %123, %cst_54 {dimension_numbers = #tpu.dot_dimension_numbers<[1], [0], [0], [1], [0, 0, 1, 1], [], []>} : vector<6x32xf32>, vector<32x32xf32>, vector<6x32xf32> -> vector<6x32xf32>
    %c0_55 = arith.constant 0 : index
    %c0_56 = arith.constant 0 : index
    %125 = vector.load %arg17[%c0_55, %c0_56] : memref<1x32xf32, #tpu.memory_space<vmem>>, vector<1x32xf32>
    %126 = vector.broadcast %125 : vector<1x32xf32> to vector<6x32xf32>
    %127 = arith.addf %124, %126 : vector<6x32xf32>
    %c0_57 = arith.constant 0 : index
    %c0_58 = arith.constant 0 : index
    %128 = vector.load %arg18[%c0_57, %c0_58] : memref<32x32xf32, #tpu.memory_space<vmem>>, vector<32x32xf32>
    %cst_59 = arith.constant dense<0.000000e+00> : vector<6x32xf32>
    %129 = tpu.matmul %117, %128, %cst_59 {dimension_numbers = #tpu.dot_dimension_numbers<[1], [0], [0], [1], [0, 0, 1, 1], [], []>} : vector<6x32xf32>, vector<32x32xf32>, vector<6x32xf32> -> vector<6x32xf32>
    %c0_60 = arith.constant 0 : index
    %c0_61 = arith.constant 0 : index
    %130 = vector.load %arg19[%c0_60, %c0_61] : memref<1x32xf32, #tpu.memory_space<vmem>>, vector<1x32xf32>
    %131 = vector.broadcast %130 : vector<1x32xf32> to vector<6x32xf32>
    %132 = arith.addf %129, %131 : vector<6x32xf32>
    %133 = vector.extract_strided_slice %122 {offsets = [0, 0], sizes = [6, 8], strides = [1, 1]} : vector<6x32xf32> to vector<6x8xf32>
    %134 = vector.extract_strided_slice %127 {offsets = [0, 0], sizes = [6, 8], strides = [1, 1]} : vector<6x32xf32> to vector<6x8xf32>
    %135 = vector.extract_strided_slice %132 {offsets = [0, 0], sizes = [6, 8], strides = [1, 1]} : vector<6x32xf32> to vector<6x8xf32>
    %cst_62 = arith.constant dense<0.000000e+00> : vector<6x6xf32>
    %136 = tpu.matmul %133, %134, %cst_62 {dimension_numbers = #tpu.dot_dimension_numbers<[1], [1], [0], [0], [0, 0, 1, 0], [], []>} : vector<6x8xf32>, vector<6x8xf32>, vector<6x6xf32> -> vector<6x6xf32>
    %cst_63 = arith.constant 0.353553385 : f32
    %137 = vector.broadcast %cst_63 : f32 to vector<6x6xf32>
    %138 = arith.mulf %136, %137 : vector<6x6xf32>
    %cst_64 = arith.constant dense<0xFF800000> : vector<6xf32>
    %139 = vector.multi_reduction <maximumf>, %138, %cst_64 [1] : vector<6x6xf32> to vector<6xf32>
    %140 = vector.shape_cast %139 : vector<6xf32> to vector<6x1xf32>
    %141 = vector.broadcast %140 : vector<6x1xf32> to vector<6x6xf32>
    %142 = arith.subf %138, %141 : vector<6x6xf32>
    %143 = math.exp %142 : vector<6x6xf32>
    %cst_65 = arith.constant dense<0.000000e+00> : vector<6xf32>
    %144 = vector.multi_reduction <add>, %143, %cst_65 [1] : vector<6x6xf32> to vector<6xf32>
    %145 = vector.shape_cast %144 : vector<6xf32> to vector<6x1xf32>
    %146 = vector.broadcast %145 : vector<6x1xf32> to vector<6x6xf32>
    %147 = arith.divf %143, %146 : vector<6x6xf32>
    %cst_66 = arith.constant dense<0.000000e+00> : vector<6x8xf32>
    %148 = tpu.matmul %147, %135, %cst_66 {dimension_numbers = #tpu.dot_dimension_numbers<[1], [0], [0], [1], [0, 0, 1, 1], [], []>} : vector<6x6xf32>, vector<6x8xf32>, vector<6x8xf32> -> vector<6x8xf32>
    %149 = vector.extract_strided_slice %122 {offsets = [0, 8], sizes = [6, 8], strides = [1, 1]} : vector<6x32xf32> to vector<6x8xf32>
    %150 = vector.extract_strided_slice %127 {offsets = [0, 8], sizes = [6, 8], strides = [1, 1]} : vector<6x32xf32> to vector<6x8xf32>
    %151 = vector.extract_strided_slice %132 {offsets = [0, 8], sizes = [6, 8], strides = [1, 1]} : vector<6x32xf32> to vector<6x8xf32>
    %cst_67 = arith.constant dense<0.000000e+00> : vector<6x6xf32>
    %152 = tpu.matmul %149, %150, %cst_67 {dimension_numbers = #tpu.dot_dimension_numbers<[1], [1], [0], [0], [0, 0, 1, 0], [], []>} : vector<6x8xf32>, vector<6x8xf32>, vector<6x6xf32> -> vector<6x6xf32>
    %cst_68 = arith.constant 0.353553385 : f32
    %153 = vector.broadcast %cst_68 : f32 to vector<6x6xf32>
    %154 = arith.mulf %152, %153 : vector<6x6xf32>
    %cst_69 = arith.constant dense<0xFF800000> : vector<6xf32>
    %155 = vector.multi_reduction <maximumf>, %154, %cst_69 [1] : vector<6x6xf32> to vector<6xf32>
    %156 = vector.shape_cast %155 : vector<6xf32> to vector<6x1xf32>
    %157 = vector.broadcast %156 : vector<6x1xf32> to vector<6x6xf32>
    %158 = arith.subf %154, %157 : vector<6x6xf32>
    %159 = math.exp %158 : vector<6x6xf32>
    %cst_70 = arith.constant dense<0.000000e+00> : vector<6xf32>
    %160 = vector.multi_reduction <add>, %159, %cst_70 [1] : vector<6x6xf32> to vector<6xf32>
    %161 = vector.shape_cast %160 : vector<6xf32> to vector<6x1xf32>
    %162 = vector.broadcast %161 : vector<6x1xf32> to vector<6x6xf32>
    %163 = arith.divf %159, %162 : vector<6x6xf32>
    %cst_71 = arith.constant dense<0.000000e+00> : vector<6x8xf32>
    %164 = tpu.matmul %163, %151, %cst_71 {dimension_numbers = #tpu.dot_dimension_numbers<[1], [0], [0], [1], [0, 0, 1, 1], [], []>} : vector<6x6xf32>, vector<6x8xf32>, vector<6x8xf32> -> vector<6x8xf32>
    %165 = vector.extract_strided_slice %122 {offsets = [0, 16], sizes = [6, 8], strides = [1, 1]} : vector<6x32xf32> to vector<6x8xf32>
    %166 = vector.extract_strided_slice %127 {offsets = [0, 16], sizes = [6, 8], strides = [1, 1]} : vector<6x32xf32> to vector<6x8xf32>
    %167 = vector.extract_strided_slice %132 {offsets = [0, 16], sizes = [6, 8], strides = [1, 1]} : vector<6x32xf32> to vector<6x8xf32>
    %cst_72 = arith.constant dense<0.000000e+00> : vector<6x6xf32>
    %168 = tpu.matmul %165, %166, %cst_72 {dimension_numbers = #tpu.dot_dimension_numbers<[1], [1], [0], [0], [0, 0, 1, 0], [], []>} : vector<6x8xf32>, vector<6x8xf32>, vector<6x6xf32> -> vector<6x6xf32>
    %cst_73 = arith.constant 0.353553385 : f32
    %169 = vector.broadcast %cst_73 : f32 to vector<6x6xf32>
    %170 = arith.mulf %168, %169 : vector<6x6xf32>
    %cst_74 = arith.constant dense<0xFF800000> : vector<6xf32>
    %171 = vector.multi_reduction <maximumf>, %170, %cst_74 [1] : vector<6x6xf32> to vector<6xf32>
    %172 = vector.shape_cast %171 : vector<6xf32> to vector<6x1xf32>
    %173 = vector.broadcast %172 : vector<6x1xf32> to vector<6x6xf32>
    %174 = arith.subf %170, %173 : vector<6x6xf32>
    %175 = math.exp %174 : vector<6x6xf32>
    %cst_75 = arith.constant dense<0.000000e+00> : vector<6xf32>
    %176 = vector.multi_reduction <add>, %175, %cst_75 [1] : vector<6x6xf32> to vector<6xf32>
    %177 = vector.shape_cast %176 : vector<6xf32> to vector<6x1xf32>
    %178 = vector.broadcast %177 : vector<6x1xf32> to vector<6x6xf32>
    %179 = arith.divf %175, %178 : vector<6x6xf32>
    %cst_76 = arith.constant dense<0.000000e+00> : vector<6x8xf32>
    %180 = tpu.matmul %179, %167, %cst_76 {dimension_numbers = #tpu.dot_dimension_numbers<[1], [0], [0], [1], [0, 0, 1, 1], [], []>} : vector<6x6xf32>, vector<6x8xf32>, vector<6x8xf32> -> vector<6x8xf32>
    %181 = vector.extract_strided_slice %122 {offsets = [0, 24], sizes = [6, 8], strides = [1, 1]} : vector<6x32xf32> to vector<6x8xf32>
    %182 = vector.extract_strided_slice %127 {offsets = [0, 24], sizes = [6, 8], strides = [1, 1]} : vector<6x32xf32> to vector<6x8xf32>
    %183 = vector.extract_strided_slice %132 {offsets = [0, 24], sizes = [6, 8], strides = [1, 1]} : vector<6x32xf32> to vector<6x8xf32>
    %cst_77 = arith.constant dense<0.000000e+00> : vector<6x6xf32>
    %184 = tpu.matmul %181, %182, %cst_77 {dimension_numbers = #tpu.dot_dimension_numbers<[1], [1], [0], [0], [0, 0, 1, 0], [], []>} : vector<6x8xf32>, vector<6x8xf32>, vector<6x6xf32> -> vector<6x6xf32>
    %cst_78 = arith.constant 0.353553385 : f32
    %185 = vector.broadcast %cst_78 : f32 to vector<6x6xf32>
    %186 = arith.mulf %184, %185 : vector<6x6xf32>
    %cst_79 = arith.constant dense<0xFF800000> : vector<6xf32>
    %187 = vector.multi_reduction <maximumf>, %186, %cst_79 [1] : vector<6x6xf32> to vector<6xf32>
    %188 = vector.shape_cast %187 : vector<6xf32> to vector<6x1xf32>
    %189 = vector.broadcast %188 : vector<6x1xf32> to vector<6x6xf32>
    %190 = arith.subf %186, %189 : vector<6x6xf32>
    %191 = math.exp %190 : vector<6x6xf32>
    %cst_80 = arith.constant dense<0.000000e+00> : vector<6xf32>
    %192 = vector.multi_reduction <add>, %191, %cst_80 [1] : vector<6x6xf32> to vector<6xf32>
    %193 = vector.shape_cast %192 : vector<6xf32> to vector<6x1xf32>
    %194 = vector.broadcast %193 : vector<6x1xf32> to vector<6x6xf32>
    %195 = arith.divf %191, %194 : vector<6x6xf32>
    %cst_81 = arith.constant dense<0.000000e+00> : vector<6x8xf32>
    %196 = tpu.matmul %195, %183, %cst_81 {dimension_numbers = #tpu.dot_dimension_numbers<[1], [0], [0], [1], [0, 0, 1, 1], [], []>} : vector<6x6xf32>, vector<6x8xf32>, vector<6x8xf32> -> vector<6x8xf32>
    %197 = tpu.concatenate %148, %164, %180, %196 in 1 : vector<6x8xf32>, vector<6x8xf32>, vector<6x8xf32>, vector<6x8xf32> -> vector<6x32xf32>
    %c0_82 = arith.constant 0 : index
    %c0_83 = arith.constant 0 : index
    %198 = vector.load %arg20[%c0_82, %c0_83] : memref<32x32xf32, #tpu.memory_space<vmem>>, vector<32x32xf32>
    %cst_84 = arith.constant dense<0.000000e+00> : vector<6x32xf32>
    %199 = tpu.matmul %197, %198, %cst_84 {dimension_numbers = #tpu.dot_dimension_numbers<[1], [0], [0], [1], [0, 0, 1, 1], [], []>} : vector<6x32xf32>, vector<32x32xf32>, vector<6x32xf32> -> vector<6x32xf32>
    %c0_85 = arith.constant 0 : index
    %c0_86 = arith.constant 0 : index
    %200 = vector.load %arg21[%c0_85, %c0_86] : memref<1x32xf32, #tpu.memory_space<vmem>>, vector<1x32xf32>
    %201 = vector.broadcast %200 : vector<1x32xf32> to vector<6x32xf32>
    %202 = arith.addf %199, %201 : vector<6x32xf32>
    %c0_87 = arith.constant 0 : index
    %c0_88 = arith.constant 0 : index
    %203 = vector.load %arg22[%c0_87, %c0_88] : memref<32x96xf32, #tpu.memory_space<vmem>>, vector<32x96xf32>
    %cst_89 = arith.constant dense<0.000000e+00> : vector<6x96xf32>
    %204 = tpu.matmul %202, %203, %cst_89 {dimension_numbers = #tpu.dot_dimension_numbers<[1], [0], [0], [1], [0, 0, 1, 1], [], []>} : vector<6x32xf32>, vector<32x96xf32>, vector<6x96xf32> -> vector<6x96xf32>
    %c0_90 = arith.constant 0 : index
    %c0_91 = arith.constant 0 : index
    %205 = vector.load %arg23[%c0_90, %c0_91] : memref<1x96xf32, #tpu.memory_space<vmem>>, vector<1x96xf32>
    %206 = vector.broadcast %205 : vector<1x96xf32> to vector<6x96xf32>
    %207 = arith.addf %204, %206 : vector<6x96xf32>
    %c0_92 = arith.constant 0 : index
    %c0_93 = arith.constant 0 : index
    %208 = vector.load %arg24[%c0_92, %c0_93] : memref<32x96xf32, #tpu.memory_space<vmem>>, vector<32x96xf32>
    %c0_94 = arith.constant 0 : index
    %c0_95 = arith.constant 0 : index
    %209 = vector.load %arg25[%c0_94, %c0_95] : memref<1x96xf32, #tpu.memory_space<vmem>>, vector<1x96xf32>
    %cst_96 = arith.constant 0.000000e+00 : f32
    %210 = vector.broadcast %cst_96 : f32 to vector<1x32xf32>
    %211 = vector.extract_strided_slice %207 {offsets = [0, 0], sizes = [1, 96], strides = [1, 1]} : vector<6x96xf32> to vector<1x96xf32>
    %cst_97 = arith.constant dense<0.000000e+00> : vector<1x96xf32>
    %212 = tpu.matmul %210, %208, %cst_97 {dimension_numbers = #tpu.dot_dimension_numbers<[1], [0], [0], [1], [0, 0, 1, 1], [], []>} : vector<1x32xf32>, vector<32x96xf32>, vector<1x96xf32> -> vector<1x96xf32>
    %213 = arith.addf %212, %209 : vector<1x96xf32>
    %214 = vector.extract_strided_slice %211 {offsets = [0, 0], sizes = [1, 32], strides = [1, 1]} : vector<1x96xf32> to vector<1x32xf32>
    %215 = vector.extract_strided_slice %213 {offsets = [0, 0], sizes = [1, 32], strides = [1, 1]} : vector<1x96xf32> to vector<1x32xf32>
    %216 = arith.addf %214, %215 : vector<1x32xf32>
    %217 = arith.negf %216 : vector<1x32xf32>
    %218 = math.exp %217 : vector<1x32xf32>
    %cst_98 = arith.constant 1.000000e+00 : f32
    %219 = vector.broadcast %cst_98 : f32 to vector<1x32xf32>
    %220 = arith.addf %219, %218 : vector<1x32xf32>
    %221 = arith.divf %219, %220 : vector<1x32xf32>
    %222 = vector.extract_strided_slice %211 {offsets = [0, 32], sizes = [1, 32], strides = [1, 1]} : vector<1x96xf32> to vector<1x32xf32>
    %223 = vector.extract_strided_slice %213 {offsets = [0, 32], sizes = [1, 32], strides = [1, 1]} : vector<1x96xf32> to vector<1x32xf32>
    %224 = arith.addf %222, %223 : vector<1x32xf32>
    %225 = arith.negf %224 : vector<1x32xf32>
    %226 = math.exp %225 : vector<1x32xf32>
    %cst_99 = arith.constant 1.000000e+00 : f32
    %227 = vector.broadcast %cst_99 : f32 to vector<1x32xf32>
    %228 = arith.addf %227, %226 : vector<1x32xf32>
    %229 = arith.divf %227, %228 : vector<1x32xf32>
    %230 = vector.extract_strided_slice %211 {offsets = [0, 64], sizes = [1, 32], strides = [1, 1]} : vector<1x96xf32> to vector<1x32xf32>
    %231 = vector.extract_strided_slice %213 {offsets = [0, 64], sizes = [1, 32], strides = [1, 1]} : vector<1x96xf32> to vector<1x32xf32>
    %232 = arith.mulf %221, %231 : vector<1x32xf32>
    %233 = arith.addf %230, %232 : vector<1x32xf32>
    %234 = math.tanh %233 : vector<1x32xf32>
    %cst_100 = arith.constant 1.000000e+00 : f32
    %235 = vector.broadcast %cst_100 : f32 to vector<1x32xf32>
    %236 = arith.subf %235, %229 : vector<1x32xf32>
    %237 = arith.mulf %236, %234 : vector<1x32xf32>
    %238 = arith.mulf %229, %210 : vector<1x32xf32>
    %239 = arith.addf %237, %238 : vector<1x32xf32>
    %240 = vector.extract_strided_slice %207 {offsets = [1, 0], sizes = [1, 96], strides = [1, 1]} : vector<6x96xf32> to vector<1x96xf32>
    %cst_101 = arith.constant dense<0.000000e+00> : vector<1x96xf32>
    %241 = tpu.matmul %239, %208, %cst_101 {dimension_numbers = #tpu.dot_dimension_numbers<[1], [0], [0], [1], [0, 0, 1, 1], [], []>} : vector<1x32xf32>, vector<32x96xf32>, vector<1x96xf32> -> vector<1x96xf32>
    %242 = arith.addf %241, %209 : vector<1x96xf32>
    %243 = vector.extract_strided_slice %240 {offsets = [0, 0], sizes = [1, 32], strides = [1, 1]} : vector<1x96xf32> to vector<1x32xf32>
    %244 = vector.extract_strided_slice %242 {offsets = [0, 0], sizes = [1, 32], strides = [1, 1]} : vector<1x96xf32> to vector<1x32xf32>
    %245 = arith.addf %243, %244 : vector<1x32xf32>
    %246 = arith.negf %245 : vector<1x32xf32>
    %247 = math.exp %246 : vector<1x32xf32>
    %cst_102 = arith.constant 1.000000e+00 : f32
    %248 = vector.broadcast %cst_102 : f32 to vector<1x32xf32>
    %249 = arith.addf %248, %247 : vector<1x32xf32>
    %250 = arith.divf %248, %249 : vector<1x32xf32>
    %251 = vector.extract_strided_slice %240 {offsets = [0, 32], sizes = [1, 32], strides = [1, 1]} : vector<1x96xf32> to vector<1x32xf32>
    %252 = vector.extract_strided_slice %242 {offsets = [0, 32], sizes = [1, 32], strides = [1, 1]} : vector<1x96xf32> to vector<1x32xf32>
    %253 = arith.addf %251, %252 : vector<1x32xf32>
    %254 = arith.negf %253 : vector<1x32xf32>
    %255 = math.exp %254 : vector<1x32xf32>
    %cst_103 = arith.constant 1.000000e+00 : f32
    %256 = vector.broadcast %cst_103 : f32 to vector<1x32xf32>
    %257 = arith.addf %256, %255 : vector<1x32xf32>
    %258 = arith.divf %256, %257 : vector<1x32xf32>
    %259 = vector.extract_strided_slice %240 {offsets = [0, 64], sizes = [1, 32], strides = [1, 1]} : vector<1x96xf32> to vector<1x32xf32>
    %260 = vector.extract_strided_slice %242 {offsets = [0, 64], sizes = [1, 32], strides = [1, 1]} : vector<1x96xf32> to vector<1x32xf32>
    %261 = arith.mulf %250, %260 : vector<1x32xf32>
    %262 = arith.addf %259, %261 : vector<1x32xf32>
    %263 = math.tanh %262 : vector<1x32xf32>
    %cst_104 = arith.constant 1.000000e+00 : f32
    %264 = vector.broadcast %cst_104 : f32 to vector<1x32xf32>
    %265 = arith.subf %264, %258 : vector<1x32xf32>
    %266 = arith.mulf %265, %263 : vector<1x32xf32>
    %267 = arith.mulf %258, %239 : vector<1x32xf32>
    %268 = arith.addf %266, %267 : vector<1x32xf32>
    %269 = vector.extract_strided_slice %207 {offsets = [2, 0], sizes = [1, 96], strides = [1, 1]} : vector<6x96xf32> to vector<1x96xf32>
    %cst_105 = arith.constant dense<0.000000e+00> : vector<1x96xf32>
    %270 = tpu.matmul %268, %208, %cst_105 {dimension_numbers = #tpu.dot_dimension_numbers<[1], [0], [0], [1], [0, 0, 1, 1], [], []>} : vector<1x32xf32>, vector<32x96xf32>, vector<1x96xf32> -> vector<1x96xf32>
    %271 = arith.addf %270, %209 : vector<1x96xf32>
    %272 = vector.extract_strided_slice %269 {offsets = [0, 0], sizes = [1, 32], strides = [1, 1]} : vector<1x96xf32> to vector<1x32xf32>
    %273 = vector.extract_strided_slice %271 {offsets = [0, 0], sizes = [1, 32], strides = [1, 1]} : vector<1x96xf32> to vector<1x32xf32>
    %274 = arith.addf %272, %273 : vector<1x32xf32>
    %275 = arith.negf %274 : vector<1x32xf32>
    %276 = math.exp %275 : vector<1x32xf32>
    %cst_106 = arith.constant 1.000000e+00 : f32
    %277 = vector.broadcast %cst_106 : f32 to vector<1x32xf32>
    %278 = arith.addf %277, %276 : vector<1x32xf32>
    %279 = arith.divf %277, %278 : vector<1x32xf32>
    %280 = vector.extract_strided_slice %269 {offsets = [0, 32], sizes = [1, 32], strides = [1, 1]} : vector<1x96xf32> to vector<1x32xf32>
    %281 = vector.extract_strided_slice %271 {offsets = [0, 32], sizes = [1, 32], strides = [1, 1]} : vector<1x96xf32> to vector<1x32xf32>
    %282 = arith.addf %280, %281 : vector<1x32xf32>
    %283 = arith.negf %282 : vector<1x32xf32>
    %284 = math.exp %283 : vector<1x32xf32>
    %cst_107 = arith.constant 1.000000e+00 : f32
    %285 = vector.broadcast %cst_107 : f32 to vector<1x32xf32>
    %286 = arith.addf %285, %284 : vector<1x32xf32>
    %287 = arith.divf %285, %286 : vector<1x32xf32>
    %288 = vector.extract_strided_slice %269 {offsets = [0, 64], sizes = [1, 32], strides = [1, 1]} : vector<1x96xf32> to vector<1x32xf32>
    %289 = vector.extract_strided_slice %271 {offsets = [0, 64], sizes = [1, 32], strides = [1, 1]} : vector<1x96xf32> to vector<1x32xf32>
    %290 = arith.mulf %279, %289 : vector<1x32xf32>
    %291 = arith.addf %288, %290 : vector<1x32xf32>
    %292 = math.tanh %291 : vector<1x32xf32>
    %cst_108 = arith.constant 1.000000e+00 : f32
    %293 = vector.broadcast %cst_108 : f32 to vector<1x32xf32>
    %294 = arith.subf %293, %287 : vector<1x32xf32>
    %295 = arith.mulf %294, %292 : vector<1x32xf32>
    %296 = arith.mulf %287, %268 : vector<1x32xf32>
    %297 = arith.addf %295, %296 : vector<1x32xf32>
    %298 = vector.extract_strided_slice %207 {offsets = [3, 0], sizes = [1, 96], strides = [1, 1]} : vector<6x96xf32> to vector<1x96xf32>
    %cst_109 = arith.constant dense<0.000000e+00> : vector<1x96xf32>
    %299 = tpu.matmul %297, %208, %cst_109 {dimension_numbers = #tpu.dot_dimension_numbers<[1], [0], [0], [1], [0, 0, 1, 1], [], []>} : vector<1x32xf32>, vector<32x96xf32>, vector<1x96xf32> -> vector<1x96xf32>
    %300 = arith.addf %299, %209 : vector<1x96xf32>
    %301 = vector.extract_strided_slice %298 {offsets = [0, 0], sizes = [1, 32], strides = [1, 1]} : vector<1x96xf32> to vector<1x32xf32>
    %302 = vector.extract_strided_slice %300 {offsets = [0, 0], sizes = [1, 32], strides = [1, 1]} : vector<1x96xf32> to vector<1x32xf32>
    %303 = arith.addf %301, %302 : vector<1x32xf32>
    %304 = arith.negf %303 : vector<1x32xf32>
    %305 = math.exp %304 : vector<1x32xf32>
    %cst_110 = arith.constant 1.000000e+00 : f32
    %306 = vector.broadcast %cst_110 : f32 to vector<1x32xf32>
    %307 = arith.addf %306, %305 : vector<1x32xf32>
    %308 = arith.divf %306, %307 : vector<1x32xf32>
    %309 = vector.extract_strided_slice %298 {offsets = [0, 32], sizes = [1, 32], strides = [1, 1]} : vector<1x96xf32> to vector<1x32xf32>
    %310 = vector.extract_strided_slice %300 {offsets = [0, 32], sizes = [1, 32], strides = [1, 1]} : vector<1x96xf32> to vector<1x32xf32>
    %311 = arith.addf %309, %310 : vector<1x32xf32>
    %312 = arith.negf %311 : vector<1x32xf32>
    %313 = math.exp %312 : vector<1x32xf32>
    %cst_111 = arith.constant 1.000000e+00 : f32
    %314 = vector.broadcast %cst_111 : f32 to vector<1x32xf32>
    %315 = arith.addf %314, %313 : vector<1x32xf32>
    %316 = arith.divf %314, %315 : vector<1x32xf32>
    %317 = vector.extract_strided_slice %298 {offsets = [0, 64], sizes = [1, 32], strides = [1, 1]} : vector<1x96xf32> to vector<1x32xf32>
    %318 = vector.extract_strided_slice %300 {offsets = [0, 64], sizes = [1, 32], strides = [1, 1]} : vector<1x96xf32> to vector<1x32xf32>
    %319 = arith.mulf %308, %318 : vector<1x32xf32>
    %320 = arith.addf %317, %319 : vector<1x32xf32>
    %321 = math.tanh %320 : vector<1x32xf32>
    %cst_112 = arith.constant 1.000000e+00 : f32
    %322 = vector.broadcast %cst_112 : f32 to vector<1x32xf32>
    %323 = arith.subf %322, %316 : vector<1x32xf32>
    %324 = arith.mulf %323, %321 : vector<1x32xf32>
    %325 = arith.mulf %316, %297 : vector<1x32xf32>
    %326 = arith.addf %324, %325 : vector<1x32xf32>
    %327 = vector.extract_strided_slice %207 {offsets = [4, 0], sizes = [1, 96], strides = [1, 1]} : vector<6x96xf32> to vector<1x96xf32>
    %cst_113 = arith.constant dense<0.000000e+00> : vector<1x96xf32>
    %328 = tpu.matmul %326, %208, %cst_113 {dimension_numbers = #tpu.dot_dimension_numbers<[1], [0], [0], [1], [0, 0, 1, 1], [], []>} : vector<1x32xf32>, vector<32x96xf32>, vector<1x96xf32> -> vector<1x96xf32>
    %329 = arith.addf %328, %209 : vector<1x96xf32>
    %330 = vector.extract_strided_slice %327 {offsets = [0, 0], sizes = [1, 32], strides = [1, 1]} : vector<1x96xf32> to vector<1x32xf32>
    %331 = vector.extract_strided_slice %329 {offsets = [0, 0], sizes = [1, 32], strides = [1, 1]} : vector<1x96xf32> to vector<1x32xf32>
    %332 = arith.addf %330, %331 : vector<1x32xf32>
    %333 = arith.negf %332 : vector<1x32xf32>
    %334 = math.exp %333 : vector<1x32xf32>
    %cst_114 = arith.constant 1.000000e+00 : f32
    %335 = vector.broadcast %cst_114 : f32 to vector<1x32xf32>
    %336 = arith.addf %335, %334 : vector<1x32xf32>
    %337 = arith.divf %335, %336 : vector<1x32xf32>
    %338 = vector.extract_strided_slice %327 {offsets = [0, 32], sizes = [1, 32], strides = [1, 1]} : vector<1x96xf32> to vector<1x32xf32>
    %339 = vector.extract_strided_slice %329 {offsets = [0, 32], sizes = [1, 32], strides = [1, 1]} : vector<1x96xf32> to vector<1x32xf32>
    %340 = arith.addf %338, %339 : vector<1x32xf32>
    %341 = arith.negf %340 : vector<1x32xf32>
    %342 = math.exp %341 : vector<1x32xf32>
    %cst_115 = arith.constant 1.000000e+00 : f32
    %343 = vector.broadcast %cst_115 : f32 to vector<1x32xf32>
    %344 = arith.addf %343, %342 : vector<1x32xf32>
    %345 = arith.divf %343, %344 : vector<1x32xf32>
    %346 = vector.extract_strided_slice %327 {offsets = [0, 64], sizes = [1, 32], strides = [1, 1]} : vector<1x96xf32> to vector<1x32xf32>
    %347 = vector.extract_strided_slice %329 {offsets = [0, 64], sizes = [1, 32], strides = [1, 1]} : vector<1x96xf32> to vector<1x32xf32>
    %348 = arith.mulf %337, %347 : vector<1x32xf32>
    %349 = arith.addf %346, %348 : vector<1x32xf32>
    %350 = math.tanh %349 : vector<1x32xf32>
    %cst_116 = arith.constant 1.000000e+00 : f32
    %351 = vector.broadcast %cst_116 : f32 to vector<1x32xf32>
    %352 = arith.subf %351, %345 : vector<1x32xf32>
    %353 = arith.mulf %352, %350 : vector<1x32xf32>
    %354 = arith.mulf %345, %326 : vector<1x32xf32>
    %355 = arith.addf %353, %354 : vector<1x32xf32>
    %356 = vector.extract_strided_slice %207 {offsets = [5, 0], sizes = [1, 96], strides = [1, 1]} : vector<6x96xf32> to vector<1x96xf32>
    %cst_117 = arith.constant dense<0.000000e+00> : vector<1x96xf32>
    %357 = tpu.matmul %355, %208, %cst_117 {dimension_numbers = #tpu.dot_dimension_numbers<[1], [0], [0], [1], [0, 0, 1, 1], [], []>} : vector<1x32xf32>, vector<32x96xf32>, vector<1x96xf32> -> vector<1x96xf32>
    %358 = arith.addf %357, %209 : vector<1x96xf32>
    %359 = vector.extract_strided_slice %356 {offsets = [0, 0], sizes = [1, 32], strides = [1, 1]} : vector<1x96xf32> to vector<1x32xf32>
    %360 = vector.extract_strided_slice %358 {offsets = [0, 0], sizes = [1, 32], strides = [1, 1]} : vector<1x96xf32> to vector<1x32xf32>
    %361 = arith.addf %359, %360 : vector<1x32xf32>
    %362 = arith.negf %361 : vector<1x32xf32>
    %363 = math.exp %362 : vector<1x32xf32>
    %cst_118 = arith.constant 1.000000e+00 : f32
    %364 = vector.broadcast %cst_118 : f32 to vector<1x32xf32>
    %365 = arith.addf %364, %363 : vector<1x32xf32>
    %366 = arith.divf %364, %365 : vector<1x32xf32>
    %367 = vector.extract_strided_slice %356 {offsets = [0, 32], sizes = [1, 32], strides = [1, 1]} : vector<1x96xf32> to vector<1x32xf32>
    %368 = vector.extract_strided_slice %358 {offsets = [0, 32], sizes = [1, 32], strides = [1, 1]} : vector<1x96xf32> to vector<1x32xf32>
    %369 = arith.addf %367, %368 : vector<1x32xf32>
    %370 = arith.negf %369 : vector<1x32xf32>
    %371 = math.exp %370 : vector<1x32xf32>
    %cst_119 = arith.constant 1.000000e+00 : f32
    %372 = vector.broadcast %cst_119 : f32 to vector<1x32xf32>
    %373 = arith.addf %372, %371 : vector<1x32xf32>
    %374 = arith.divf %372, %373 : vector<1x32xf32>
    %375 = vector.extract_strided_slice %356 {offsets = [0, 64], sizes = [1, 32], strides = [1, 1]} : vector<1x96xf32> to vector<1x32xf32>
    %376 = vector.extract_strided_slice %358 {offsets = [0, 64], sizes = [1, 32], strides = [1, 1]} : vector<1x96xf32> to vector<1x32xf32>
    %377 = arith.mulf %366, %376 : vector<1x32xf32>
    %378 = arith.addf %375, %377 : vector<1x32xf32>
    %379 = math.tanh %378 : vector<1x32xf32>
    %cst_120 = arith.constant 1.000000e+00 : f32
    %380 = vector.broadcast %cst_120 : f32 to vector<1x32xf32>
    %381 = arith.subf %380, %374 : vector<1x32xf32>
    %382 = arith.mulf %381, %379 : vector<1x32xf32>
    %383 = arith.mulf %374, %355 : vector<1x32xf32>
    %384 = arith.addf %382, %383 : vector<1x32xf32>
    %c0_121 = arith.constant 0 : index
    %c0_122 = arith.constant 0 : index
    %385 = vector.load %arg26[%c0_121, %c0_122] : memref<32x32xf32, #tpu.memory_space<vmem>>, vector<32x32xf32>
    %cst_123 = arith.constant dense<0.000000e+00> : vector<1x32xf32>
    %386 = tpu.matmul %384, %385, %cst_123 {dimension_numbers = #tpu.dot_dimension_numbers<[1], [0], [0], [1], [0, 0, 1, 1], [], []>} : vector<1x32xf32>, vector<32x32xf32>, vector<1x32xf32> -> vector<1x32xf32>
    %c0_124 = arith.constant 0 : index
    %c0_125 = arith.constant 0 : index
    %387 = vector.load %arg27[%c0_124, %c0_125] : memref<1x32xf32, #tpu.memory_space<vmem>>, vector<1x32xf32>
    %388 = arith.addf %386, %387 : vector<1x32xf32>
    %cst_126 = arith.constant 0.000000e+00 : f32
    %389 = vector.broadcast %cst_126 : f32 to vector<1x32xf32>
    %390 = arith.maximumf %388, %389 : vector<1x32xf32>
    %c0_127 = arith.constant 0 : index
    %c0_128 = arith.constant 0 : index
    %391 = vector.load %arg28[%c0_127, %c0_128] : memref<32x3xf32, #tpu.memory_space<vmem>>, vector<32x3xf32>
    %cst_129 = arith.constant dense<0.000000e+00> : vector<1x3xf32>
    %392 = tpu.matmul %390, %391, %cst_129 {dimension_numbers = #tpu.dot_dimension_numbers<[1], [0], [0], [1], [0, 0, 1, 1], [], []>} : vector<1x32xf32>, vector<32x3xf32>, vector<1x3xf32> -> vector<1x3xf32>
    %c0_130 = arith.constant 0 : index
    %c0_131 = arith.constant 0 : index
    %393 = vector.load %arg29[%c0_130, %c0_131] : memref<1x3xf32, #tpu.memory_space<vmem>>, vector<1x3xf32>
    %394 = arith.addf %392, %393 : vector<1x3xf32>
    %c0_132 = arith.constant 0 : index
    %c0_133 = arith.constant 0 : index
    %395 = vector.load %arg30[%c0_132, %c0_133] : memref<1x1xf32, #tpu.memory_space<vmem>>, vector<1x1xf32>
    %396 = vector.broadcast %395 : vector<1x1xf32> to vector<1x3xf32>
    %397 = arith.mulf %394, %396 : vector<1x3xf32>
    %c0_134 = arith.constant 0 : index
    %c0_135 = arith.constant 0 : index
    %c0_136 = arith.constant 0 : index
    %398 = vector.load %arg31[%c0_134, %c0_135, %c0_136] : memref<1x1x3xf32, #tpu.memory_space<vmem>>, vector<1x1x3xf32>
    %399 = vector.shape_cast %398 : vector<1x1x3xf32> to vector<1x3xf32>
    %400 = vector.shape_cast %397 : vector<1x3xf32> to vector<1x1x3xf32>
    tpu.vector_store %arg31[%c0_134, %c0_135, %c0_136], %400 {strides = array<i32>} : memref<1x1x3xf32, #tpu.memory_space<vmem>>, vector<1x1x3xf32>,
    return
  }
  func.func @transform_0(%arg0: i32) -> (i32, i32, i32) {
    %c0_i32 = arith.constant 0 : i32
    %c0_i32_0 = arith.constant 0 : i32
    %c0_i32_1 = arith.constant 0 : i32
    return %arg0, %c0_i32, %c0_i32_0 : i32, i32, i32
  }
  func.func @transform_1(%arg0: i32) -> (i32, i32) {
    %c0_i32 = arith.constant 0 : i32
    %c0_i32_0 = arith.constant 0 : i32
    %c0_i32_1 = arith.constant 0 : i32
    return %c0_i32, %c0_i32_0 : i32, i32
  }
  func.func @transform_2(%arg0: i32) -> (i32, i32) {
    %c0_i32 = arith.constant 0 : i32
    %c0_i32_0 = arith.constant 0 : i32
    %c0_i32_1 = arith.constant 0 : i32
    return %c0_i32, %c0_i32_0 : i32, i32
  }
  func.func @transform_3(%arg0: i32) -> (i32, i32) {
    %c0_i32 = arith.constant 0 : i32
    %c0_i32_0 = arith.constant 0 : i32
    %c0_i32_1 = arith.constant 0 : i32
    return %c0_i32, %c0_i32_0 : i32, i32
  }
  func.func @transform_4(%arg0: i32) -> (i32, i32) {
    %c0_i32 = arith.constant 0 : i32
    %c0_i32_0 = arith.constant 0 : i32
    %c0_i32_1 = arith.constant 0 : i32
    return %c0_i32, %c0_i32_0 : i32, i32
  }
  func.func @transform_5(%arg0: i32) -> (i32, i32) {
    %c0_i32 = arith.constant 0 : i32
    %c0_i32_0 = arith.constant 0 : i32
    %c0_i32_1 = arith.constant 0 : i32
    return %c0_i32, %c0_i32_0 : i32, i32
  }
  func.func @transform_6(%arg0: i32) -> (i32, i32) {
    %c0_i32 = arith.constant 0 : i32
    %c0_i32_0 = arith.constant 0 : i32
    %c0_i32_1 = arith.constant 0 : i32
    return %c0_i32, %c0_i32_0 : i32, i32
  }
  func.func @transform_7(%arg0: i32) -> (i32, i32) {
    %c0_i32 = arith.constant 0 : i32
    %c0_i32_0 = arith.constant 0 : i32
    %c0_i32_1 = arith.constant 0 : i32
    return %c0_i32, %c0_i32_0 : i32, i32
  }
  func.func @transform_8(%arg0: i32) -> (i32, i32) {
    %c0_i32 = arith.constant 0 : i32
    %c0_i32_0 = arith.constant 0 : i32
    %c0_i32_1 = arith.constant 0 : i32
    return %c0_i32, %c0_i32_0 : i32, i32
  }
  func.func @transform_9(%arg0: i32) -> (i32, i32) {
    %c0_i32 = arith.constant 0 : i32
    %c0_i32_0 = arith.constant 0 : i32
    %c0_i32_1 = arith.constant 0 : i32
    return %c0_i32, %c0_i32_0 : i32, i32
  }
  func.func @transform_10(%arg0: i32) -> (i32, i32) {
    %c0_i32 = arith.constant 0 : i32
    %c0_i32_0 = arith.constant 0 : i32
    %c0_i32_1 = arith.constant 0 : i32
    return %c0_i32, %c0_i32_0 : i32, i32
  }
  func.func @transform_11(%arg0: i32) -> (i32, i32) {
    %c0_i32 = arith.constant 0 : i32
    %c0_i32_0 = arith.constant 0 : i32
    %c0_i32_1 = arith.constant 0 : i32
    return %c0_i32, %c0_i32_0 : i32, i32
  }
  func.func @transform_12(%arg0: i32) -> (i32, i32) {
    %c0_i32 = arith.constant 0 : i32
    %c0_i32_0 = arith.constant 0 : i32
    %c0_i32_1 = arith.constant 0 : i32
    return %c0_i32, %c0_i32_0 : i32, i32
  }
  func.func @transform_13(%arg0: i32) -> (i32, i32) {
    %c0_i32 = arith.constant 0 : i32
    %c0_i32_0 = arith.constant 0 : i32
    %c0_i32_1 = arith.constant 0 : i32
    return %c0_i32, %c0_i32_0 : i32, i32
  }
  func.func @transform_14(%arg0: i32) -> (i32, i32) {
    %c0_i32 = arith.constant 0 : i32
    %c0_i32_0 = arith.constant 0 : i32
    %c0_i32_1 = arith.constant 0 : i32
    return %c0_i32, %c0_i32_0 : i32, i32
  }
  func.func @transform_15(%arg0: i32) -> (i32, i32) {
    %c0_i32 = arith.constant 0 : i32
    %c0_i32_0 = arith.constant 0 : i32
    %c0_i32_1 = arith.constant 0 : i32
    return %c0_i32, %c0_i32_0 : i32, i32
  }
  func.func @transform_16(%arg0: i32) -> (i32, i32) {
    %c0_i32 = arith.constant 0 : i32
    %c0_i32_0 = arith.constant 0 : i32
    %c0_i32_1 = arith.constant 0 : i32
    return %c0_i32, %c0_i32_0 : i32, i32
  }
  func.func @transform_17(%arg0: i32) -> (i32, i32) {
    %c0_i32 = arith.constant 0 : i32
    %c0_i32_0 = arith.constant 0 : i32
    %c0_i32_1 = arith.constant 0 : i32
    return %c0_i32, %c0_i32_0 : i32, i32
  }
  func.func @transform_18(%arg0: i32) -> (i32, i32) {
    %c0_i32 = arith.constant 0 : i32
    %c0_i32_0 = arith.constant 0 : i32
    %c0_i32_1 = arith.constant 0 : i32
    return %c0_i32, %c0_i32_0 : i32, i32
  }
  func.func @transform_19(%arg0: i32) -> (i32, i32) {
    %c0_i32 = arith.constant 0 : i32
    %c0_i32_0 = arith.constant 0 : i32
    %c0_i32_1 = arith.constant 0 : i32
    return %c0_i32, %c0_i32_0 : i32, i32
  }
  func.func @transform_20(%arg0: i32) -> (i32, i32) {
    %c0_i32 = arith.constant 0 : i32
    %c0_i32_0 = arith.constant 0 : i32
    %c0_i32_1 = arith.constant 0 : i32
    return %c0_i32, %c0_i32_0 : i32, i32
  }
  func.func @transform_21(%arg0: i32) -> (i32, i32) {
    %c0_i32 = arith.constant 0 : i32
    %c0_i32_0 = arith.constant 0 : i32
    %c0_i32_1 = arith.constant 0 : i32
    return %c0_i32, %c0_i32_0 : i32, i32
  }
  func.func @transform_22(%arg0: i32) -> (i32, i32) {
    %c0_i32 = arith.constant 0 : i32
    %c0_i32_0 = arith.constant 0 : i32
    %c0_i32_1 = arith.constant 0 : i32
    return %c0_i32, %c0_i32_0 : i32, i32
  }
  func.func @transform_23(%arg0: i32) -> (i32, i32) {
    %c0_i32 = arith.constant 0 : i32
    %c0_i32_0 = arith.constant 0 : i32
    %c0_i32_1 = arith.constant 0 : i32
    return %c0_i32, %c0_i32_0 : i32, i32
  }
  func.func @transform_24(%arg0: i32) -> (i32, i32) {
    %c0_i32 = arith.constant 0 : i32
    %c0_i32_0 = arith.constant 0 : i32
    %c0_i32_1 = arith.constant 0 : i32
    return %c0_i32, %c0_i32_0 : i32, i32
  }
  func.func @transform_25(%arg0: i32) -> (i32, i32) {
    %c0_i32 = arith.constant 0 : i32
    %c0_i32_0 = arith.constant 0 : i32
    %c0_i32_1 = arith.constant 0 : i32
    return %c0_i32, %c0_i32_0 : i32, i32
  }
  func.func @transform_26(%arg0: i32) -> (i32, i32) {
    %c0_i32 = arith.constant 0 : i32
    %c0_i32_0 = arith.constant 0 : i32
    %c0_i32_1 = arith.constant 0 : i32
    return %c0_i32, %c0_i32_0 : i32, i32
  }
  func.func @transform_27(%arg0: i32) -> (i32, i32) {
    %c0_i32 = arith.constant 0 : i32
    %c0_i32_0 = arith.constant 0 : i32
    %c0_i32_1 = arith.constant 0 : i32
    return %c0_i32, %c0_i32_0 : i32, i32
  }
  func.func @transform_28(%arg0: i32) -> (i32, i32) {
    %c0_i32 = arith.constant 0 : i32
    %c0_i32_0 = arith.constant 0 : i32
    %c0_i32_1 = arith.constant 0 : i32
    return %c0_i32, %c0_i32_0 : i32, i32
  }
  func.func @transform_29(%arg0: i32) -> (i32, i32) {
    %c0_i32 = arith.constant 0 : i32
    %c0_i32_0 = arith.constant 0 : i32
    %c0_i32_1 = arith.constant 0 : i32
    return %c0_i32, %c0_i32_0 : i32, i32
  }
  func.func @transform_30(%arg0: i32) -> (i32, i32, i32) {
    %c0_i32 = arith.constant 0 : i32
    %c0_i32_0 = arith.constant 0 : i32
    %c0_i32_1 = arith.constant 0 : i32
    return %arg0, %c0_i32, %c0_i32_0 : i32, i32, i32
  }
}

</mosaic_0001>

<llo_original>
// kernel: tpu_custom_call.1
$region0: #{tpu_custom_call.1}
  #allocation0 [shape = 'u32[]', space=smem, size = 0x4, offset = 0x4, fixed_abs, tag = 'smem constant byte address 0x4 - core index']
  #allocation1 [shape = 'u32[144,128]{1,0:T(1,128)}', space=vmem, size = 0x12000, scoped, tag = 'internal scratch']
  #allocation2 [shape = 'f32[1,1]{1,0:T(1,128)S(1)}', space=vmem, size = 0x200, scoped, tag = 'scoped memory for tpu_custom_call.1']
  %s0 = inlined_call_operand.smem [shape: u32[31], index: -1, kind: input, shape index: {}]
  %s1 = sld [smem:[%s0]]
  %s2 = scalar_lea.smem %s0, 1
  %s3 = sld [smem:[%s2]]
  %s4 = scalar_lea.smem %s0, 2
  %s5 = sld [smem:[%s4]]
  %s6 = scalar_lea.smem %s0, 3
  %s7 = sld [smem:[%s6]]
  %s8 = scalar_lea.smem %s0, 4
  %s9 = sld [smem:[%s8]]
  %s10 = scalar_lea.smem %s0, 5
  %s11 = sld [smem:[%s10]]
  %s12 = scalar_lea.smem %s0, 6
  %s13 = sld [smem:[%s12]]
  %s14 = scalar_lea.smem %s0, 7
  %s15 = sld [smem:[%s14]]
  %s16 = scalar_lea.smem %s0, 8
  %s17 = sld [smem:[%s16]]
  %s18 = scalar_lea.smem %s0, 9
  %s19 = sld [smem:[%s18]]
  %s20 = scalar_lea.smem %s0, 10
  %s21 = sld [smem:[%s20]]
  %s22 = scalar_lea.smem %s0, 11
  %s23 = sld [smem:[%s22]]
  %s24 = scalar_lea.smem %s0, 12
  %s25 = sld [smem:[%s24]]
  %s26 = scalar_lea.smem %s0, 13
  %s27 = sld [smem:[%s26]]
  %s28 = scalar_lea.smem %s0, 14
  %s29 = sld [smem:[%s28]]
  %s30 = scalar_lea.smem %s0, 15
  %s31 = sld [smem:[%s30]]
  %s32 = scalar_lea.smem %s0, 16
  %s33 = sld [smem:[%s32]]
  %s34 = scalar_lea.smem %s0, 17
  %s35 = sld [smem:[%s34]]
  %s36 = scalar_lea.smem %s0, 18
  %s37 = sld [smem:[%s36]]
  %s38 = scalar_lea.smem %s0, 19
  %s39 = sld [smem:[%s38]]
  %s40 = scalar_lea.smem %s0, 20
  %s41 = sld [smem:[%s40]]
  %s42 = scalar_lea.smem %s0, 21
  %s43 = sld [smem:[%s42]]
  %s44 = scalar_lea.smem %s0, 22
  %s45 = sld [smem:[%s44]]
  %s46 = scalar_lea.smem %s0, 23
  %s47 = sld [smem:[%s46]]
  %s48 = scalar_lea.smem %s0, 24
  %s49 = sld [smem:[%s48]]
  %s50 = scalar_lea.smem %s0, 25
  %s51 = sld [smem:[%s50]]
  %s52 = scalar_lea.smem %s0, 26
  %s53 = sld [smem:[%s52]]
  %s54 = scalar_lea.smem %s0, 27
  %s55 = sld [smem:[%s54]]
  %s56 = scalar_lea.smem %s0, 28
  %s57 = sld [smem:[%s56]]
  %s58 = scalar_lea.smem %s0, 29
  %s59 = sld [smem:[%s58]]
  %s60 = scalar_lea.smem %s0, 30
  %s61 = sld [smem:[%s60]]
  %s62 = sld [smem:[#allocation0]]
  $region153: #{tpu_custom_call.1} parent=0
    _
  %s64 = ssub.s32 1, %s62
  %s65 = scalar_select 0, %s64, %s62
  %v66 = vstv %s59
  %67 = vst [vmem:[#allocation2] sm:$0x1] %v66
  $region1: #{tpu_custom_call.1} parent=0
    #allocation3 [shape = 'u8[1024]{0}', space=vmem, size = 0x400, scoped, tag = 'output window, operand 0']
    #allocation4 [shape = 's32[2]{0}', space=sflag, size = 0x8, scoped, tag = 'scoped memory for tpu_custom_call.1']
    %68 = vsyncpa [#allocation4], 0
    %s69 = scalar_lea.sflag [#allocation4], 1
    %70 = vsyncpa %s69, 0
    loop: start=0, step=1, limit=4
    $region2: #{tpu_custom_call.1} parent=1 // loop_pre_header
      _
    $region3: #{tpu_custom_call.1} parent=1 // loop_header
      %s72 = sphi 0, %s76
      %p73 = scmp.ge.s32.totalorder %s72, 4
      %s82 = sphi 0, %s84
      %s85 = sphi 0, %s82
      %s86 = sphi 0, %s85
      %s102 = sphi 0, %s86
      %s106 = sphi 0, %s106
      %s108 = sphi 0, %s106
      %s109 = sphi 0, %s108
      %s123 = sphi 0, %s109
      %s127 = sphi 0, %s127
      %s129 = sphi 0, %s127
      %s130 = sphi 0, %s129
      %s144 = sphi 0, %s130
      %s148 = sphi 0, %s148
      %s150 = sphi 0, %s148
      %s151 = sphi 0, %s150
      %s165 = sphi 0, %s151
      %s169 = sphi 0, %s169
      %s171 = sphi 0, %s169
      %s172 = sphi 0, %s171
      %s186 = sphi 0, %s172
      %s190 = sphi 0, %s190
      %s192 = sphi 0, %s190
      %s193 = sphi 0, %s192
      %s207 = sphi 0, %s193
      %s211 = sphi 0, %s211
      %s213 = sphi 0, %s211
      %s214 = sphi 0, %s213
      %s228 = sphi 0, %s214
      %s232 = sphi 0, %s232
      %s234 = sphi 0, %s232
      %s235 = sphi 0, %s234
      %s249 = sphi 0, %s235
      %s253 = sphi 0, %s253
      %s255 = sphi 0, %s253
      %s256 = sphi 0, %s255
      %s270 = sphi 0, %s256
      %s274 = sphi 0, %s274
      %s276 = sphi 0, %s274
      %s277 = sphi 0, %s276
      %s291 = sphi 0, %s277
      %s295 = sphi 0, %s295
      %s297 = sphi 0, %s295
      %s298 = sphi 0, %s297
      %s312 = sphi 0, %s298
      %s316 = sphi 0, %s316
      %s318 = sphi 0, %s316
      %s319 = sphi 0, %s318
      %s333 = sphi 0, %s319
      %s337 = sphi 0, %s337
      %s339 = sphi 0, %s337
      %s340 = sphi 0, %s339
      %s354 = sphi 0, %s340
      %s358 = sphi 0, %s358
      %s360 = sphi 0, %s358
      %s361 = sphi 0, %s360
      %s375 = sphi 0, %s361
      %s379 = sphi 0, %s379
      %s381 = sphi 0, %s379
      %s382 = sphi 0, %s381
      %s396 = sphi 0, %s382
      %s400 = sphi 0, %s400
      %s402 = sphi 0, %s400
      %s403 = sphi 0, %s402
      %s417 = sphi 0, %s403
      %s421 = sphi 0, %s421
      %s423 = sphi 0, %s421
      %s424 = sphi 0, %s423
      %s438 = sphi 0, %s424
      %s442 = sphi 0, %s442
      %s444 = sphi 0, %s442
      %s445 = sphi 0, %s444
      %s459 = sphi 0, %s445
      %s463 = sphi 0, %s463
      %s465 = sphi 0, %s463
      %s466 = sphi 0, %s465
      %s480 = sphi 0, %s466
      %s484 = sphi 0, %s484
      %s486 = sphi 0, %s484
      %s487 = sphi 0, %s486
      %s501 = sphi 0, %s487
      %s505 = sphi 0, %s505
      %s507 = sphi 0, %s505
      %s508 = sphi 0, %s507
      %s522 = sphi 0, %s508
      %s526 = sphi 0, %s526
      %s528 = sphi 0, %s526
      %s529 = sphi 0, %s528
      %s543 = sphi 0, %s529
      %s547 = sphi 0, %s547
      %s549 = sphi 0, %s547
      %s550 = sphi 0, %s549
      %s564 = sphi 0, %s550
      %s568 = sphi 0, %s568
      %s570 = sphi 0, %s568
      %s571 = sphi 0, %s570
      %s585 = sphi 0, %s571
      %s589 = sphi 0, %s589
      %s591 = sphi 0, %s589
      %s592 = sphi 0, %s591
      %s606 = sphi 0, %s592
      %s610 = sphi 0, %s610
      %s612 = sphi 0, %s610
      %s613 = sphi 0, %s612
      %s627 = sphi 0, %s613
      %s631 = sphi 0, %s631
      %s633 = sphi 0, %s631
      %s634 = sphi 0, %s633
      %s648 = sphi 0, %s634
      %s652 = sphi 0, %s652
      %s654 = sphi 0, %s652
      %s655 = sphi 0, %s654
      %s669 = sphi 0, %s655
      %s673 = sphi 0, %s673
      %s675 = sphi 0, %s673
      %s676 = sphi 0, %s675
      %s690 = sphi 0, %s676
      %s694 = sphi 0, %s694
      %s696 = sphi 0, %s694
      %s697 = sphi 0, %s696
      %s711 = sphi 0, %s697
      %s717 = sphi 0, %s719
      %s720 = sphi 0, %s717
      %s721 = sphi 0, %s720
      %s737 = sphi 0, %s721
    $region4: #{tpu_custom_call.1} parent=1 // loop_header_branch
      %75 = sbr.rel (%p73) target = $region8
    $region5: #{tpu_custom_call.1} parent=1 // loop_body
      %s77 = ssub.s32 %s72, 1
      %s78 = ssub.s32 %s72, 2
      %s79 = sadd.s32 %s72, 1
      %s80 = ssub.s32 %s72, %s79
      %p81 = scmp.eq.s32.totalorder %s80, 0
      %s83 = sadd.s32 %s82, 1
      %s84 = scalar_select %p81, %s82, %s83
      %p87 = pneg %p81
      %p88 = scmp.eq.s32.totalorder %s72, 1
      %p89 = por %p87, %p88
      %p90 = scmp.ne.s32.totalorder %s82, %s85
      %p91 = scmp.eq.s32.totalorder %s72, 0
      %p92 = por %p90, %p91
      %p93 = scmp.ne.s32.totalorder %s82, %s85
      %p94 = scmp.eq.s32.totalorder %s77, 1
      %p95 = por %p93, %p94
      %p96 = scmp.ne.s32.totalorder %s85, %s86
      %p97 = scmp.eq.s32.totalorder %s77, 0
      %p98 = por %p96, %p97
      %p99 = scmp.ne.s32.totalorder %s85, %s86
      %p100 = scmp.eq.s32.totalorder %s78, 1
      %p101 = por %p99, %p100
      %p103 = scmp.ne.s32.totalorder %s86, %s102
      %p104 = scmp.eq.s32.totalorder %s78, 0
      %p105 = por %p103, %p104
      %s107 = sadd.s32 %s106, 1
      %p110 = scmp.eq.s32.totalorder %s72, 1
      %p111 = scmp.ne.s32.totalorder %s106, %s108
      %p112 = scmp.eq.s32.totalorder %s72, 0
      %p113 = por %p111, %p112
      %p114 = scmp.ne.s32.totalorder %s106, %s108
      %p115 = scmp.eq.s32.totalorder %s77, 1
      %p116 = por %p114, %p115
      %p117 = scmp.ne.s32.totalorder %s108, %s109
      %p118 = scmp.eq.s32.totalorder %s77, 0
      %p119 = por %p117, %p118
      %p120 = scmp.ne.s32.totalorder %s108, %s109
      %p121 = scmp.eq.s32.totalorder %s78, 1
      %p122 = por %p120, %p121
      %p124 = scmp.ne.s32.totalorder %s109, %s123
      %p125 = scmp.eq.s32.totalorder %s78, 0
      %p126 = por %p124, %p125
      %s128 = sadd.s32 %s127, 1
      %p131 = scmp.eq.s32.totalorder %s72, 1
      %p132 = scmp.ne.s32.totalorder %s127, %s129
      %p133 = scmp.eq.s32.totalorder %s72, 0
      %p134 = por %p132, %p133
      %p135 = scmp.ne.s32.totalorder %s127, %s129
      %p136 = scmp.eq.s32.totalorder %s77, 1
      %p137 = por %p135, %p136
      %p138 = scmp.ne.s32.totalorder %s129, %s130
      %p139 = scmp.eq.s32.totalorder %s77, 0
      %p140 = por %p138, %p139
      %p141 = scmp.ne.s32.totalorder %s129, %s130
      %p142 = scmp.eq.s32.totalorder %s78, 1
      %p143 = por %p141, %p142
      %p145 = scmp.ne.s32.totalorder %s130, %s144
      %p146 = scmp.eq.s32.totalorder %s78, 0
      %p147 = por %p145, %p146
      %s149 = sadd.s32 %s148, 1
      %p152 = scmp.eq.s32.totalorder %s72, 1
      %p153 = scmp.ne.s32.totalorder %s148, %s150
      %p154 = scmp.eq.s32.totalorder %s72, 0
      %p155 = por %p153, %p154
      %p156 = scmp.ne.s32.totalorder %s148, %s150
      %p157 = scmp.eq.s32.totalorder %s77, 1
      %p158 = por %p156, %p157
      %p159 = scmp.ne.s32.totalorder %s150, %s151
      %p160 = scmp.eq.s32.totalorder %s77, 0
      %p161 = por %p159, %p160
      %p162 = scmp.ne.s32.totalorder %s150, %s151
      %p163 = scmp.eq.s32.totalorder %s78, 1
      %p164 = por %p162, %p163
      %p166 = scmp.ne.s32.totalorder %s151, %s165
      %p167 = scmp.eq.s32.totalorder %s78, 0
      %p168 = por %p166, %p167
      %s170 = sadd.s32 %s169, 1
      %p173 = scmp.eq.s32.totalorder %s72, 1
      %p174 = scmp.ne.s32.totalorder %s169, %s171
      %p175 = scmp.eq.s32.totalorder %s72, 0
      %p176 = por %p174, %p175
      %p177 = scmp.ne.s32.totalorder %s169, %s171
      %p178 = scmp.eq.s32.totalorder %s77, 1
      %p179 = por %p177, %p178
      %p180 = scmp.ne.s32.totalorder %s171, %s172
      %p181 = scmp.eq.s32.totalorder %s77, 0
      %p182 = por %p180, %p181
      %p183 = scmp.ne.s32.totalorder %s171, %s172
      %p184 = scmp.eq.s32.totalorder %s78, 1
      %p185 = por %p183, %p184
      %p187 = scmp.ne.s32.totalorder %s172, %s186
      %p188 = scmp.eq.s32.totalorder %s78, 0
      %p189 = por %p187, %p188
      %s191 = sadd.s32 %s190, 1
      %p194 = scmp.eq.s32.totalorder %s72, 1
      %p195 = scmp.ne.s32.totalorder %s190, %s192
      %p196 = scmp.eq.s32.totalorder %s72, 0
      %p197 = por %p195, %p196
      %p198 = scmp.ne.s32.totalorder %s190, %s192
      %p199 = scmp.eq.s32.totalorder %s77, 1
      %p200 = por %p198, %p199
      %p201 = scmp.ne.s32.totalorder %s192, %s193
      %p202 = scmp.eq.s32.totalorder %s77, 0
      %p203 = por %p201, %p202
      %p204 = scmp.ne.s32.totalorder %s192, %s193
      %p205 = scmp.eq.s32.totalorder %s78, 1
      %p206 = por %p204, %p205
      %p208 = scmp.ne.s32.totalorder %s193, %s207
      %p209 = scmp.eq.s32.totalorder %s78, 0
      %p210 = por %p208, %p209
      %s212 = sadd.s32 %s211, 1
      %p215 = scmp.eq.s32.totalorder %s72, 1
      %p216 = scmp.ne.s32.totalorder %s211, %s213
      %p217 = scmp.eq.s32.totalorder %s72, 0
      %p218 = por %p216, %p217
      %p219 = scmp.ne.s32.totalorder %s211, %s213
      %p220 = scmp.eq.s32.totalorder %s77, 1
      %p221 = por %p219, %p220
      %p222 = scmp.ne.s32.totalorder %s213, %s214
      %p223 = scmp.eq.s32.totalorder %s77, 0
      %p224 = por %p222, %p223
      %p225 = scmp.ne.s32.totalorder %s213, %s214
      %p226 = scmp.eq.s32.totalorder %s78, 1
      %p227 = por %p225, %p226
      %p229 = scmp.ne.s32.totalorder %s214, %s228
      %p230 = scmp.eq.s32.totalorder %s78, 0
      %p231 = por %p229, %p230
      %s233 = sadd.s32 %s232, 1
      %p236 = scmp.eq.s32.totalorder %s72, 1
      %p237 = scmp.ne.s32.totalorder %s232, %s234
      %p238 = scmp.eq.s32.totalorder %s72, 0
      %p239 = por %p237, %p238
      %p240 = scmp.ne.s32.totalorder %s232, %s234
      %p241 = scmp.eq.s32.totalorder %s77, 1
      %p242 = por %p240, %p241
      %p243 = scmp.ne.s32.totalorder %s234, %s235
      %p244 = scmp.eq.s32.totalorder %s77, 0
      %p245 = por %p243, %p244
      %p246 = scmp.ne.s32.totalorder %s234, %s235
      %p247 = scmp.eq.s32.totalorder %s78, 1
      %p248 = por %p246, %p247
      %p250 = scmp.ne.s32.totalorder %s235, %s249
      %p251 = scmp.eq.s32.totalorder %s78, 0
      %p252 = por %p250, %p251
      %s254 = sadd.s32 %s253, 1
      %p257 = scmp.eq.s32.totalorder %s72, 1
      %p258 = scmp.ne.s32.totalorder %s253, %s255
      %p259 = scmp.eq.s32.totalorder %s72, 0
      %p260 = por %p258, %p259
      %p261 = scmp.ne.s32.totalorder %s253, %s255
      %p262 = scmp.eq.s32.totalorder %s77, 1
      %p263 = por %p261, %p262
      %p264 = scmp.ne.s32.totalorder %s255, %s256
      %p265 = scmp.eq.s32.totalorder %s77, 0
      %p266 = por %p264, %p265
      %p267 = scmp.ne.s32.totalorder %s255, %s256
      %p268 = scmp.eq.s32.totalorder %s78, 1
      %p269 = por %p267, %p268
      %p271 = scmp.ne.s32.totalorder %s256, %s270
      %p272 = scmp.eq.s32.totalorder %s78, 0
      %p273 = por %p271, %p272
      %s275 = sadd.s32 %s274, 1
      %p278 = scmp.eq.s32.totalorder %s72, 1
      %p279 = scmp.ne.s32.totalorder %s274, %s276
      %p280 = scmp.eq.s32.totalorder %s72, 0
      %p281 = por %p279, %p280
      %p282 = scmp.ne.s32.totalorder %s274, %s276
      %p283 = scmp.eq.s32.totalorder %s77, 1
      %p284 = por %p282, %p283
      %p285 = scmp.ne.s32.totalorder %s276, %s277
      %p286 = scmp.eq.s32.totalorder %s77, 0
      %p287 = por %p285, %p286
      %p288 = scmp.ne.s32.totalorder %s276, %s277
      %p289 = scmp.eq.s32.totalorder %s78, 1
      %p290 = por %p288, %p289
      %p292 = scmp.ne.s32.totalorder %s277, %s291
      %p293 = scmp.eq.s32.totalorder %s78, 0
      %p294 = por %p292, %p293
      %s296 = sadd.s32 %s295, 1
      %p299 = scmp.eq.s32.totalorder %s72, 1
      %p300 = scmp.ne.s32.totalorder %s295, %s297
      %p301 = scmp.eq.s32.totalorder %s72, 0
      %p302 = por %p300, %p301
      %p303 = scmp.ne.s32.totalorder %s295, %s297
      %p304 = scmp.eq.s32.totalorder %s77, 1
      %p305 = por %p303, %p304
      %p306 = scmp.ne.s32.totalorder %s297, %s298
      %p307 = scmp.eq.s32.totalorder %s77, 0
      %p308 = por %p306, %p307
      %p309 = scmp.ne.s32.totalorder %s297, %s298
      %p310 = scmp.eq.s32.totalorder %s78, 1
      %p311 = por %p309, %p310
      %p313 = scmp.ne.s32.totalorder %s298, %s312
      %p314 = scmp.eq.s32.totalorder %s78, 0
      %p315 = por %p313, %p314
      %s317 = sadd.s32 %s316, 1
      %p320 = scmp.eq.s32.totalorder %s72, 1
      %p321 = scmp.ne.s32.totalorder %s316, %s318
      %p322 = scmp.eq.s32.totalorder %s72, 0
      %p323 = por %p321, %p322
      %p324 = scmp.ne.s32.totalorder %s316, %s318
      %p325 = scmp.eq.s32.totalorder %s77, 1
      %p326 = por %p324, %p325
      %p327 = scmp.ne.s32.totalorder %s318, %s319
      %p328 = scmp.eq.s32.totalorder %s77, 0
      %p329 = por %p327, %p328
      %p330 = scmp.ne.s32.totalorder %s318, %s319
      %p331 = scmp.eq.s32.totalorder %s78, 1
      %p332 = por %p330, %p331
      %p334 = scmp.ne.s32.totalorder %s319, %s333
      %p335 = scmp.eq.s32.totalorder %s78, 0
      %p336 = por %p334, %p335
      %s338 = sadd.s32 %s337, 1
      %p341 = scmp.eq.s32.totalorder %s72, 1
      %p342 = scmp.ne.s32.totalorder %s337, %s339
      %p343 = scmp.eq.s32.totalorder %s72, 0
      %p344 = por %p342, %p343
      %p345 = scmp.ne.s32.totalorder %s337, %s339
      %p346 = scmp.eq.s32.totalorder %s77, 1
      %p347 = por %p345, %p346
      %p348 = scmp.ne.s32.totalorder %s339, %s340
      %p349 = scmp.eq.s32.totalorder %s77, 0
      %p350 = por %p348, %p349
      %p351 = scmp.ne.s32.totalorder %s339, %s340
      %p352 = scmp.eq.s32.totalorder %s78, 1
      %p353 = por %p351, %p352
      %p355 = scmp.ne.s32.totalorder %s340, %s354
      %p356 = scmp.eq.s32.totalorder %s78, 0
      %p357 = por %p355, %p356
      %s359 = sadd.s32 %s358, 1
      %p362 = scmp.eq.s32.totalorder %s72, 1
      %p363 = scmp.ne.s32.totalorder %s358, %s360
      %p364 = scmp.eq.s32.totalorder %s72, 0
      %p365 = por %p363, %p364
      %p366 = scmp.ne.s32.totalorder %s358, %s360
      %p367 = scmp.eq.s32.totalorder %s77, 1
      %p368 = por %p366, %p367
      %p369 = scmp.ne.s32.totalorder %s360, %s361
      %p370 = scmp.eq.s32.totalorder %s77, 0
      %p371 = por %p369, %p370
      %p372 = scmp.ne.s32.totalorder %s360, %s361
      %p373 = scmp.eq.s32.totalorder %s78, 1
      %p374 = por %p372, %p373
      %p376 = scmp.ne.s32.totalorder %s361, %s375
      %p377 = scmp.eq.s32.totalorder %s78, 0
      %p378 = por %p376, %p377
      %s380 = sadd.s32 %s379, 1
      %p383 = scmp.eq.s32.totalorder %s72, 1
      %p384 = scmp.ne.s32.totalorder %s379, %s381
      %p385 = scmp.eq.s32.totalorder %s72, 0
      %p386 = por %p384, %p385
      %p387 = scmp.ne.s32.totalorder %s379, %s381
      %p388 = scmp.eq.s32.totalorder %s77, 1
      %p389 = por %p387, %p388
      %p390 = scmp.ne.s32.totalorder %s381, %s382
      %p391 = scmp.eq.s32.totalorder %s77, 0
      %p392 = por %p390, %p391
      %p393 = scmp.ne.s32.totalorder %s381, %s382
      %p394 = scmp.eq.s32.totalorder %s78, 1
      %p395 = por %p393, %p394
      %p397 = scmp.ne.s32.totalorder %s382, %s396
      %p398 = scmp.eq.s32.totalorder %s78, 0
      %p399 = por %p397, %p398
      %s401 = sadd.s32 %s400, 1
      %p404 = scmp.eq.s32.totalorder %s72, 1
      %p405 = scmp.ne.s32.totalorder %s400, %s402
      %p406 = scmp.eq.s32.totalorder %s72, 0
      %p407 = por %p405, %p406
      %p408 = scmp.ne.s32.totalorder %s400, %s402
      %p409 = scmp.eq.s32.totalorder %s77, 1
      %p410 = por %p408, %p409
      %p411 = scmp.ne.s32.totalorder %s402, %s403
      %p412 = scmp.eq.s32.totalorder %s77, 0
      %p413 = por %p411, %p412
      %p414 = scmp.ne.s32.totalorder %s402, %s403
      %p415 = scmp.eq.s32.totalorder %s78, 1
      %p416 = por %p414, %p415
      %p418 = scmp.ne.s32.totalorder %s403, %s417
      %p419 = scmp.eq.s32.totalorder %s78, 0
      %p420 = por %p418, %p419
      %s422 = sadd.s32 %s421, 1
      %p425 = scmp.eq.s32.totalorder %s72, 1
      %p426 = scmp.ne.s32.totalorder %s421, %s423
      %p427 = scmp.eq.s32.totalorder %s72, 0
      %p428 = por %p426, %p427
      %p429 = scmp.ne.s32.totalorder %s421, %s423
      %p430 = scmp.eq.s32.totalorder %s77, 1
      %p431 = por %p429, %p430
      %p432 = scmp.ne.s32.totalorder %s423, %s424
      %p433 = scmp.eq.s32.totalorder %s77, 0
      %p434 = por %p432, %p433
      %p435 = scmp.ne.s32.totalorder %s423, %s424
      %p436 = scmp.eq.s32.totalorder %s78, 1
      %p437 = por %p435, %p436
      %p439 = scmp.ne.s32.totalorder %s424, %s438
      %p440 = scmp.eq.s32.totalorder %s78, 0
      %p441 = por %p439, %p440
      %s443 = sadd.s32 %s442, 1
      %p446 = scmp.eq.s32.totalorder %s72, 1
      %p447 = scmp.ne.s32.totalorder %s442, %s444
      %p448 = scmp.eq.s32.totalorder %s72, 0
      %p449 = por %p447, %p448
      %p450 = scmp.ne.s32.totalorder %s442, %s444
      %p451 = scmp.eq.s32.totalorder %s77, 1
      %p452 = por %p450, %p451
      %p453 = scmp.ne.s32.totalorder %s444, %s445
      %p454 = scmp.eq.s32.totalorder %s77, 0
      %p455 = por %p453, %p454
      %p456 = scmp.ne.s32.totalorder %s444, %s445
      %p457 = scmp.eq.s32.totalorder %s78, 1
      %p458 = por %p456, %p457
      %p460 = scmp.ne.s32.totalorder %s445, %s459
      %p461 = scmp.eq.s32.totalorder %s78, 0
      %p462 = por %p460, %p461
      %s464 = sadd.s32 %s463, 1
      %p467 = scmp.eq.s32.totalorder %s72, 1
      %p468 = scmp.ne.s32.totalorder %s463, %s465
      %p469 = scmp.eq.s32.totalorder %s72, 0
      %p470 = por %p468, %p469
      %p471 = scmp.ne.s32.totalorder %s463, %s465
      %p472 = scmp.eq.s32.totalorder %s77, 1
      %p473 = por %p471, %p472
      %p474 = scmp.ne.s32.totalorder %s465, %s466
      %p475 = scmp.eq.s32.totalorder %s77, 0
      %p476 = por %p474, %p475
      %p477 = scmp.ne.s32.totalorder %s465, %s466
      %p478 = scmp.eq.s32.totalorder %s78, 1
      %p479 = por %p477, %p478
      %p481 = scmp.ne.s32.totalorder %s466, %s480
      %p482 = scmp.eq.s32.totalorder %s78, 0
      %p483 = por %p481, %p482
      %s485 = sadd.s32 %s484, 1
      %p488 = scmp.eq.s32.totalorder %s72, 1
      %p489 = scmp.ne.s32.totalorder %s484, %s486
      %p490 = scmp.eq.s32.totalorder %s72, 0
      %p491 = por %p489, %p490
      %p492 = scmp.ne.s32.totalorder %s484, %s486
      %p493 = scmp.eq.s32.totalorder %s77, 1
      %p494 = por %p492, %p493
      %p495 = scmp.ne.s32.totalorder %s486, %s487
      %p496 = scmp.eq.s32.totalorder %s77, 0
      %p497 = por %p495, %p496
      %p498 = scmp.ne.s32.totalorder %s486, %s487
      %p499 = scmp.eq.s32.totalorder %s78, 1
      %p500 = por %p498, %p499
      %p502 = scmp.ne.s32.totalorder %s487, %s501
      %p503 = scmp.eq.s32.totalorder %s78, 0
      %p504 = por %p502, %p503
      %s506 = sadd.s32 %s505, 1
      %p509 = scmp.eq.s32.totalorder %s72, 1
      %p510 = scmp.ne.s32.totalorder %s505, %s507
      %p511 = scmp.eq.s32.totalorder %s72, 0
      %p512 = por %p510, %p511
      %p513 = scmp.ne.s32.totalorder %s505, %s507
      %p514 = scmp.eq.s32.totalorder %s77, 1
      %p515 = por %p513, %p514
      %p516 = scmp.ne.s32.totalorder %s507, %s508
      %p517 = scmp.eq.s32.totalorder %s77, 0
      %p518 = por %p516, %p517
      %p519 = scmp.ne.s32.totalorder %s507, %s508
      %p520 = scmp.eq.s32.totalorder %s78, 1
      %p521 = por %p519, %p520
      %p523 = scmp.ne.s32.totalorder %s508, %s522
      %p524 = scmp.eq.s32.totalorder %s78, 0
      %p525 = por %p523, %p524
      %s527 = sadd.s32 %s526, 1
      %p530 = scmp.eq.s32.totalorder %s72, 1
      %p531 = scmp.ne.s32.totalorder %s526, %s528
      %p532 = scmp.eq.s32.totalorder %s72, 0
      %p533 = por %p531, %p532
      %p534 = scmp.ne.s32.totalorder %s526, %s528
      %p535 = scmp.eq.s32.totalorder %s77, 1
      %p536 = por %p534, %p535
      %p537 = scmp.ne.s32.totalorder %s528, %s529
      %p538 = scmp.eq.s32.totalorder %s77, 0
      %p539 = por %p537, %p538
      %p540 = scmp.ne.s32.totalorder %s528, %s529
      %p541 = scmp.eq.s32.totalorder %s78, 1
      %p542 = por %p540, %p541
      %p544 = scmp.ne.s32.totalorder %s529, %s543
      %p545 = scmp.eq.s32.totalorder %s78, 0
      %p546 = por %p544, %p545
      %s548 = sadd.s32 %s547, 1
      %p551 = scmp.eq.s32.totalorder %s72, 1
      %p552 = scmp.ne.s32.totalorder %s547, %s549
      %p553 = scmp.eq.s32.totalorder %s72, 0
      %p554 = por %p552, %p553
      %p555 = scmp.ne.s32.totalorder %s547, %s549
      %p556 = scmp.eq.s32.totalorder %s77, 1
      %p557 = por %p555, %p556
      %p558 = scmp.ne.s32.totalorder %s549, %s550
      %p559 = scmp.eq.s32.totalorder %s77, 0
      %p560 = por %p558, %p559
      %p561 = scmp.ne.s32.totalorder %s549, %s550
      %p562 = scmp.eq.s32.totalorder %s78, 1
      %p563 = por %p561, %p562
      %p565 = scmp.ne.s32.totalorder %s550, %s564
      %p566 = scmp.eq.s32.totalorder %s78, 0
      %p567 = por %p565, %p566
      %s569 = sadd.s32 %s568, 1
      %p572 = scmp.eq.s32.totalorder %s72, 1
      %p573 = scmp.ne.s32.totalorder %s568, %s570
      %p574 = scmp.eq.s32.totalorder %s72, 0
      %p575 = por %p573, %p574
      %p576 = scmp.ne.s32.totalorder %s568, %s570
      %p577 = scmp.eq.s32.totalorder %s77, 1
      %p578 = por %p576, %p577
      %p579 = scmp.ne.s32.totalorder %s570, %s571
      %p580 = scmp.eq.s32.totalorder %s77, 0
      %p581 = por %p579, %p580
      %p582 = scmp.ne.s32.totalorder %s570, %s571
      %p583 = scmp.eq.s32.totalorder %s78, 1
      %p584 = por %p582, %p583
      %p586 = scmp.ne.s32.totalorder %s571, %s585
      %p587 = scmp.eq.s32.totalorder %s78, 0
      %p588 = por %p586, %p587
      %s590 = sadd.s32 %s589, 1
      %p593 = scmp.eq.s32.totalorder %s72, 1
      %p594 = scmp.ne.s32.totalorder %s589, %s591
      %p595 = scmp.eq.s32.totalorder %s72, 0
      %p596 = por %p594, %p595
      %p597 = scmp.ne.s32.totalorder %s589, %s591
      %p598 = scmp.eq.s32.totalorder %s77, 1
      %p599 = por %p597, %p598
      %p600 = scmp.ne.s32.totalorder %s591, %s592
      %p601 = scmp.eq.s32.totalorder %s77, 0
      %p602 = por %p600, %p601
      %p603 = scmp.ne.s32.totalorder %s591, %s592
      %p604 = scmp.eq.s32.totalorder %s78, 1
      %p605 = por %p603, %p604
      %p607 = scmp.ne.s32.totalorder %s592, %s606
      %p608 = scmp.eq.s32.totalorder %s78, 0
      %p609 = por %p607, %p608
      %s611 = sadd.s32 %s610, 1
      %p614 = scmp.eq.s32.totalorder %s72, 1
      %p615 = scmp.ne.s32.totalorder %s610, %s612
      %p616 = scmp.eq.s32.totalorder %s72, 0
      %p617 = por %p615, %p616
      %p618 = scmp.ne.s32.totalorder %s610, %s612
      %p619 = scmp.eq.s32.totalorder %s77, 1
      %p620 = por %p618, %p619
      %p621 = scmp.ne.s32.totalorder %s612, %s613
      %p622 = scmp.eq.s32.totalorder %s77, 0
      %p623 = por %p621, %p622
      %p624 = scmp.ne.s32.totalorder %s612, %s613
      %p625 = scmp.eq.s32.totalorder %s78, 1
      %p626 = por %p624, %p625
      %p628 = scmp.ne.s32.totalorder %s613, %s627
      %p629 = scmp.eq.s32.totalorder %s78, 0
      %p630 = por %p628, %p629
      %s632 = sadd.s32 %s631, 1
      %p635 = scmp.eq.s32.totalorder %s72, 1
      %p636 = scmp.ne.s32.totalorder %s631, %s633
      %p637 = scmp.eq.s32.totalorder %s72, 0
      %p638 = por %p636, %p637
      %p639 = scmp.ne.s32.totalorder %s631, %s633
      %p640 = scmp.eq.s32.totalorder %s77, 1
      %p641 = por %p639, %p640
      %p642 = scmp.ne.s32.totalorder %s633, %s634
      %p643 = scmp.eq.s32.totalorder %s77, 0
      %p644 = por %p642, %p643
      %p645 = scmp.ne.s32.totalorder %s633, %s634
      %p646 = scmp.eq.s32.totalorder %s78, 1
      %p647 = por %p645, %p646
      %p649 = scmp.ne.s32.totalorder %s634, %s648
      %p650 = scmp.eq.s32.totalorder %s78, 0
      %p651 = por %p649, %p650
      %s653 = sadd.s32 %s652, 1
      %p656 = scmp.eq.s32.totalorder %s72, 1
      %p657 = scmp.ne.s32.totalorder %s652, %s654
      %p658 = scmp.eq.s32.totalorder %s72, 0
      %p659 = por %p657, %p658
      %p660 = scmp.ne.s32.totalorder %s652, %s654
      %p661 = scmp.eq.s32.totalorder %s77, 1
      %p662 = por %p660, %p661
      %p663 = scmp.ne.s32.totalorder %s654, %s655
      %p664 = scmp.eq.s32.totalorder %s77, 0
      %p665 = por %p663, %p664
      %p666 = scmp.ne.s32.totalorder %s654, %s655
      %p667 = scmp.eq.s32.totalorder %s78, 1
      %p668 = por %p666, %p667
      %p670 = scmp.ne.s32.totalorder %s655, %s669
      %p671 = scmp.eq.s32.totalorder %s78, 0
      %p672 = por %p670, %p671
      %s674 = sadd.s32 %s673, 1
      %p677 = scmp.eq.s32.totalorder %s72, 1
      %p678 = scmp.ne.s32.totalorder %s673, %s675
      %p679 = scmp.eq.s32.totalorder %s72, 0
      %p680 = por %p678, %p679
      %p681 = scmp.ne.s32.totalorder %s673, %s675
      %p682 = scmp.eq.s32.totalorder %s77, 1
      %p683 = por %p681, %p682
      %p684 = scmp.ne.s32.totalorder %s675, %s676
      %p685 = scmp.eq.s32.totalorder %s77, 0
      %p686 = por %p684, %p685
      %p687 = scmp.ne.s32.totalorder %s675, %s676
      %p688 = scmp.eq.s32.totalorder %s78, 1
      %p689 = por %p687, %p688
      %p691 = scmp.ne.s32.totalorder %s676, %s690
      %p692 = scmp.eq.s32.totalorder %s78, 0
      %p693 = por %p691, %p692
      %s695 = sadd.s32 %s694, 1
      %p698 = scmp.eq.s32.totalorder %s72, 1
      %p699 = scmp.ne.s32.totalorder %s694, %s696
      %p700 = scmp.eq.s32.totalorder %s72, 0
      %p701 = por %p699, %p700
      %p702 = scmp.ne.s32.totalorder %s694, %s696
      %p703 = scmp.eq.s32.totalorder %s77, 1
      %p704 = por %p702, %p703
      %p705 = scmp.ne.s32.totalorder %s696, %s697
      %p706 = scmp.eq.s32.totalorder %s77, 0
      %p707 = por %p705, %p706
      %p708 = scmp.ne.s32.totalorder %s696, %s697
      %p709 = scmp.eq.s32.totalorder %s78, 1
      %p710 = por %p708, %p709
      %p712 = scmp.ne.s32.totalorder %s697, %s711
      %p713 = scmp.eq.s32.totalorder %s78, 0
      %p714 = por %p712, %p713
      %s715 = ssub.s32 %s72, %s79
      %p716 = scmp.eq.s32.totalorder %s715, 0
      %s718 = sadd.s32 %s717, 1
      %s719 = scalar_select %p716, %s717, %s718
      %p722 = pneg %p716
      %p723 = scmp.eq.s32.totalorder %s72, 1
      %p724 = por %p722, %p723
      %p725 = scmp.ne.s32.totalorder %s717, %s720
      %p726 = scmp.eq.s32.totalorder %s72, 0
      %p727 = por %p725, %p726
      %p728 = scmp.ne.s32.totalorder %s717, %s720
      %p729 = scmp.eq.s32.totalorder %s77, 1
      %p730 = por %p728, %p729
      %p731 = scmp.ne.s32.totalorder %s720, %s721
      %p732 = scmp.eq.s32.totalorder %s77, 0
      %p733 = por %p731, %p732
      %p734 = scmp.ne.s32.totalorder %s720, %s721
      %p735 = scmp.eq.s32.totalorder %s78, 1
      %p736 = por %p734, %p735
      %p738 = scmp.ne.s32.totalorder %s721, %s737
      %p739 = scmp.eq.s32.totalorder %s78, 0
      %p740 = por %p738, %p739
      %p741 = scmp.le.s32.totalorder 1, %s72
      %p742 = scmp.lt.s32.totalorder %s72, 3
      %p743 = pnand %p741, %p742
      %p744 = pneg %p743
      // Predicated region
      $region9: #{tpu_custom_call.1} parent=5 // pred_check
        _
      $region10: #{tpu_custom_call.1} parent=5 // pred_check_branch
        %746 = sbr.rel (%p743) target = $region12
      $region11: #{tpu_custom_call.1} parent=5 // pred_region
        %s747 = ssub.s32 %s72, 1
        // Predicated region
        $region13: #{tpu_custom_call.1} parent=11 // pred_check
          %p748 = pneg %p119
        $region14: #{tpu_custom_call.1} parent=11 // pred_check_branch
          %750 = sbr.rel (%p748) target = $region16
        $region15: #{tpu_custom_call.1} parent=11 // pred_region
          _
        $region16: #{tpu_custom_call.1} parent=11 // pred_fallthru
          _
        // Predicated region
        $region17: #{tpu_custom_call.1} parent=11 // pred_check
          %p751 = pneg %p140
        $region18: #{tpu_custom_call.1} parent=11 // pred_check_branch
          %753 = sbr.rel (%p751) target = $region20
        $region19: #{tpu_custom_call.1} parent=11 // pred_region
          _
        $region20: #{tpu_custom_call.1} parent=11 // pred_fallthru
          _
        // Predicated region
        $region21: #{tpu_custom_call.1} parent=11 // pred_check
          %p754 = pneg %p161
        $region22: #{tpu_custom_call.1} parent=11 // pred_check_branch
          %756 = sbr.rel (%p754) target = $region24
        $region23: #{tpu_custom_call.1} parent=11 // pred_region
          _
        $region24: #{tpu_custom_call.1} parent=11 // pred_fallthru
          _
        // Predicated region
        $region25: #{tpu_custom_call.1} parent=11 // pred_check
          %p757 = pneg %p182
        $region26: #{tpu_custom_call.1} parent=11 // pred_check_branch
          %759 = sbr.rel (%p757) target = $region28
        $region27: #{tpu_custom_call.1} parent=11 // pred_region
          _
        $region28: #{tpu_custom_call.1} parent=11 // pred_fallthru
          _
        // Predicated region
        $region29: #{tpu_custom_call.1} parent=11 // pred_check
          %p760 = pneg %p203
        $region30: #{tpu_custom_call.1} parent=11 // pred_check_branch
          %762 = sbr.rel (%p760) target = $region32
        $region31: #{tpu_custom_call.1} parent=11 // pred_region
          _
        $region32: #{tpu_custom_call.1} parent=11 // pred_fallthru
          _
        // Predicated region
        $region33: #{tpu_custom_call.1} parent=11 // pred_check
          %p763 = pneg %p224
        $region34: #{tpu_custom_call.1} parent=11 // pred_check_branch
          %765 = sbr.rel (%p763) target = $region36
        $region35: #{tpu_custom_call.1} parent=11 // pred_region
          _
        $region36: #{tpu_custom_call.1} parent=11 // pred_fallthru
          _
        // Predicated region
        $region37: #{tpu_custom_call.1} parent=11 // pred_check
          %p766 = pneg %p245
        $region38: #{tpu_custom_call.1} parent=11 // pred_check_branch
          %768 = sbr.rel (%p766) target = $region40
        $region39: #{tpu_custom_call.1} parent=11 // pred_region
          _
        $region40: #{tpu_custom_call.1} parent=11 // pred_fallthru
          _
        // Predicated region
        $region41: #{tpu_custom_call.1} parent=11 // pred_check
          %p769 = pneg %p266
        $region42: #{tpu_custom_call.1} parent=11 // pred_check_branch
          %771 = sbr.rel (%p769) target = $region44
        $region43: #{tpu_custom_call.1} parent=11 // pred_region
          _
        $region44: #{tpu_custom_call.1} parent=11 // pred_fallthru
          _
        // Predicated region
        $region45: #{tpu_custom_call.1} parent=11 // pred_check
          %p772 = pneg %p287
        $region46: #{tpu_custom_call.1} parent=11 // pred_check_branch
          %774 = sbr.rel (%p772) target = $region48
        $region47: #{tpu_custom_call.1} parent=11 // pred_region
          _
        $region48: #{tpu_custom_call.1} parent=11 // pred_fallthru
          _
        // Predicated region
        $region49: #{tpu_custom_call.1} parent=11 // pred_check
          %p775 = pneg %p308
        $region50: #{tpu_custom_call.1} parent=11 // pred_check_branch
          %777 = sbr.rel (%p775) target = $region52
        $region51: #{tpu_custom_call.1} parent=11 // pred_region
          _
        $region52: #{tpu_custom_call.1} parent=11 // pred_fallthru
          _
        // Predicated region
        $region53: #{tpu_custom_call.1} parent=11 // pred_check
          %p778 = pneg %p329
        $region54: #{tpu_custom_call.1} parent=11 // pred_check_branch
          %780 = sbr.rel (%p778) target = $region56
        $region55: #{tpu_custom_call.1} parent=11 // pred_region
          _
        $region56: #{tpu_custom_call.1} parent=11 // pred_fallthru
          _
        // Predicated region
        $region57: #{tpu_custom_call.1} parent=11 // pred_check
          %p781 = pneg %p350
        $region58: #{tpu_custom_call.1} parent=11 // pred_check_branch
          %783 = sbr.rel (%p781) target = $region60
        $region59: #{tpu_custom_call.1} parent=11 // pred_region
          _
        $region60: #{tpu_custom_call.1} parent=11 // pred_fallthru
          _
        // Predicated region
        $region61: #{tpu_custom_call.1} parent=11 // pred_check
          %p784 = pneg %p371
        $region62: #{tpu_custom_call.1} parent=11 // pred_check_branch
          %786 = sbr.rel (%p784) target = $region64
        $region63: #{tpu_custom_call.1} parent=11 // pred_region
          _
        $region64: #{tpu_custom_call.1} parent=11 // pred_fallthru
          _
        // Predicated region
        $region65: #{tpu_custom_call.1} parent=11 // pred_check
          %p787 = pneg %p392
        $region66: #{tpu_custom_call.1} parent=11 // pred_check_branch
          %789 = sbr.rel (%p787) target = $region68
        $region67: #{tpu_custom_call.1} parent=11 // pred_region
          _
        $region68: #{tpu_custom_call.1} parent=11 // pred_fallthru
          _
        // Predicated region
        $region69: #{tpu_custom_call.1} parent=11 // pred_check
          %p790 = pneg %p413
        $region70: #{tpu_custom_call.1} parent=11 // pred_check_branch
          %792 = sbr.rel (%p790) target = $region72
        $region71: #{tpu_custom_call.1} parent=11 // pred_region
          _
        $region72: #{tpu_custom_call.1} parent=11 // pred_fallthru
          _
        // Predicated region
        $region73: #{tpu_custom_call.1} parent=11 // pred_check
          %p793 = pneg %p434
        $region74: #{tpu_custom_call.1} parent=11 // pred_check_branch
          %795 = sbr.rel (%p793) target = $region76
        $region75: #{tpu_custom_call.1} parent=11 // pred_region
          _
        $region76: #{tpu_custom_call.1} parent=11 // pred_fallthru
          _
        // Predicated region
        $region77: #{tpu_custom_call.1} parent=11 // pred_check
          %p796 = pneg %p455
        $region78: #{tpu_custom_call.1} parent=11 // pred_check_branch
          %798 = sbr.rel (%p796) target = $region80
        $region79: #{tpu_custom_call.1} parent=11 // pred_region
          _
        $region80: #{tpu_custom_call.1} parent=11 // pred_fallthru
          _
        // Predicated region
        $region81: #{tpu_custom_call.1} parent=11 // pred_check
          %p799 = pneg %p476
        $region82: #{tpu_custom_call.1} parent=11 // pred_check_branch
          %801 = sbr.rel (%p799) target = $region84
        $region83: #{tpu_custom_call.1} parent=11 // pred_region
          _
        $region84: #{tpu_custom_call.1} parent=11 // pred_fallthru
          _
        // Predicated region
        $region85: #{tpu_custom_call.1} parent=11 // pred_check
          %p802 = pneg %p497
        $region86: #{tpu_custom_call.1} parent=11 // pred_check_branch
          %804 = sbr.rel (%p802) target = $region88
        $region87: #{tpu_custom_call.1} parent=11 // pred_region
          _
        $region88: #{tpu_custom_call.1} parent=11 // pred_fallthru
          _
        // Predicated region
        $region89: #{tpu_custom_call.1} parent=11 // pred_check
          %p805 = pneg %p518
        $region90: #{tpu_custom_call.1} parent=11 // pred_check_branch
          %807 = sbr.rel (%p805) target = $region92
        $region91: #{tpu_custom_call.1} parent=11 // pred_region
          _
        $region92: #{tpu_custom_call.1} parent=11 // pred_fallthru
          _
        // Predicated region
        $region93: #{tpu_custom_call.1} parent=11 // pred_check
          %p808 = pneg %p539
        $region94: #{tpu_custom_call.1} parent=11 // pred_check_branch
          %810 = sbr.rel (%p808) target = $region96
        $region95: #{tpu_custom_call.1} parent=11 // pred_region
          _
        $region96: #{tpu_custom_call.1} parent=11 // pred_fallthru
          _
        // Predicated region
        $region97: #{tpu_custom_call.1} parent=11 // pred_check
          %p811 = pneg %p560
        $region98: #{tpu_custom_call.1} parent=11 // pred_check_branch
          %813 = sbr.rel (%p811) target = $region100
        $region99: #{tpu_custom_call.1} parent=11 // pred_region
          _
        $region100: #{tpu_custom_call.1} parent=11 // pred_fallthru
          _
        // Predicated region
        $region101: #{tpu_custom_call.1} parent=11 // pred_check
          %p814 = pneg %p581
        $region102: #{tpu_custom_call.1} parent=11 // pred_check_branch
          %816 = sbr.rel (%p814) target = $region104
        $region103: #{tpu_custom_call.1} parent=11 // pred_region
          _
        $region104: #{tpu_custom_call.1} parent=11 // pred_fallthru
          _
        // Predicated region
        $region105: #{tpu_custom_call.1} parent=11 // pred_check
          %p817 = pneg %p602
        $region106: #{tpu_custom_call.1} parent=11 // pred_check_branch
          %819 = sbr.rel (%p817) target = $region108
        $region107: #{tpu_custom_call.1} parent=11 // pred_region
          _
        $region108: #{tpu_custom_call.1} parent=11 // pred_fallthru
          _
        // Predicated region
        $region109: #{tpu_custom_call.1} parent=11 // pred_check
          %p820 = pneg %p623
        $region110: #{tpu_custom_call.1} parent=11 // pred_check_branch
          %822 = sbr.rel (%p820) target = $region112
        $region111: #{tpu_custom_call.1} parent=11 // pred_region
          _
        $region112: #{tpu_custom_call.1} parent=11 // pred_fallthru
          _
        // Predicated region
        $region113: #{tpu_custom_call.1} parent=11 // pred_check
          %p823 = pneg %p644
        $region114: #{tpu_custom_call.1} parent=11 // pred_check_branch
          %825 = sbr.rel (%p823) target = $region116
        $region115: #{tpu_custom_call.1} parent=11 // pred_region
          _
        $region116: #{tpu_custom_call.1} parent=11 // pred_fallthru
          _
        // Predicated region
        $region117: #{tpu_custom_call.1} parent=11 // pred_check
          %p826 = pneg %p665
        $region118: #{tpu_custom_call.1} parent=11 // pred_check_branch
          %828 = sbr.rel (%p826) target = $region120
        $region119: #{tpu_custom_call.1} parent=11 // pred_region
          _
        $region120: #{tpu_custom_call.1} parent=11 // pred_fallthru
          _
        // Predicated region
        $region121: #{tpu_custom_call.1} parent=11 // pred_check
          %p829 = pneg %p686
        $region122: #{tpu_custom_call.1} parent=11 // pred_check_branch
          %831 = sbr.rel (%p829) target = $region124
        $region123: #{tpu_custom_call.1} parent=11 // pred_region
          _
        $region124: #{tpu_custom_call.1} parent=11 // pred_fallthru
          _
        // Predicated region
        $region125: #{tpu_custom_call.1} parent=11 // pred_check
          %p832 = pneg %p707
        $region126: #{tpu_custom_call.1} parent=11 // pred_check_branch
          %834 = sbr.rel (%p832) target = $region128
        $region127: #{tpu_custom_call.1} parent=11 // pred_region
          _
        $region128: #{tpu_custom_call.1} parent=11 // pred_fallthru
          _
      $region12: #{tpu_custom_call.1} parent=5 // pred_fallthru
        _
      %p835 = scmp.lt.s32.totalorder %s72, 2
      // Predicated region
      $region129: #{tpu_custom_call.1} parent=5 // pred_check
        %p836 = pneg %p835
      $region130: #{tpu_custom_call.1} parent=5 // pred_check_branch
        %838 = sbr.rel (%p836) target = $region132
      $region131: #{tpu_custom_call.1} parent=5 // pred_region
        // Predicated region
        $region133: #{tpu_custom_call.1} parent=131 // pred_check
          %p839 = pneg %p92
        $region134: #{tpu_custom_call.1} parent=131 // pred_check_branch
          %841 = sbr.rel (%p839) target = $region136
        $region135: #{tpu_custom_call.1} parent=131 // pred_region
          %p842 = scmp.lt.s32.totalorder %s72, 1
          %s843 = scalar_select %p842, %s72, 1
          %s844 = smul.addr %s843, 12
          %s845 = smul.addr %s844, 8
          %s846 = scalar_lea.vmem %s1, %s845
        $region136: #{tpu_custom_call.1} parent=131 // pred_fallthru
          _
      $region132: #{tpu_custom_call.1} parent=5 // pred_fallthru
        _
      %p847 = scmp.le.s32.totalorder 1, %s72
      %p848 = scmp.lt.s32.totalorder %s72, 3
      %p849 = pnand %p847, %p848
      %p850 = pneg %p849
      // Predicated region
      $region137: #{tpu_custom_call.1} parent=5 // pred_check
        _
      $region138: #{tpu_custom_call.1} parent=5 // pred_check_branch
        %852 = sbr.rel (%p849) target = $region140
      $region139: #{tpu_custom_call.1} parent=5 // pred_region
        %s853 = ssub.s32 %s72, 1
        %p854 = scmp.lt.s32.totalorder %s77, 1
        %s855 = scalar_select %p854, %s77, 1
        %s856 = smul.addr %s855, 12
        %s857 = smul.addr %s856, 8
        %s858 = scalar_lea.vmem %s1, %s857
        %p859 = pneg %p98
        %p860 = pneg %p95
        %p861 = pneg %p119
        %p862 = pneg %p116
        %p863 = pneg %p140
        %p864 = pneg %p137
        %p865 = pneg %p161
        %p866 = pneg %p158
        %p867 = pneg %p182
        %p868 = pneg %p179
        %p869 = pneg %p203
        %p870 = pneg %p200
        %p871 = pneg %p224
        %p872 = pneg %p221
        %p873 = pneg %p245
        %p874 = pneg %p242
        %p875 = pneg %p266
        %p876 = pneg %p263
        %p877 = pneg %p287
        %p878 = pneg %p284
        %p879 = pneg %p308
        %p880 = pneg %p305
        %p881 = pneg %p329
        %p882 = pneg %p326
        %p883 = pneg %p350
        %p884 = pneg %p347
        %p885 = pneg %p371
        %p886 = pneg %p368
        %p887 = pneg %p392
        %p888 = pneg %p389
        %p889 = pneg %p413
        %p890 = pneg %p410
        %p891 = pneg %p434
        %p892 = pneg %p431
        %p893 = pneg %p455
        %p894 = pneg %p452
        %p895 = pneg %p476
        %p896 = pneg %p473
        %p897 = pneg %p497
        %p898 = pneg %p494
        %p899 = pneg %p518
        %p900 = pneg %p515
        %p901 = pneg %p539
        %p902 = pneg %p536
        %p903 = pneg %p560
        %p904 = pneg %p557
        %p905 = pneg %p581
        %p906 = pneg %p578
        %p907 = pneg %p602
        %p908 = pneg %p599
        %p909 = pneg %p623
        %p910 = pneg %p620
        %p911 = pneg %p644
        %p912 = pneg %p641
        %p913 = pneg %p665
        %p914 = pneg %p662
        %p915 = pneg %p686
        %p916 = pneg %p683
        %p917 = pneg %p707
        %p918 = pneg %p704
        %p919 = pneg %p733
        %p920 = pneg %p730
        %s921 = sand.u32 %s720, 1
        %s922 = scalar_lea.sflag [#allocation4], %s921
        %s923 = sand.u32 %s720, 1
        %s924 = scalar_lea.vmem [#allocation3], %s923
        %p925 = scmp.lt.s32.totalorder %s77, 1
        %s926 = scalar_select %p925, %s77, 1
        %s927 = smul.addr %s926, 12
        %s928 = smul.addr %s927, 8
        %s929 = scalar_lea.vmem %s1, %s928
        %v930 = vld [vmem:[%s929] sm:$0xff]
        %v931 = vld [vmem:[%s929 + $0x8] sm:$0xff]
        %v932 = vld [vmem:[%s929 + $0x10] sm:$0xff]
        %v933 = vld [vmem:[%s929 + $0x18] sm:$0xff]
        %v934 = vld [vmem:[%s929 + $0x20] sm:$0xff]
        %v935 = vld [vmem:[%s929 + $0x28] sm:$0xff]
        %v936 = vld [vmem:[%s929 + $0x30] sm:$0xff]
        %v937 = vld [vmem:[%s929 + $0x38] sm:$0xff]
        %v938 = vld [vmem:[%s929 + $0x40] sm:$0xff]
        %v939 = vld [vmem:[%s929 + $0x48] sm:$0xff]
        %v940 = vld [vmem:[%s929 + $0x50] sm:$0xff]
        %v941 = vld [vmem:[%s929 + $0x58] sm:$0xff]
        %v942 = vld [vmem:[%s3] sm:$0x1]
        %v943 = vld [vmem:[%s5] sm:$0x1]
        %v944 = vld [vmem:[%s7] sm:$0xff]
        %v945 = vld [vmem:[%s7 + $0x8] sm:$0xff]
        %v946 = vld [vmem:[%s7 + $0x10] sm:$0xff]
        %v947 = vld [vmem:[%s7 + $0x18] sm:$0xf]
        %v948 = vld [vmem:[%s9] sm:$0x1]
        %v950 = vlaneseq
        %v951 = vshrl.u32 %v950, 7
        %v952 = vsub.s32 0, %v951
        %v953 = vrot.slane %v942, %v952
        %v955 = vmul.f32 %v930, %v953
        %v956 = vmul.f32 %v931, %v953
        %v957 = vmul.f32 %v932, %v953
        %v958 = vmul.f32 %v933, %v953
        %v959 = vmul.f32 %v934, %v953
        %v960 = vmul.f32 %v935, %v953
        %v961 = vmul.f32 %v936, %v953
        %v962 = vmul.f32 %v937, %v953
        %v963 = vmul.f32 %v938, %v953
        %v964 = vmul.f32 %v939, %v953
        %v965 = vmul.f32 %v940, %v953
        %v966 = vmul.f32 %v941, %v953
        %v968 = vlaneseq
        %v969 = vshrl.u32 %v968, 7
        %v970 = vsub.s32 0, %v969
        %v971 = vrot.slane %v943, %v970
        %v973 = vadd.f32 %v955, %v971
        %v974 = vadd.f32 %v956, %v971
        %v975 = vadd.f32 %v957, %v971
        %v976 = vadd.f32 %v958, %v971
        %v977 = vadd.f32 %v959, %v971
        %v978 = vadd.f32 %v960, %v971
        %v979 = vadd.f32 %v961, %v971
        %v980 = vadd.f32 %v962, %v971
        %v981 = vadd.f32 %v963, %v971
        %v982 = vadd.f32 %v964, %v971
        %v983 = vadd.f32 %v965, %v971
        %v984 = vadd.f32 %v966, %v971
        %vm997 = vcmask 1040384
        %v998 = vrot.slane %v973, 7
        %v999 = vrot.slane %v974, 7
        %v1000 = vsel %vm997, %v998, %v999
        %v1001 = vrot.slane %v975, 7
        %v1002 = vsel %vm997, %v999, %v1001
        %v1003 = vrot.slane %v976, 7
        %v1004 = vsel %vm997, %v1001, %v1003
        %v1005 = vrot.slane %v977, 7
        %v1006 = vsel %vm997, %v1003, %v1005
        %v1007 = vrot.slane %v978, 7
        %v1008 = vsel %vm997, %v1005, %v1007
        %v1009 = vrot.slane %v979, 7
        %v1010 = vsel %vm997, %v1007, %v1009
        %v1011 = vrot.slane %v980, 7
        %v1012 = vsel %vm997, %v1009, %v1011
        %v1013 = vrot.slane %v981, 7
        %v1014 = vsel %vm997, %v1011, %v1013
        %v1015 = vrot.slane %v982, 7
        %v1016 = vsel %vm997, %v1013, %v1015
        %v1017 = vrot.slane %v983, 7
        %v1018 = vsel %vm997, %v1015, %v1017
        %v1019 = vrot.slane %v984, 7
        %v1020 = vsel %vm997, %v1017, %v1019
        %v1034 = vsel %vm997, 0.0, %v998
        %v1035 = vsel %vm997, %v1019, 0.0
        %vm1037 = vcmask 1046528
        %v1038 = vrot.slane %v1034, 1
        %v1039 = vrot.slane %v1000, 1
        %v1040 = vsel %vm1037, %v1038, %v1039
        %v1041 = vrot.slane %v1002, 1
        %v1042 = vsel %vm1037, %v1039, %v1041
        %v1043 = vrot.slane %v1004, 1
        %v1044 = vsel %vm1037, %v1041, %v1043
        %v1045 = vrot.slane %v1006, 1
        %v1046 = vsel %vm1037, %v1043, %v1045
        %v1047 = vrot.slane %v1008, 1
        %v1048 = vsel %vm1037, %v1045, %v1047
        %v1049 = vrot.slane %v1010, 1
        %v1050 = vsel %vm1037, %v1047, %v1049
        %v1051 = vrot.slane %v1012, 1
        %v1052 = vsel %vm1037, %v1049, %v1051
        %v1053 = vrot.slane %v1014, 1
        %v1054 = vsel %vm1037, %v1051, %v1053
        %v1055 = vrot.slane %v1016, 1
        %v1056 = vsel %vm1037, %v1053, %v1055
        %v1057 = vrot.slane %v1018, 1
        %v1058 = vsel %vm1037, %v1055, %v1057
        %v1059 = vrot.slane %v1020, 1
        %v1060 = vsel %vm1037, %v1057, %v1059
        %1061 = vrot.lane.b32.xlu0 %v1040, 4
        %v1062 = vpop.permute.xlu0 %1061
        %1063 = vrot.lane.b32.xlu0 %v1042, 4
        %v1064 = vpop.permute.xlu0 %1063
        %1065 = vrot.lane.b32.xlu0 %v1044, 4
        %v1066 = vpop.permute.xlu0 %1065
        %1067 = vrot.lane.b32.xlu0 %v1046, 4
        %v1068 = vpop.permute.xlu0 %1067
        %1069 = vrot.lane.b32.xlu0 %v1048, 4
        %v1070 = vpop.permute.xlu0 %1069
        %1071 = vrot.lane.b32.xlu0 %v1050, 4
        %v1072 = vpop.permute.xlu0 %1071
        %1073 = vrot.lane.b32.xlu0 %v1052, 4
        %v1074 = vpop.permute.xlu0 %1073
        %1075 = vrot.lane.b32.xlu0 %v1054, 4
        %v1076 = vpop.permute.xlu0 %1075
        %1077 = vrot.lane.b32.xlu0 %v1056, 4
        %v1078 = vpop.permute.xlu0 %1077
        %1079 = vrot.lane.b32.xlu0 %v1058, 4
        %v1080 = vpop.permute.xlu0 %1079
        %1081 = vrot.lane.b32.xlu0 %v1060, 4
        %v1082 = vpop.permute.xlu0 %1081
        %1083 = vrot.lane.b32.xlu0 %v1059, 4
        %v1084 = vpop.permute.xlu0 %1083
        %vm1097 = vcmask 1045504
        %v1098 = vrot.slane %v1034, 2
        %v1099 = vrot.slane %v1000, 2
        %v1100 = vsel %vm1097, %v1098, %v1099
        %v1101 = vrot.slane %v1002, 2
        %v1102 = vsel %vm1097, %v1099, %v1101
        %v1103 = vrot.slane %v1004, 2
        %v1104 = vsel %vm1097, %v1101, %v1103
        %v1105 = vrot.slane %v1006, 2
        %v1106 = vsel %vm1097, %v1103, %v1105
        %v1107 = vrot.slane %v1008, 2
        %v1108 = vsel %vm1097, %v1105, %v1107
        %v1109 = vrot.slane %v1010, 2
        %v1110 = vsel %vm1097, %v1107, %v1109
        %v1111 = vrot.slane %v1012, 2
        %v1112 = vsel %vm1097, %v1109, %v1111
        %v1113 = vrot.slane %v1014, 2
        %v1114 = vsel %vm1097, %v1111, %v1113
        %v1115 = vrot.slane %v1016, 2
        %v1116 = vsel %vm1097, %v1113, %v1115
        %v1117 = vrot.slane %v1018, 2
        %v1118 = vsel %vm1097, %v1115, %v1117
        %v1119 = vrot.slane %v1020, 2
        %v1120 = vsel %vm1097, %v1117, %v1119
        %1121 = vrot.lane.b32.xlu0 %v1100, 8
        %v1122 = vpop.permute.xlu0 %1121
        %1123 = vrot.lane.b32.xlu0 %v1102, 8
        %v1124 = vpop.permute.xlu0 %1123
        %1125 = vrot.lane.b32.xlu0 %v1104, 8
        %v1126 = vpop.permute.xlu0 %1125
        %1127 = vrot.lane.b32.xlu0 %v1106, 8
        %v1128 = vpop.permute.xlu0 %1127
        %1129 = vrot.lane.b32.xlu0 %v1108, 8
        %v1130 = vpop.permute.xlu0 %1129
        %1131 = vrot.lane.b32.xlu0 %v1110, 8
        %v1132 = vpop.permute.xlu0 %1131
        %1133 = vrot.lane.b32.xlu0 %v1112, 8
        %v1134 = vpop.permute.xlu0 %1133
        %1135 = vrot.lane.b32.xlu0 %v1114, 8
        %v1136 = vpop.permute.xlu0 %1135
        %1137 = vrot.lane.b32.xlu0 %v1116, 8
        %v1138 = vpop.permute.xlu0 %1137
        %1139 = vrot.lane.b32.xlu0 %v1118, 8
        %v1140 = vpop.permute.xlu0 %1139
        %1141 = vrot.lane.b32.xlu0 %v1120, 8
        %v1142 = vpop.permute.xlu0 %1141
        %1143 = vrot.lane.b32.xlu0 %v1119, 8
        %v1144 = vpop.permute.xlu0 %1143
        %vm1157 = vcmask 1044480
        %v1158 = vrot.slane %v1034, 3
        %v1159 = vrot.slane %v1000, 3
        %v1160 = vsel %vm1157, %v1158, %v1159
        %v1161 = vrot.slane %v1002, 3
        %v1162 = vsel %vm1157, %v1159, %v1161
        %v1163 = vrot.slane %v1004, 3
        %v1164 = vsel %vm1157, %v1161, %v1163
        %v1165 = vrot.slane %v1006, 3
        %v1166 = vsel %vm1157, %v1163, %v1165
        %v1167 = vrot.slane %v1008, 3
        %v1168 = vsel %vm1157, %v1165, %v1167
        %v1169 = vrot.slane %v1010, 3
        %v1170 = vsel %vm1157, %v1167, %v1169
        %v1171 = vrot.slane %v1012, 3
        %v1172 = vsel %vm1157, %v1169, %v1171
        %v1173 = vrot.slane %v1014, 3
        %v1174 = vsel %vm1157, %v1171, %v1173
        %v1175 = vrot.slane %v1016, 3
        %v1176 = vsel %vm1157, %v1173, %v1175
        %v1177 = vrot.slane %v1018, 3
        %v1178 = vsel %vm1157, %v1175, %v1177
        %v1179 = vrot.slane %v1020, 3
        %v1180 = vsel %vm1157, %v1177, %v1179
        %1181 = vrot.lane.b32.xlu0 %v1160, 12
        %v1182 = vpop.permute.xlu0 %1181
        %1183 = vrot.lane.b32.xlu0 %v1162, 12
        %v1184 = vpop.permute.xlu0 %1183
        %1185 = vrot.lane.b32.xlu0 %v1164, 12
        %v1186 = vpop.permute.xlu0 %1185
        %1187 = vrot.lane.b32.xlu0 %v1166, 12
        %v1188 = vpop.permute.xlu0 %1187
        %1189 = vrot.lane.b32.xlu0 %v1168, 12
        %v1190 = vpop.permute.xlu0 %1189
        %1191 = vrot.lane.b32.xlu0 %v1170, 12
        %v1192 = vpop.permute.xlu0 %1191
        %1193 = vrot.lane.b32.xlu0 %v1172, 12
        %v1194 = vpop.permute.xlu0 %1193
        %1195 = vrot.lane.b32.xlu0 %v1174, 12
        %v1196 = vpop.permute.xlu0 %1195
        %1197 = vrot.lane.b32.xlu0 %v1176, 12
        %v1198 = vpop.permute.xlu0 %1197
        %1199 = vrot.lane.b32.xlu0 %v1178, 12
        %v1200 = vpop.permute.xlu0 %1199
        %1201 = vrot.lane.b32.xlu0 %v1180, 12
        %v1202 = vpop.permute.xlu0 %1201
        %1203 = vrot.lane.b32.xlu0 %v1179, 12
        %v1204 = vpop.permute.xlu0 %1203
        %vm1217 = vcmask 1043456
        %v1218 = vrot.slane %v1034, 4
        %v1219 = vrot.slane %v1000, 4
        %v1220 = vsel %vm1217, %v1218, %v1219
        %v1221 = vrot.slane %v1002, 4
        %v1222 = vsel %vm1217, %v1219, %v1221
        %v1223 = vrot.slane %v1004, 4
        %v1224 = vsel %vm1217, %v1221, %v1223
        %v1225 = vrot.slane %v1006, 4
        %v1226 = vsel %vm1217, %v1223, %v1225
        %v1227 = vrot.slane %v1008, 4
        %v1228 = vsel %vm1217, %v1225, %v1227
        %v1229 = vrot.slane %v1010, 4
        %v1230 = vsel %vm1217, %v1227, %v1229
        %v1231 = vrot.slane %v1012, 4
        %v1232 = vsel %vm1217, %v1229, %v1231
        %v1233 = vrot.slane %v1014, 4
        %v1234 = vsel %vm1217, %v1231, %v1233
        %v1235 = vrot.slane %v1016, 4
        %v1236 = vsel %vm1217, %v1233, %v1235
        %v1237 = vrot.slane %v1018, 4
        %v1238 = vsel %vm1217, %v1235, %v1237
        %v1239 = vrot.slane %v1020, 4
        %v1240 = vsel %vm1217, %v1237, %v1239
        %1241 = vrot.lane.b32.xlu0 %v1220, 16
        %v1242 = vpop.permute.xlu0 %1241
        %1243 = vrot.lane.b32.xlu0 %v1222, 16
        %v1244 = vpop.permute.xlu0 %1243
        %1245 = vrot.lane.b32.xlu0 %v1224, 16
        %v1246 = vpop.permute.xlu0 %1245
        %1247 = vrot.lane.b32.xlu0 %v1226, 16
        %v1248 = vpop.permute.xlu0 %1247
        %1249 = vrot.lane.b32.xlu0 %v1228, 16
        %v1250 = vpop.permute.xlu0 %1249
        %1251 = vrot.lane.b32.xlu0 %v1230, 16
        %v1252 = vpop.permute.xlu0 %1251
        %1253 = vrot.lane.b32.xlu0 %v1232, 16
        %v1254 = vpop.permute.xlu0 %1253
        %1255 = vrot.lane.b32.xlu0 %v1234, 16
        %v1256 = vpop.permute.xlu0 %1255
        %1257 = vrot.lane.b32.xlu0 %v1236, 16
        %v1258 = vpop.permute.xlu0 %1257
        %1259 = vrot.lane.b32.xlu0 %v1238, 16
        %v1260 = vpop.permute.xlu0 %1259
        %1261 = vrot.lane.b32.xlu0 %v1240, 16
        %v1262 = vpop.permute.xlu0 %1261
        %1263 = vrot.lane.b32.xlu0 %v1239, 16
        %v1264 = vpop.permute.xlu0 %1263
        %vm1278 = vcmask 1042432
        %v1279 = vrot.slane %v1034, 5
        %v1280 = vrot.slane %v1000, 5
        %v1281 = vsel %vm1278, %v1279, %v1280
        %v1282 = vrot.slane %v1002, 5
        %v1283 = vsel %vm1278, %v1280, %v1282
        %v1284 = vrot.slane %v1004, 5
        %v1285 = vsel %vm1278, %v1282, %v1284
        %v1286 = vrot.slane %v1006, 5
        %v1287 = vsel %vm1278, %v1284, %v1286
        %v1288 = vrot.slane %v1008, 5
        %v1289 = vsel %vm1278, %v1286, %v1288
        %v1290 = vrot.slane %v1010, 5
        %v1291 = vsel %vm1278, %v1288, %v1290
        %v1292 = vrot.slane %v1012, 5
        %v1293 = vsel %vm1278, %v1290, %v1292
        %v1294 = vrot.slane %v1014, 5
        %v1295 = vsel %vm1278, %v1292, %v1294
        %v1296 = vrot.slane %v1016, 5
        %v1297 = vsel %vm1278, %v1294, %v1296
        %v1298 = vrot.slane %v1018, 5
        %v1299 = vsel %vm1278, %v1296, %v1298
        %v1300 = vrot.slane %v1020, 5
        %v1301 = vsel %vm1278, %v1298, %v1300
        %v1302 = vrot.slane %v1035, 5
        %v1303 = vsel %vm1278, %v1300, %v1302
        %1304 = vrot.lane.b32.xlu0 %v1281, 20
        %v1305 = vpop.permute.xlu0 %1304
        %1306 = vrot.lane.b32.xlu0 %v1283, 20
        %v1307 = vpop.permute.xlu0 %1306
        %1308 = vrot.lane.b32.xlu0 %v1285, 20
        %v1309 = vpop.permute.xlu0 %1308
        %1310 = vrot.lane.b32.xlu0 %v1287, 20
        %v1311 = vpop.permute.xlu0 %1310
        %1312 = vrot.lane.b32.xlu0 %v1289, 20
        %v1313 = vpop.permute.xlu0 %1312
        %1314 = vrot.lane.b32.xlu0 %v1291, 20
        %v1315 = vpop.permute.xlu0 %1314
        %1316 = vrot.lane.b32.xlu0 %v1293, 20
        %v1317 = vpop.permute.xlu0 %1316
        %1318 = vrot.lane.b32.xlu0 %v1295, 20
        %v1319 = vpop.permute.xlu0 %1318
        %1320 = vrot.lane.b32.xlu0 %v1297, 20
        %v1321 = vpop.permute.xlu0 %1320
        %1322 = vrot.lane.b32.xlu0 %v1299, 20
        %v1323 = vpop.permute.xlu0 %1322
        %1324 = vrot.lane.b32.xlu0 %v1301, 20
        %v1325 = vpop.permute.xlu0 %1324
        %1326 = vrot.lane.b32.xlu0 %v1303, 20
        %v1327 = vpop.permute.xlu0 %1326
        %vm1340 = vcmask 1041408
        %v1341 = vrot.slane %v1034, 6
        %v1342 = vrot.slane %v1000, 6
        %v1343 = vsel %vm1340, %v1341, %v1342
        %v1344 = vrot.slane %v1002, 6
        %v1345 = vsel %vm1340, %v1342, %v1344
        %v1346 = vrot.slane %v1004, 6
        %v1347 = vsel %vm1340, %v1344, %v1346
        %v1348 = vrot.slane %v1006, 6
        %v1349 = vsel %vm1340, %v1346, %v1348
        %v1350 = vrot.slane %v1008, 6
        %v1351 = vsel %vm1340, %v1348, %v1350
        %v1352 = vrot.slane %v1010, 6
        %v1353 = vsel %vm1340, %v1350, %v1352
        %v1354 = vrot.slane %v1012, 6
        %v1355 = vsel %vm1340, %v1352, %v1354
        %v1356 = vrot.slane %v1014, 6
        %v1357 = vsel %vm1340, %v1354, %v1356
        %v1358 = vrot.slane %v1016, 6
        %v1359 = vsel %vm1340, %v1356, %v1358
        %v1360 = vrot.slane %v1018, 6
        %v1361 = vsel %vm1340, %v1358, %v1360
        %v1362 = vrot.slane %v1020, 6
        %v1363 = vsel %vm1340, %v1360, %v1362
        %v1364 = vrot.slane %v1035, 6
        %v1365 = vsel %vm1340, %v1362, %v1364
        %1366 = vrot.lane.b32.xlu0 %v1343, 24
        %v1367 = vpop.permute.xlu0 %1366
        %1368 = vrot.lane.b32.xlu0 %v1345, 24
        %v1369 = vpop.permute.xlu0 %1368
        %1370 = vrot.lane.b32.xlu0 %v1347, 24
        %v1371 = vpop.permute.xlu0 %1370
        %1372 = vrot.lane.b32.xlu0 %v1349, 24
        %v1373 = vpop.permute.xlu0 %1372
        %1374 = vrot.lane.b32.xlu0 %v1351, 24
        %v1375 = vpop.permute.xlu0 %1374
        %1376 = vrot.lane.b32.xlu0 %v1353, 24
        %v1377 = vpop.permute.xlu0 %1376
        %1378 = vrot.lane.b32.xlu0 %v1355, 24
        %v1379 = vpop.permute.xlu0 %1378
        %1380 = vrot.lane.b32.xlu0 %v1357, 24
        %v1381 = vpop.permute.xlu0 %1380
        %1382 = vrot.lane.b32.xlu0 %v1359, 24
        %v1383 = vpop.permute.xlu0 %1382
        %1384 = vrot.lane.b32.xlu0 %v1361, 24
        %v1385 = vpop.permute.xlu0 %1384
        %1386 = vrot.lane.b32.xlu0 %v1363, 24
        %v1387 = vpop.permute.xlu0 %1386
        %1388 = vrot.lane.b32.xlu0 %v1365, 24
        %v1389 = vpop.permute.xlu0 %1388
        %vm1402 = vcmask 31744
        %v1403 = vsel %vm1402, %v1034, %v1062
        %v1404 = vsel %vm1402, %v1000, %v1064
        %v1405 = vsel %vm1402, %v1002, %v1066
        %v1406 = vsel %vm1402, %v1004, %v1068
        %v1407 = vsel %vm1402, %v1006, %v1070
        %v1408 = vsel %vm1402, %v1008, %v1072
        %v1409 = vsel %vm1402, %v1010, %v1074
        %v1410 = vsel %vm1402, %v1012, %v1076
        %v1411 = vsel %vm1402, %v1014, %v1078
        %v1412 = vsel %vm1402, %v1016, %v1080
        %v1413 = vsel %vm1402, %v1018, %v1082
        %v1414 = vsel %vm1402, %v1020, %v1084
        %vm1415 = vcmask 64512
        %v1416 = vsel %vm1415, %v1403, %v1122
        %v1417 = vsel %vm1415, %v1404, %v1124
        %v1418 = vsel %vm1415, %v1405, %v1126
        %v1419 = vsel %vm1415, %v1406, %v1128
        %v1420 = vsel %vm1415, %v1407, %v1130
        %v1421 = vsel %vm1415, %v1408, %v1132
        %v1422 = vsel %vm1415, %v1409, %v1134
        %v1423 = vsel %vm1415, %v1410, %v1136
        %v1424 = vsel %vm1415, %v1411, %v1138
        %v1425 = vsel %vm1415, %v1412, %v1140
        %v1426 = vsel %vm1415, %v1413, %v1142
        %v1427 = vsel %vm1415, %v1414, %v1144
        %vm1428 = vcmask 97280
        %v1429 = vsel %vm1428, %v1416, %v1182
        %v1430 = vsel %vm1428, %v1417, %v1184
        %v1431 = vsel %vm1428, %v1418, %v1186
        %v1432 = vsel %vm1428, %v1419, %v1188
        %v1433 = vsel %vm1428, %v1420, %v1190
        %v1434 = vsel %vm1428, %v1421, %v1192
        %v1435 = vsel %vm1428, %v1422, %v1194
        %v1436 = vsel %vm1428, %v1423, %v1196
        %v1437 = vsel %vm1428, %v1424, %v1198
        %v1438 = vsel %vm1428, %v1425, %v1200
        %v1439 = vsel %vm1428, %v1426, %v1202
        %v1440 = vsel %vm1428, %v1427, %v1204
        %vm1441 = vcmask 130048
        %v1442 = vsel %vm1441, %v1429, %v1242
        %v1443 = vsel %vm1441, %v1430, %v1244
        %v1444 = vsel %vm1441, %v1431, %v1246
        %v1445 = vsel %vm1441, %v1432, %v1248
        %v1446 = vsel %vm1441, %v1433, %v1250
        %v1447 = vsel %vm1441, %v1434, %v1252
        %v1448 = vsel %vm1441, %v1435, %v1254
        %v1449 = vsel %vm1441, %v1436, %v1256
        %v1450 = vsel %vm1441, %v1437, %v1258
        %v1451 = vsel %vm1441, %v1438, %v1260
        %v1452 = vsel %vm1441, %v1439, %v1262
        %v1453 = vsel %vm1441, %v1440, %v1264
        %vm1454 = vcmask 162816
        %v1455 = vsel %vm1454, %v1442, %v1305
        %v1456 = vsel %vm1454, %v1443, %v1307
        %v1457 = vsel %vm1454, %v1444, %v1309
        %v1458 = vsel %vm1454, %v1445, %v1311
        %v1459 = vsel %vm1454, %v1446, %v1313
        %v1460 = vsel %vm1454, %v1447, %v1315
        %v1461 = vsel %vm1454, %v1448, %v1317
        %v1462 = vsel %vm1454, %v1449, %v1319
        %v1463 = vsel %vm1454, %v1450, %v1321
        %v1464 = vsel %vm1454, %v1451, %v1323
        %v1465 = vsel %vm1454, %v1452, %v1325
        %v1466 = vsel %vm1454, %v1453, %v1327
        %vm1467 = vcmask 195584
        %v1468 = vsel %vm1467, %v1455, %v1367
        %v1469 = vsel %vm1467, %v1456, %v1369
        %v1470 = vsel %vm1467, %v1457, %v1371
        %v1471 = vsel %vm1467, %v1458, %v1373
        %v1472 = vsel %vm1467, %v1459, %v1375
        %v1473 = vsel %vm1467, %v1460, %v1377
        %v1474 = vsel %vm1467, %v1461, %v1379
        %v1475 = vsel %vm1467, %v1462, %v1381
        %v1476 = vsel %vm1467, %v1463, %v1383
        %v1477 = vsel %vm1467, %v1464, %v1385
        %v1478 = vsel %vm1467, %v1465, %v1387
        %v1479 = vsel %vm1467, %v1466, %v1389
        %v1481 = vlaneseq
        %v1482 = vshrl.u32 %v1481, 7
        %v1483 = vsub.s32 0, %v1482
        %v1484 = vrot.slane %v948, %v1483
        %vm1486 = vcmask 228352
        %v1488 = vsel %vm1486, %v1468, 0
        %v1491 = vsel %vm1486, %v1469, 0
        %v1494 = vsel %vm1486, %v1470, 0
        %v1497 = vsel %vm1486, %v1471, 0
        %v1500 = vsel %vm1486, %v1472, 0
        %v1503 = vsel %vm1486, %v1473, 0
        %v1506 = vsel %vm1486, %v1474, 0
        %v1509 = vsel %vm1486, %v1475, 0
        %v1512 = vsel %vm1486, %v1476, 0
        %v1515 = vsel %vm1486, %v1477, 0
        %v1518 = vsel %vm1486, %v1478, 0
        %v1521 = vsel %vm1486, %v1479, 0
        %v1524 = vsel %vm1217, %v947, 0
        %1526 = vmatprep.subr.mxu0 0.0
        %1527 = vmatpush1.msra.mxu0 %v944
        %1528 = vmatprep.subr.mxu0 0.0
        %1529 = vmatpush1.msra.mxu0 %v945
        %1530 = vmatprep.subr.mxu0 0.0
        %1531 = vmatpush1.msra.mxu0 %v946
        %1532 = vmatprep.subr.mxu0 0.0
        %1533 = vmatpush1.msra.mxu0 %v1524
        %1534 = vmatprep.subr.mxu0 0.0
        %1535 = vmatpush1.msra.mxu0 0.0
        %1536 = vmatprep.subr.mxu0 0.0
        %1537 = vmatpush1.msra.mxu0 0.0
        %1538 = vmatprep.subr.mxu0 0.0
        %1539 = vmatpush1.msra.mxu0 0.0
        %1540 = vmatprep.subr.mxu0 0.0
        %1541 = vmatpush1.msra.mxu0 0.0
        %1542 = vmatprep.subr.mxu0 0.0
        %1543 = vmatpush1.msra.mxu0 0.0
        %1544 = vmatprep.subr.mxu0 0.0
        %1545 = vmatpush1.msra.mxu0 0.0
        %1546 = vmatprep.subr.mxu0 0.0
        %1547 = vmatpush1.msra.mxu0 0.0
        %1548 = vmatprep.subr.mxu0 0.0
        %1549 = vmatpush1.msra.mxu0 0.0
        %1550 = vmatprep.subr.mxu0 0.0
        %1551 = vmatpush1.msra.mxu0 0.0
        %1552 = vmatprep.subr.mxu0 0.0
        %1553 = vmatpush1.msra.mxu0 0.0
        %1554 = vmatprep.subr.mxu0 0.0
        %1555 = vmatpush1.msra.mxu0 0.0
        %1556 = vmatprep.subr.mxu0 0.0
        %1557 = vmatpush1.msra.mxu0 0.0
        %1558 = vmatprep.subr.mxu0 0.0
        %1559 = vmatpush1.msra.mxu0 0.0
        %1560 = vmatprep.subr.mxu0 0.0
        %1561 = vmatpush1.msra.mxu0 0.0
        %1562 = vmatprep.subr.mxu0 0.0
        %1563 = vmatpush1.msra.mxu0 0.0
        %1564 = vmatprep.subr.mxu0 0.0
        %1565 = vmatpush1.msra.mxu0 0.0
        %1566 = vmatprep.subr.mxu0 0.0
        %1567 = vmatpush1.msra.mxu0 0.0
        %1568 = vmatprep.subr.mxu0 0.0
        %1569 = vmatpush1.msra.mxu0 0.0
        %1570 = vmatprep.subr.mxu0 0.0
        %1571 = vmatpush1.msra.mxu0 0.0
        %1572 = vmatprep.subr.mxu0 0.0
        %1573 = vmatpush1.msra.mxu0 0.0
        %1574 = vmatprep.subr.mxu0 0.0
        %1575 = vmatpush1.msra.mxu0 0.0
        %1576 = vmatprep.subr.mxu0 0.0
        %1577 = vmatpush1.msra.mxu0 0.0
        %1578 = vmatprep.subr.mxu0 0.0
        %1579 = vmatpush1.msra.mxu0 0.0
        %1580 = vmatprep.subr.mxu0 0.0
        %1581 = vmatpush1.msra.mxu0 0.0
        %1582 = vmatprep.subr.mxu0 0.0
        %1583 = vmatpush1.msra.mxu0 0.0
        %1584 = vmatprep.subr.mxu0 0.0
        %1585 = vmatpush1.msra.mxu0 0.0
        %1586 = vmatprep.subr.mxu0 0.0
        %1587 = vmatpush1.msra.mxu0 0.0
        %1588 = vmatprep.subr.mxu0 0.0
        %1589 = vmatpush1.msra.mxu0 0.0
        %1590 = vmatprep.mubr.f32.mxu0 0.0
        %1591 = vmatmul.mubr.f32.gmra.mrb[0].mxu0 %v1488
        %v1592 = vpop.f32.mrb[0].mxu0
        %v1593 = vadd.f32 %v1484, %v1592
        %v1594 = vpop.f32.mrb[0].mxu0
        %1595 = vmatprep.mubr.f32.mxu0 0.0
        %1596 = vmatmul.mubr.f32.gmra.mrb[0].mxu0 %v1491
        %v1597 = vpop.f32.mrb[0].mxu0
        %v1598 = vadd.f32 %v1484, %v1597
        %v1599 = vpop.f32.mrb[0].mxu0
        %1600 = vmatprep.mubr.f32.mxu0 0.0
        %1601 = vmatmul.mubr.f32.gmra.mrb[0].mxu0 %v1494
        %v1602 = vpop.f32.mrb[0].mxu0
        %v1603 = vadd.f32 %v1484, %v1602
        %v1604 = vpop.f32.mrb[0].mxu0
        %1605 = vmatprep.mubr.f32.mxu0 0.0
        %1606 = vmatmul.mubr.f32.gmra.mrb[0].mxu0 %v1497
        %v1607 = vpop.f32.mrb[0].mxu0
        %v1608 = vadd.f32 %v1484, %v1607
        %v1609 = vpop.f32.mrb[0].mxu0
        %1610 = vmatprep.mubr.f32.mxu0 0.0
        %1611 = vmatmul.mubr.f32.gmra.mrb[0].mxu0 %v1500
        %v1612 = vpop.f32.mrb[0].mxu0
        %v1613 = vadd.f32 %v1484, %v1612
        %v1614 = vpop.f32.mrb[0].mxu0
        %1615 = vmatprep.mubr.f32.mxu0 0.0
        %1616 = vmatmul.mubr.f32.gmra.mrb[0].mxu0 %v1503
        %v1617 = vpop.f32.mrb[0].mxu0
        %v1618 = vadd.f32 %v1484, %v1617
        %v1619 = vpop.f32.mrb[0].mxu0
        %1620 = vmatprep.mubr.f32.mxu0 0.0
        %1621 = vmatmul.mubr.f32.gmra.mrb[0].mxu0 %v1506
        %v1622 = vpop.f32.mrb[0].mxu0
        %v1623 = vadd.f32 %v1484, %v1622
        %v1624 = vpop.f32.mrb[0].mxu0
        %1625 = vmatprep.mubr.f32.mxu0 0.0
        %1626 = vmatmul.mubr.f32.gmra.mrb[0].mxu0 %v1509
        %v1627 = vpop.f32.mrb[0].mxu0
        %v1628 = vadd.f32 %v1484, %v1627
        %v1629 = vpop.f32.mrb[0].mxu0
        %1630 = vmatprep.mubr.f32.mxu0 0.0
        %1631 = vmatmul.mubr.f32.gmra.mrb[0].mxu0 %v1512
        %v1632 = vpop.f32.mrb[0].mxu0
        %v1633 = vadd.f32 %v1484, %v1632
        %v1634 = vpop.f32.mrb[0].mxu0
        %1635 = vmatprep.mubr.f32.mxu0 0.0
        %1636 = vmatmul.mubr.f32.gmra.mrb[0].mxu0 %v1515
        %v1637 = vpop.f32.mrb[0].mxu0
        %v1638 = vadd.f32 %v1484, %v1637
        %v1639 = vpop.f32.mrb[0].mxu0
        %1640 = vmatprep.mubr.f32.mxu0 0.0
        %1641 = vmatmul.mubr.f32.gmra.mrb[0].mxu0 %v1518
        %v1642 = vpop.f32.mrb[0].mxu0
        %v1643 = vadd.f32 %v1484, %v1642
        %v1644 = vpop.f32.mrb[0].mxu0
        %1645 = vmatprep.mubr.f32.mxu0 0.0
        %1646 = vmatmul.mubr.f32.gmra.mrb[0].mxu0 %v1521
        %v1647 = vpop.f32.mrb[0].mxu0
        %v1648 = vadd.f32 %v1484, %v1647
        %v1649 = vpop.f32.mrb[0].mxu0
        %1650 = vdwg.mxu0
        %v1651 = vmax.f32 %v1593, 0.0
        %v1652 = vmax.f32 %v1598, 0.0
        %v1653 = vmax.f32 %v1603, 0.0
        %v1654 = vmax.f32 %v1608, 0.0
        %v1655 = vmax.f32 %v1613, 0.0
        %v1656 = vmax.f32 %v1618, 0.0
        %v1657 = vmax.f32 %v1623, 0.0
        %v1658 = vmax.f32 %v1628, 0.0
        %v1659 = vmax.f32 %v1633, 0.0
        %v1660 = vmax.f32 %v1638, 0.0
        %v1661 = vmax.f32 %v1643, 0.0
        %v1662 = vmax.f32 %v1648, 0.0
        %v1663 = vlaneseq
        %v1664 = vshrl.u32 %v1663, 7
        %v1665 = vadd.s32 %v1664, 8
        %v1666 = vadd.s32 %v1664, 16
        %v1667 = vadd.s32 %v1664, 24
        %v1668 = vadd.s32 %v1664, 32
        %v1669 = vadd.s32 %v1664, 40
        %v1670 = vlaneseq
        %v1671 = vand.u32 %v1670, 127
        %v1672 = vmul.u32 %v1664, 2
        %v1673 = vmul.u32 %v1665, 2
        %v1674 = vmul.u32 %v1666, 2
        %v1675 = vmul.u32 %v1667, 2
        %v1676 = vmul.u32 %v1668, 2
        %v1677 = vmul.u32 %v1669, 2
        %vm1678 = vcmp.eq.s32.totalorder %v1671, %v1672
        %vm1679 = vcmp.eq.s32.totalorder %v1671, %v1673
        %vm1680 = vcmp.eq.s32.totalorder %v1671, %v1674
        %vm1681 = vcmp.eq.s32.totalorder %v1671, %v1675
        %vm1682 = vcmp.eq.s32.totalorder %v1671, %v1676
        %vm1683 = vcmp.eq.s32.totalorder %v1671, %v1677
        %v1684 = vsel %vm1678, 1, 0
        %v1685 = vsel %vm1679, 1, 0
        %v1686 = vsel %vm1680, 1, 0
        %v1687 = vsel %vm1681, 1, 0
        %v1688 = vsel %vm1682, 1, 0
        %v1689 = vsel %vm1683, 1, 0
        %v1690 = vcvt.s32.f32 %v1684
        %v1691 = vcvt.s32.f32 %v1685
        %v1692 = vcvt.s32.f32 %v1686
        %v1693 = vcvt.s32.f32 %v1687
        %v1694 = vcvt.s32.f32 %v1688
        %v1695 = vcvt.s32.f32 %v1689
        %v1696 = vadd.s32 %v1672, 1
        %v1697 = vadd.s32 %v1673, 1
        %v1698 = vadd.s32 %v1674, 1
        %v1699 = vadd.s32 %v1675, 1
        %v1700 = vadd.s32 %v1676, 1
        %v1701 = vadd.s32 %v1677, 1
        %vm1702 = vcmp.eq.s32.totalorder %v1671, %v1696
        %vm1703 = vcmp.eq.s32.totalorder %v1671, %v1697
        %vm1704 = vcmp.eq.s32.totalorder %v1671, %v1698
        %vm1705 = vcmp.eq.s32.totalorder %v1671, %v1699
        %vm1706 = vcmp.eq.s32.totalorder %v1671, %v1700
        %vm1707 = vcmp.eq.s32.totalorder %v1671, %v1701
        %v1708 = vsel %vm1702, 1, 0
        %v1709 = vsel %vm1703, 1, 0
        %v1710 = vsel %vm1704, 1, 0
        %v1711 = vsel %vm1705, 1, 0
        %v1712 = vsel %vm1706, 1, 0
        %v1713 = vsel %vm1707, 1, 0
        %v1714 = vcvt.s32.f32 %v1708
        %v1715 = vcvt.s32.f32 %v1709
        %v1716 = vcvt.s32.f32 %v1710
        %v1717 = vcvt.s32.f32 %v1711
        %v1718 = vcvt.s32.f32 %v1712
        %v1719 = vcvt.s32.f32 %v1713
        %vm1720 = vcmask 752640
        %v1722 = vsel %vm1720, %v1690, 0
        %v1725 = vsel %vm1720, %v1691, 0
        %v1728 = vsel %vm1720, %v1692, 0
        %v1731 = vsel %vm1720, %v1693, 0
        %v1734 = vsel %vm1720, %v1694, 0
        %v1737 = vsel %vm1720, %v1695, 0
        %v1740 = vsel %vm1217, %v1662, 0
        %1742 = vmatprep.subr.mxu0 0.0
        %1743 = vmatpush1.msra.mxu0 %v1651
        %1744 = vmatprep.subr.mxu0 0.0
        %1745 = vmatpush1.msra.mxu0 %v1652
        %1746 = vmatprep.subr.mxu0 0.0
        %1747 = vmatpush1.msra.mxu0 %v1653
        %1748 = vmatprep.subr.mxu0 0.0
        %1749 = vmatpush1.msra.mxu0 %v1654
        %1750 = vmatprep.subr.mxu0 0.0
        %1751 = vmatpush1.msra.mxu0 %v1655
        %1752 = vmatprep.subr.mxu0 0.0
        %1753 = vmatpush1.msra.mxu0 %v1656
        %1754 = vmatprep.subr.mxu0 0.0
        %1755 = vmatpush1.msra.mxu0 %v1657
        %1756 = vmatprep.subr.mxu0 0.0
        %1757 = vmatpush1.msra.mxu0 %v1658
        %1758 = vmatprep.subr.mxu0 0.0
        %1759 = vmatpush1.msra.mxu0 %v1659
        %1760 = vmatprep.subr.mxu0 0.0
        %1761 = vmatpush1.msra.mxu0 %v1660
        %1762 = vmatprep.subr.mxu0 0.0
        %1763 = vmatpush1.msra.mxu0 %v1661
        %1764 = vmatprep.subr.mxu0 0.0
        %1765 = vmatpush1.msra.mxu0 %v1740
        %1766 = vmatprep.subr.mxu0 0.0
        %1767 = vmatpush1.msra.mxu0 0.0
        %1768 = vmatprep.subr.mxu0 0.0
        %1769 = vmatpush1.msra.mxu0 0.0
        %1770 = vmatprep.subr.mxu0 0.0
        %1771 = vmatpush1.msra.mxu0 0.0
        %1772 = vmatprep.subr.mxu0 0.0
        %1773 = vmatpush1.msra.mxu0 0.0
        %1774 = vmatprep.subr.mxu0 0.0
        %1775 = vmatpush1.msra.mxu0 0.0
        %1776 = vmatprep.subr.mxu0 0.0
        %1777 = vmatpush1.msra.mxu0 0.0
        %1778 = vmatprep.subr.mxu0 0.0
        %1779 = vmatpush1.msra.mxu0 0.0
        %1780 = vmatprep.subr.mxu0 0.0
        %1781 = vmatpush1.msra.mxu0 0.0
        %1782 = vmatprep.subr.mxu0 0.0
        %1783 = vmatpush1.msra.mxu0 0.0
        %1784 = vmatprep.subr.mxu0 0.0
        %1785 = vmatpush1.msra.mxu0 0.0
        %1786 = vmatprep.subr.mxu0 0.0
        %1787 = vmatpush1.msra.mxu0 0.0
        %1788 = vmatprep.subr.mxu0 0.0
        %1789 = vmatpush1.msra.mxu0 0.0
        %1790 = vmatprep.subr.mxu0 0.0
        %1791 = vmatpush1.msra.mxu0 0.0
        %1792 = vmatprep.subr.mxu0 0.0
        %1793 = vmatpush1.msra.mxu0 0.0
        %1794 = vmatprep.subr.mxu0 0.0
        %1795 = vmatpush1.msra.mxu0 0.0
        %1796 = vmatprep.subr.mxu0 0.0
        %1797 = vmatpush1.msra.mxu0 0.0
        %1798 = vmatprep.subr.mxu0 0.0
        %1799 = vmatpush1.msra.mxu0 0.0
        %1800 = vmatprep.subr.mxu0 0.0
        %1801 = vmatpush1.msra.mxu0 0.0
        %1802 = vmatprep.subr.mxu0 0.0
        %1803 = vmatpush1.msra.mxu0 0.0
        %1804 = vmatprep.subr.mxu0 0.0
        %1805 = vmatpush1.msra.mxu0 0.0
        %1806 = vmatprep.mubr.f32.mxu0 0.0
        %1807 = vmatmul.mubr.f32.gmra.mrb[0].mxu0 %v1722
        %v1808 = vpop.f32.mrb[0].mxu0
        %v1809 = vadd.f32 0.0, %v1808
        %v1810 = vpop.f32.mrb[0].mxu0
        %1811 = vmatprep.mubr.f32.mxu0 0.0
        %1812 = vmatmul.mubr.f32.gmra.mrb[0].mxu0 %v1725
        %v1813 = vpop.f32.mrb[0].mxu0
        %v1814 = vadd.f32 0.0, %v1813
        %v1815 = vpop.f32.mrb[0].mxu0
        %1816 = vmatprep.mubr.f32.mxu0 0.0
        %1817 = vmatmul.mubr.f32.gmra.mrb[0].mxu0 %v1728
        %v1818 = vpop.f32.mrb[0].mxu0
        %v1819 = vadd.f32 0.0, %v1818
        %v1820 = vpop.f32.mrb[0].mxu0
        %1821 = vmatprep.mubr.f32.mxu0 0.0
        %1822 = vmatmul.mubr.f32.gmra.mrb[0].mxu0 %v1731
        %v1823 = vpop.f32.mrb[0].mxu0
        %v1824 = vadd.f32 0.0, %v1823
        %v1825 = vpop.f32.mrb[0].mxu0
        %1826 = vmatprep.mubr.f32.mxu0 0.0
        %1827 = vmatmul.mubr.f32.gmra.mrb[0].mxu0 %v1734
        %v1828 = vpop.f32.mrb[0].mxu0
        %v1829 = vadd.f32 0.0, %v1828
        %v1830 = vpop.f32.mrb[0].mxu0
        %1831 = vmatprep.mubr.f32.mxu0 0.0
        %1832 = vmatmul.mubr.f32.gmra.mrb[0].mxu0 %v1737
        %v1833 = vpop.f32.mrb[0].mxu0
        %v1834 = vadd.f32 0.0, %v1833
        %v1835 = vpop.f32.mrb[0].mxu0
        %1836 = vdwg.mxu0
        %v1838 = vsel %vm1720, %v1714, 0
        %v1841 = vsel %vm1720, %v1715, 0
        %v1844 = vsel %vm1720, %v1716, 0
        %v1847 = vsel %vm1720, %v1717, 0
        %v1850 = vsel %vm1720, %v1718, 0
        %v1853 = vsel %vm1720, %v1719, 0
        %1855 = vmatprep.subr.mxu0 0.0
        %1856 = vmatpush1.msra.mxu0 %v1651
        %1857 = vmatprep.subr.mxu0 0.0
        %1858 = vmatpush1.msra.mxu0 %v1652
        %1859 = vmatprep.subr.mxu0 0.0
        %1860 = vmatpush1.msra.mxu0 %v1653
        %1861 = vmatprep.subr.mxu0 0.0
        %1862 = vmatpush1.msra.mxu0 %v1654
        %1863 = vmatprep.subr.mxu0 0.0
        %1864 = vmatpush1.msra.mxu0 %v1655
        %1865 = vmatprep.subr.mxu0 0.0
        %1866 = vmatpush1.msra.mxu0 %v1656
        %1867 = vmatprep.subr.mxu0 0.0
        %1868 = vmatpush1.msra.mxu0 %v1657
        %1869 = vmatprep.subr.mxu0 0.0
        %1870 = vmatpush1.msra.mxu0 %v1658
        %1871 = vmatprep.subr.mxu0 0.0
        %1872 = vmatpush1.msra.mxu0 %v1659
        %1873 = vmatprep.subr.mxu0 0.0
        %1874 = vmatpush1.msra.mxu0 %v1660
        %1875 = vmatprep.subr.mxu0 0.0
        %1876 = vmatpush1.msra.mxu0 %v1661
        %1877 = vmatprep.subr.mxu0 0.0
        %1878 = vmatpush1.msra.mxu0 %v1740
        %1879 = vmatprep.subr.mxu0 0.0
        %1880 = vmatpush1.msra.mxu0 0.0
        %1881 = vmatprep.subr.mxu0 0.0
        %1882 = vmatpush1.msra.mxu0 0.0
        %1883 = vmatprep.subr.mxu0 0.0
        %1884 = vmatpush1.msra.mxu0 0.0
        %1885 = vmatprep.subr.mxu0 0.0
        %1886 = vmatpush1.msra.mxu0 0.0
        %1887 = vmatprep.subr.mxu0 0.0
        %1888 = vmatpush1.msra.mxu0 0.0
        %1889 = vmatprep.subr.mxu0 0.0
        %1890 = vmatpush1.msra.mxu0 0.0
        %1891 = vmatprep.subr.mxu0 0.0
        %1892 = vmatpush1.msra.mxu0 0.0
        %1893 = vmatprep.subr.mxu0 0.0
        %1894 = vmatpush1.msra.mxu0 0.0
        %1895 = vmatprep.subr.mxu0 0.0
        %1896 = vmatpush1.msra.mxu0 0.0
        %1897 = vmatprep.subr.mxu0 0.0
        %1898 = vmatpush1.msra.mxu0 0.0
        %1899 = vmatprep.subr.mxu0 0.0
        %1900 = vmatpush1.msra.mxu0 0.0
        %1901 = vmatprep.subr.mxu0 0.0
        %1902 = vmatpush1.msra.mxu0 0.0
        %1903 = vmatprep.subr.mxu0 0.0
        %1904 = vmatpush1.msra.mxu0 0.0
        %1905 = vmatprep.subr.mxu0 0.0
        %1906 = vmatpush1.msra.mxu0 0.0
        %1907 = vmatprep.subr.mxu0 0.0
        %1908 = vmatpush1.msra.mxu0 0.0
        %1909 = vmatprep.subr.mxu0 0.0
        %1910 = vmatpush1.msra.mxu0 0.0
        %1911 = vmatprep.subr.mxu0 0.0
        %1912 = vmatpush1.msra.mxu0 0.0
        %1913 = vmatprep.subr.mxu0 0.0
        %1914 = vmatpush1.msra.mxu0 0.0
        %1915 = vmatprep.subr.mxu0 0.0
        %1916 = vmatpush1.msra.mxu0 0.0
        %1917 = vmatprep.subr.mxu0 0.0
        %1918 = vmatpush1.msra.mxu0 0.0
        %1919 = vmatprep.mubr.f32.mxu0 0.0
        %1920 = vmatmul.mubr.f32.gmra.mrb[0].mxu0 %v1838
        %v1921 = vpop.f32.mrb[0].mxu0
        %v1922 = vadd.f32 0.0, %v1921
        %v1923 = vpop.f32.mrb[0].mxu0
        %1924 = vmatprep.mubr.f32.mxu0 0.0
        %1925 = vmatmul.mubr.f32.gmra.mrb[0].mxu0 %v1841
        %v1926 = vpop.f32.mrb[0].mxu0
        %v1927 = vadd.f32 0.0, %v1926
        %v1928 = vpop.f32.mrb[0].mxu0
        %1929 = vmatprep.mubr.f32.mxu0 0.0
        %1930 = vmatmul.mubr.f32.gmra.mrb[0].mxu0 %v1844
        %v1931 = vpop.f32.mrb[0].mxu0
        %v1932 = vadd.f32 0.0, %v1931
        %v1933 = vpop.f32.mrb[0].mxu0
        %1934 = vmatprep.mubr.f32.mxu0 0.0
        %1935 = vmatmul.mubr.f32.gmra.mrb[0].mxu0 %v1847
        %v1936 = vpop.f32.mrb[0].mxu0
        %v1937 = vadd.f32 0.0, %v1936
        %v1938 = vpop.f32.mrb[0].mxu0
        %1939 = vmatprep.mubr.f32.mxu0 0.0
        %1940 = vmatmul.mubr.f32.gmra.mrb[0].mxu0 %v1850
        %v1941 = vpop.f32.mrb[0].mxu0
        %v1942 = vadd.f32 0.0, %v1941
        %v1943 = vpop.f32.mrb[0].mxu0
        %1944 = vmatprep.mubr.f32.mxu0 0.0
        %1945 = vmatmul.mubr.f32.gmra.mrb[0].mxu0 %v1853
        %v1946 = vpop.f32.mrb[0].mxu0
        %v1947 = vadd.f32 0.0, %v1946
        %v1948 = vpop.f32.mrb[0].mxu0
        %1949 = vdwg.mxu0
        %v1950 = vmax.f32 %v1809, %v1922
        %v1951 = vmax.f32 %v1814, %v1927
        %v1952 = vmax.f32 %v1819, %v1932
        %v1953 = vmax.f32 %v1824, %v1937
        %v1954 = vmax.f32 %v1829, %v1942
        %v1955 = vmax.f32 %v1834, %v1947
        %v1956 = vld [vmem:[%s11] sm:$0x1]
        %v1957 = vld [vmem:[%s13] sm:$0x1]
        %v1958 = vld [vmem:[%s15] sm:$0xff]
        %v1959 = vld [vmem:[%s15 + $0x8] sm:$0xff]
        %v1960 = vld [vmem:[%s15 + $0x10] sm:$0xff]
        %v1961 = vld [vmem:[%s15 + $0x18] sm:$0xff]
        %v1962 = vld [vmem:[%s15 + $0x20] sm:$0xff]
        %v1963 = vld [vmem:[%s15 + $0x28] sm:$0xff]
        %v1964 = vld [vmem:[%s15 + $0x30] sm:$0xff]
        %v1965 = vld [vmem:[%s15 + $0x38] sm:$0xff]
        %v1966 = vld [vmem:[%s15 + $0x40] sm:$0xff]
        %v1967 = vld [vmem:[%s15 + $0x48] sm:$0xff]
        %v1968 = vld [vmem:[%s15 + $0x50] sm:$0xff]
        %v1969 = vld [vmem:[%s15 + $0x58] sm:$0xff]
        %v1970 = vld [vmem:[%s15 + $0x60] sm:$0xff]
        %v1971 = vld [vmem:[%s15 + $0x68] sm:$0xff]
        %v1972 = vld [vmem:[%s15 + $0x70] sm:$0xff]
        %v1973 = vld [vmem:[%s15 + $0x78] sm:$0xff]
        %v1974 = vld [vmem:[%s15 + $0x80] sm:$0xff]
        %v1975 = vld [vmem:[%s15 + $0x88] sm:$0xff]
        %v1976 = vld [vmem:[%s15 + $0x90] sm:$0xff]
        %v1977 = vld [vmem:[%s15 + $0x98] sm:$0xff]
        %v1978 = vld [vmem:[%s15 + $0xa0] sm:$0xff]
        %v1979 = vld [vmem:[%s15 + $0xa8] sm:$0xff]
        %v1980 = vld [vmem:[%s15 + $0xb0] sm:$0xff]
        %v1981 = vld [vmem:[%s15 + $0xb8] sm:$0xff]
        %v1982 = vld [vmem:[%s15 + $0xc0] sm:$0xff]
        %v1983 = vld [vmem:[%s15 + $0xc8] sm:$0xff]
        %v1984 = vld [vmem:[%s15 + $0xd0] sm:$0xff]
        %v1985 = vld [vmem:[%s15 + $0xd8] sm:$0xff]
        %v1986 = vld [vmem:[%s17] sm:$0x1]
        %v1988 = vlaneseq
        %v1989 = vshrl.u32 %v1988, 7
        %v1990 = vsub.s32 0, %v1989
        %v1991 = vrot.slane %v1956, %v1990
        %v1993 = vmul.f32 %v1950, %v1991
        %v1994 = vmul.f32 %v1951, %v1991
        %v1995 = vmul.f32 %v1952, %v1991
        %v1996 = vmul.f32 %v1953, %v1991
        %v1997 = vmul.f32 %v1954, %v1991
        %v1998 = vmul.f32 %v1955, %v1991
        %v2000 = vlaneseq
        %v2001 = vshrl.u32 %v2000, 7
        %v2002 = vsub.s32 0, %v2001
        %v2003 = vrot.slane %v1957, %v2002
        %v2005 = vadd.f32 %v1993, %v2003
        %v2006 = vadd.f32 %v1994, %v2003
        %v2007 = vadd.f32 %v1995, %v2003
        %v2008 = vadd.f32 %v1996, %v2003
        %v2009 = vadd.f32 %v1997, %v2003
        %v2010 = vadd.f32 %v1998, %v2003
        %v2017 = vrot.slane %v2005, 7
        %v2018 = vrot.slane %v2006, 7
        %v2019 = vsel %vm997, %v2017, %v2018
        %v2020 = vrot.slane %v2007, 7
        %v2021 = vsel %vm997, %v2018, %v2020
        %v2022 = vrot.slane %v2008, 7
        %v2023 = vsel %vm997, %v2020, %v2022
        %v2024 = vrot.slane %v2009, 7
        %v2025 = vsel %vm997, %v2022, %v2024
        %v2026 = vrot.slane %v2010, 7
        %v2027 = vsel %vm997, %v2024, %v2026
        %v2034 = vsel %vm997, 0.0, %v2017
        %v2035 = vsel %vm1037, %v2027, 0.0
        %v2037 = vrot.slane %v2034, 2
        %v2038 = vrot.slane %v2019, 2
        %v2039 = vsel %vm1097, %v2037, %v2038
        %v2040 = vrot.slane %v2021, 2
        %v2041 = vsel %vm1097, %v2038, %v2040
        %v2042 = vrot.slane %v2023, 2
        %v2043 = vsel %vm1097, %v2040, %v2042
        %v2044 = vrot.slane %v2025, 2
        %v2045 = vsel %vm1097, %v2042, %v2044
        %2046 = vrot.lane.b32.xlu0 %v2039, 32
        %v2047 = vpop.permute.xlu0 %2046
        %2048 = vrot.lane.b32.xlu0 %v2041, 32
        %v2049 = vpop.permute.xlu0 %2048
        %2050 = vrot.lane.b32.xlu0 %v2043, 32
        %v2051 = vpop.permute.xlu0 %2050
        %2052 = vrot.lane.b32.xlu0 %v2045, 32
        %v2053 = vpop.permute.xlu0 %2052
        %2054 = vrot.lane.b32.xlu0 %v2044, 32
        %v2055 = vpop.permute.xlu0 %2054
        %v2061 = vrot.slane %v2034, 4
        %v2062 = vrot.slane %v2019, 4
        %v2063 = vsel %vm1217, %v2061, %v2062
        %v2064 = vrot.slane %v2021, 4
        %v2065 = vsel %vm1217, %v2062, %v2064
        %v2066 = vrot.slane %v2023, 4
        %v2067 = vsel %vm1217, %v2064, %v2066
        %v2068 = vrot.slane %v2025, 4
        %v2069 = vsel %vm1217, %v2066, %v2068
        %2070 = vrot.lane.b32.xlu0 %v2063, 64
        %v2071 = vpop.permute.xlu0 %2070
        %2072 = vrot.lane.b32.xlu0 %v2065, 64
        %v2073 = vpop.permute.xlu0 %2072
        %2074 = vrot.lane.b32.xlu0 %v2067, 64
        %v2075 = vpop.permute.xlu0 %2074
        %2076 = vrot.lane.b32.xlu0 %v2069, 64
        %v2077 = vpop.permute.xlu0 %2076
        %2078 = vrot.lane.b32.xlu0 %v2068, 64
        %v2079 = vpop.permute.xlu0 %2078
        %v2086 = vrot.slane %v2034, 6
        %v2087 = vrot.slane %v2019, 6
        %v2088 = vsel %vm1340, %v2086, %v2087
        %v2089 = vrot.slane %v2021, 6
        %v2090 = vsel %vm1340, %v2087, %v2089
        %v2091 = vrot.slane %v2023, 6
        %v2092 = vsel %vm1340, %v2089, %v2091
        %v2093 = vrot.slane %v2025, 6
        %v2094 = vsel %vm1340, %v2091, %v2093
        %v2095 = vrot.slane %v2035, 6
        %v2096 = vsel %vm1340, %v2093, %v2095
        %2097 = vrot.lane.b32.xlu0 %v2088, 96
        %v2098 = vpop.permute.xlu0 %2097
        %2099 = vrot.lane.b32.xlu0 %v2090, 96
        %v2100 = vpop.permute.xlu0 %2099
        %2101 = vrot.lane.b32.xlu0 %v2092, 96
        %v2102 = vpop.permute.xlu0 %2101
        %2103 = vrot.lane.b32.xlu0 %v2094, 96
        %v2104 = vpop.permute.xlu0 %2103
        %2105 = vrot.lane.b32.xlu0 %v2096, 96
        %v2106 = vpop.permute.xlu0 %2105
        %v2112 = vrot.slane %v2035, 2
        %v2113 = vsel %vm1097, %v2044, %v2112
        %2114 = vrot.lane.b32.xlu0 %v2113, 32
        %v2115 = vpop.permute.xlu0 %2114
        %2116 = vrot.lane.b32.xlu0 %v2112, 32
        %v2117 = vpop.permute.xlu0 %2116
        %v2120 = vrot.slane %v2035, 4
        %v2121 = vsel %vm1217, %v2068, %v2120
        %2122 = vrot.lane.b32.xlu0 %v2121, 64
        %v2123 = vpop.permute.xlu0 %2122
        %2124 = vrot.lane.b32.xlu0 %v2120, 64
        %v2125 = vpop.permute.xlu0 %2124
        %vm2128 = vcmask 261120
        %v2129 = vsel %vm2128, %v2034, %v2047
        %v2130 = vsel %vm2128, %v2019, %v2049
        %v2131 = vsel %vm2128, %v2021, %v2051
        %v2132 = vsel %vm2128, %v2023, %v2053
        %v2133 = vsel %vm2128, %v2025, %v2055
        %vm2134 = vcmask 523264
        %v2135 = vsel %vm2134, %v2129, %v2071
        %v2136 = vsel %vm2134, %v2130, %v2073
        %v2137 = vsel %vm2134, %v2131, %v2075
        %v2138 = vsel %vm2134, %v2132, %v2077
        %v2139 = vsel %vm2134, %v2133, %v2079
        %vm2140 = vcmask 785408
        %v2141 = vsel %vm2140, %v2135, %v2098
        %v2142 = vsel %vm2140, %v2136, %v2100
        %v2143 = vsel %vm2140, %v2137, %v2102
        %v2144 = vsel %vm2140, %v2138, %v2104
        %v2145 = vsel %vm2140, %v2139, %v2106
        %v2146 = vsel %vm2128, %v2025, %v2115
        %v2147 = vsel %vm2128, %v2035, %v2117
        %v2148 = vsel %vm2134, %v2146, %v2123
        %v2149 = vsel %vm2134, %v2147, %v2125
        %v2151 = vlaneseq
        %v2152 = vshrl.u32 %v2151, 7
        %v2153 = vsub.s32 0, %v2152
        %v2154 = vrot.slane %v1986, %v2153
        %v2157 = vsel %vm2140, %v2136, 0
        %v2160 = vsel %vm2140, %v2137, 0
        %v2163 = vsel %vm2140, %v2138, 0
        %v2166 = vsel %vm2140, %v2148, 0
        %v2169 = vsel %vm2140, %v2149, 0
        %2171 = vmatprep.subr.mxu0 0.0
        %2172 = vmatpush1.msra.mxu0 %v1958
        %2173 = vmatprep.subr.mxu0 0.0
        %2174 = vmatpush1.msra.mxu0 %v1959
        %2175 = vmatprep.subr.mxu0 0.0
        %2176 = vmatpush1.msra.mxu0 %v1960
        %2177 = vmatprep.subr.mxu0 0.0
        %2178 = vmatpush1.msra.mxu0 %v1961
        %2179 = vmatprep.subr.mxu0 0.0
        %2180 = vmatpush1.msra.mxu0 %v1962
        %2181 = vmatprep.subr.mxu0 0.0
        %2182 = vmatpush1.msra.mxu0 %v1963
        %2183 = vmatprep.subr.mxu0 0.0
        %2184 = vmatpush1.msra.mxu0 %v1964
        %2185 = vmatprep.subr.mxu0 0.0
        %2186 = vmatpush1.msra.mxu0 %v1965
        %2187 = vmatprep.subr.mxu0 0.0
        %2188 = vmatpush1.msra.mxu0 %v1966
        %2189 = vmatprep.subr.mxu0 0.0
        %2190 = vmatpush1.msra.mxu0 %v1967
        %2191 = vmatprep.subr.mxu0 0.0
        %2192 = vmatpush1.msra.mxu0 %v1968
        %2193 = vmatprep.subr.mxu0 0.0
        %2194 = vmatpush1.msra.mxu0 %v1969
        %2195 = vmatprep.subr.mxu0 0.0
        %2196 = vmatpush1.msra.mxu0 %v1970
        %2197 = vmatprep.subr.mxu0 0.0
        %2198 = vmatpush1.msra.mxu0 %v1971
        %2199 = vmatprep.subr.mxu0 0.0
        %2200 = vmatpush1.msra.mxu0 %v1972
        %2201 = vmatprep.subr.mxu0 0.0
        %2202 = vmatpush1.msra.mxu0 %v1973
        %2203 = vmatprep.subr.mxu0 0.0
        %2204 = vmatpush1.msra.mxu0 %v1974
        %2205 = vmatprep.subr.mxu0 0.0
        %2206 = vmatpush1.msra.mxu0 %v1975
        %2207 = vmatprep.subr.mxu0 0.0
        %2208 = vmatpush1.msra.mxu0 %v1976
        %2209 = vmatprep.subr.mxu0 0.0
        %2210 = vmatpush1.msra.mxu0 %v1977
        %2211 = vmatprep.subr.mxu0 0.0
        %2212 = vmatpush1.msra.mxu0 %v1978
        %2213 = vmatprep.subr.mxu0 0.0
        %2214 = vmatpush1.msra.mxu0 %v1979
        %2215 = vmatprep.subr.mxu0 0.0
        %2216 = vmatpush1.msra.mxu0 %v1980
        %2217 = vmatprep.subr.mxu0 0.0
        %2218 = vmatpush1.msra.mxu0 %v1981
        %2219 = vmatprep.subr.mxu0 0.0
        %2220 = vmatpush1.msra.mxu0 %v1982
        %2221 = vmatprep.subr.mxu0 0.0
        %2222 = vmatpush1.msra.mxu0 %v1983
        %2223 = vmatprep.subr.mxu0 0.0
        %2224 = vmatpush1.msra.mxu0 %v1984
        %2225 = vmatprep.subr.mxu0 0.0
        %2226 = vmatpush1.msra.mxu0 %v1985
        %2227 = vmatprep.subr.mxu0 0.0
        %2228 = vmatpush1.msra.mxu0 0.0
        %2229 = vmatprep.subr.mxu0 0.0
        %2230 = vmatpush1.msra.mxu0 0.0
        %2231 = vmatprep.subr.mxu0 0.0
        %2232 = vmatpush1.msra.mxu0 0.0
        %2233 = vmatprep.subr.mxu0 0.0
        %2234 = vmatpush1.msra.mxu0 0.0
        %2235 = vmatprep.mubr.f32.mxu0 %v2157
        %2236 = vmatmul.mubr.f32.gmra.mrb[0].mxu0 %v2141
        %v2237 = vpop.f32.mrb[0].mxu0
        %v2238 = vadd.f32 %v2154, %v2237
        %v2239 = vpop.f32.mrb[0].mxu0
        %2240 = vmatprep.mubr.f32.mxu0 %v2160
        %2241 = vmatmul.mubr.f32.gmra.mrb[0].mxu0 %v2142
        %v2242 = vpop.f32.mrb[0].mxu0
        %v2243 = vadd.f32 %v2154, %v2242
        %v2244 = vpop.f32.mrb[0].mxu0
        %2245 = vmatprep.mubr.f32.mxu0 %v2163
        %2246 = vmatmul.mubr.f32.gmra.mrb[0].mxu0 %v2143
        %v2247 = vpop.f32.mrb[0].mxu0
        %v2248 = vadd.f32 %v2154, %v2247
        %v2249 = vpop.f32.mrb[0].mxu0
        %2250 = vmatprep.mubr.f32.mxu0 %v2166
        %2251 = vmatmul.mubr.f32.gmra.mrb[0].mxu0 %v2144
        %v2252 = vpop.f32.mrb[0].mxu0
        %v2253 = vadd.f32 %v2154, %v2252
        %v2254 = vpop.f32.mrb[0].mxu0
        %2255 = vmatprep.mubr.f32.mxu0 %v2169
        %2256 = vmatmul.mubr.f32.gmra.mrb[0].mxu0 %v2145
        %v2257 = vpop.f32.mrb[0].mxu0
        %v2258 = vadd.f32 %v2154, %v2257
        %v2259 = vpop.f32.mrb[0].mxu0
        %2260 = vdwg.mxu0
        %v2261 = vmax.f32 %v2238, 0.0
        %v2262 = vmax.f32 %v2243, 0.0
        %v2263 = vmax.f32 %v2248, 0.0
        %v2264 = vmax.f32 %v2253, 0.0
        %v2265 = vmax.f32 %v2258, 0.0
        %vm2266 = vcmask 293888
        %v2267 = vsel %vm2266, %v1690, 0
        %v2269 = vsel %vm2266, %v1691, 0
        %v2271 = vsel %vm2266, %v1692, 0
        %v2274 = vsel %vm1217, %v2265, 0
        %2276 = vmatprep.subr.mxu0 0.0
        %2277 = vmatpush1.msra.mxu0 %v2261
        %2278 = vmatprep.subr.mxu0 0.0
        %2279 = vmatpush1.msra.mxu0 %v2262
        %2280 = vmatprep.subr.mxu0 0.0
        %2281 = vmatpush1.msra.mxu0 %v2263
        %2282 = vmatprep.subr.mxu0 0.0
        %2283 = vmatpush1.msra.mxu0 %v2264
        %2284 = vmatprep.subr.mxu0 0.0
        %2285 = vmatpush1.msra.mxu0 %v2274
        %2286 = vmatprep.subr.mxu0 0.0
        %2287 = vmatpush1.msra.mxu0 0.0
        %2288 = vmatprep.subr.mxu0 0.0
        %2289 = vmatpush1.msra.mxu0 0.0
        %2290 = vmatprep.subr.mxu0 0.0
        %2291 = vmatpush1.msra.mxu0 0.0
        %2292 = vmatprep.subr.mxu0 0.0
        %2293 = vmatpush1.msra.mxu0 0.0
        %2294 = vmatprep.subr.mxu0 0.0
        %2295 = vmatpush1.msra.mxu0 0.0
        %2296 = vmatprep.subr.mxu0 0.0
        %2297 = vmatpush1.msra.mxu0 0.0
        %2298 = vmatprep.subr.mxu0 0.0
        %2299 = vmatpush1.msra.mxu0 0.0
        %2300 = vmatprep.subr.mxu0 0.0
        %2301 = vmatpush1.msra.mxu0 0.0
        %2302 = vmatprep.subr.mxu0 0.0
        %2303 = vmatpush1.msra.mxu0 0.0
        %2304 = vmatprep.subr.mxu0 0.0
        %2305 = vmatpush1.msra.mxu0 0.0
        %2306 = vmatprep.subr.mxu0 0.0
        %2307 = vmatpush1.msra.mxu0 0.0
        %2308 = vmatprep.subr.mxu0 0.0
        %2309 = vmatpush1.msra.mxu0 0.0
        %2310 = vmatprep.subr.mxu0 0.0
        %2311 = vmatpush1.msra.mxu0 0.0
        %2312 = vmatprep.subr.mxu0 0.0
        %2313 = vmatpush1.msra.mxu0 0.0
        %2314 = vmatprep.subr.mxu0 0.0
        %2315 = vmatpush1.msra.mxu0 0.0
        %2316 = vmatprep.subr.mxu0 0.0
        %2317 = vmatpush1.msra.mxu0 0.0
        %2318 = vmatprep.subr.mxu0 0.0
        %2319 = vmatpush1.msra.mxu0 0.0
        %2320 = vmatprep.subr.mxu0 0.0
        %2321 = vmatpush1.msra.mxu0 0.0
        %2322 = vmatprep.subr.mxu0 0.0
        %2323 = vmatpush1.msra.mxu0 0.0
        %2324 = vmatprep.subr.mxu0 0.0
        %2325 = vmatpush1.msra.mxu0 0.0
        %2326 = vmatprep.subr.mxu0 0.0
        %2327 = vmatpush1.msra.mxu0 0.0
        %2328 = vmatprep.subr.mxu0 0.0
        %2329 = vmatpush1.msra.mxu0 0.0
        %2330 = vmatprep.subr.mxu0 0.0
        %2331 = vmatpush1.msra.mxu0 0.0
        %2332 = vmatprep.subr.mxu0 0.0
        %2333 = vmatpush1.msra.mxu0 0.0
        %2334 = vmatprep.subr.mxu0 0.0
        %2335 = vmatpush1.msra.mxu0 0.0
        %2336 = vmatprep.subr.mxu0 0.0
        %2337 = vmatpush1.msra.mxu0 0.0
        %2338 = vmatprep.subr.mxu0 0.0
        %2339 = vmatpush1.msra.mxu0 0.0
        %2340 = vmatprep.mubr.f32.mxu0 0.0
        %2341 = vmatmul.mubr.f32.gmra.mrb[0].mxu0 %v2267
        %v2342 = vpop.f32.mrb[0].mxu0
        %v2343 = vadd.f32 0.0, %v2342
        %v2344 = vpop.f32.mrb[0].mxu0
        %2345 = vmatprep.mubr.f32.mxu0 0.0
        %2346 = vmatmul.mubr.f32.gmra.mrb[0].mxu0 %v2269
        %v2347 = vpop.f32.mrb[0].mxu0
        %v2348 = vadd.f32 0.0, %v2347
        %v2349 = vpop.f32.mrb[0].mxu0
        %2350 = vmatprep.mubr.f32.mxu0 0.0
        %2351 = vmatmul.mubr.f32.gmra.mrb[0].mxu0 %v2271
        %v2352 = vpop.f32.mrb[0].mxu0
        %v2353 = vadd.f32 0.0, %v2352
        %v2354 = vpop.f32.mrb[0].mxu0
        %2355 = vdwg.mxu0
        %v2356 = vsel %vm2266, %v1714, 0
        %v2358 = vsel %vm2266, %v1715, 0
        %v2360 = vsel %vm2266, %v1716, 0
        %2362 = vmatprep.subr.mxu0 0.0
        %2363 = vmatpush1.msra.mxu0 %v2261
        %2364 = vmatprep.subr.mxu0 0.0
        %2365 = vmatpush1.msra.mxu0 %v2262
        %2366 = vmatprep.subr.mxu0 0.0
        %2367 = vmatpush1.msra.mxu0 %v2263
        %2368 = vmatprep.subr.mxu0 0.0
        %2369 = vmatpush1.msra.mxu0 %v2264
        %2370 = vmatprep.subr.mxu0 0.0
        %2371 = vmatpush1.msra.mxu0 %v2274
        %2372 = vmatprep.subr.mxu0 0.0
        %2373 = vmatpush1.msra.mxu0 0.0
        %2374 = vmatprep.subr.mxu0 0.0
        %2375 = vmatpush1.msra.mxu0 0.0
        %2376 = vmatprep.subr.mxu0 0.0
        %2377 = vmatpush1.msra.mxu0 0.0
        %2378 = vmatprep.subr.mxu0 0.0
        %2379 = vmatpush1.msra.mxu0 0.0
        %2380 = vmatprep.subr.mxu0 0.0
        %2381 = vmatpush1.msra.mxu0 0.0
        %2382 = vmatprep.subr.mxu0 0.0
        %2383 = vmatpush1.msra.mxu0 0.0
        %2384 = vmatprep.subr.mxu0 0.0
        %2385 = vmatpush1.msra.mxu0 0.0
        %2386 = vmatprep.subr.mxu0 0.0
        %2387 = vmatpush1.msra.mxu0 0.0
        %2388 = vmatprep.subr.mxu0 0.0
        %2389 = vmatpush1.msra.mxu0 0.0
        %2390 = vmatprep.subr.mxu0 0.0
        %2391 = vmatpush1.msra.mxu0 0.0
        %2392 = vmatprep.subr.mxu0 0.0
        %2393 = vmatpush1.msra.mxu0 0.0
        %2394 = vmatprep.subr.mxu0 0.0
        %2395 = vmatpush1.msra.mxu0 0.0
        %2396 = vmatprep.subr.mxu0 0.0
        %2397 = vmatpush1.msra.mxu0 0.0
        %2398 = vmatprep.subr.mxu0 0.0
        %2399 = vmatpush1.msra.mxu0 0.0
        %2400 = vmatprep.subr.mxu0 0.0
        %2401 = vmatpush1.msra.mxu0 0.0
        %2402 = vmatprep.subr.mxu0 0.0
        %2403 = vmatpush1.msra.mxu0 0.0
        %2404 = vmatprep.subr.mxu0 0.0
        %2405 = vmatpush1.msra.mxu0 0.0
        %2406 = vmatprep.subr.mxu0 0.0
        %2407 = vmatpush1.msra.mxu0 0.0
        %2408 = vmatprep.subr.mxu0 0.0
        %2409 = vmatpush1.msra.mxu0 0.0
        %2410 = vmatprep.subr.mxu0 0.0
        %2411 = vmatpush1.msra.mxu0 0.0
        %2412 = vmatprep.subr.mxu0 0.0
        %2413 = vmatpush1.msra.mxu0 0.0
        %2414 = vmatprep.subr.mxu0 0.0
        %2415 = vmatpush1.msra.mxu0 0.0
        %2416 = vmatprep.subr.mxu0 0.0
        %2417 = vmatpush1.msra.mxu0 0.0
        %2418 = vmatprep.subr.mxu0 0.0
        %2419 = vmatpush1.msra.mxu0 0.0
        %2420 = vmatprep.subr.mxu0 0.0
        %2421 = vmatpush1.msra.mxu0 0.0
        %2422 = vmatprep.subr.mxu0 0.0
        %2423 = vmatpush1.msra.mxu0 0.0
        %2424 = vmatprep.subr.mxu0 0.0
        %2425 = vmatpush1.msra.mxu0 0.0
        %2426 = vmatprep.mubr.f32.mxu0 0.0
        %2427 = vmatmul.mubr.f32.gmra.mrb[0].mxu0 %v2356
        %v2428 = vpop.f32.mrb[0].mxu0
        %v2429 = vadd.f32 0.0, %v2428
        %v2430 = vpop.f32.mrb[0].mxu0
        %2431 = vmatprep.mubr.f32.mxu0 0.0
        %2432 = vmatmul.mubr.f32.gmra.mrb[0].mxu0 %v2358
        %v2433 = vpop.f32.mrb[0].mxu0
        %v2434 = vadd.f32 0.0, %v2433
        %v2435 = vpop.f32.mrb[0].mxu0
        %2436 = vmatprep.mubr.f32.mxu0 0.0
        %2437 = vmatmul.mubr.f32.gmra.mrb[0].mxu0 %v2360
        %v2438 = vpop.f32.mrb[0].mxu0
        %v2439 = vadd.f32 0.0, %v2438
        %v2440 = vpop.f32.mrb[0].mxu0
        %2441 = vdwg.mxu0
        %v2442 = vmax.f32 %v2343, %v2429
        %v2443 = vmax.f32 %v2348, %v2434
        %v2444 = vmax.f32 %v2353, %v2439
        %v2445 = vld [vmem:[%s19] sm:$0x1]
        %v2446 = vld [vmem:[%s21] sm:$0x1]
        %v2447 = vld [vmem:[%s23] sm:$0xff]
        %v2448 = vld [vmem:[%s23 + $0x8] sm:$0xff]
        %v2449 = vld [vmem:[%s23 + $0x10] sm:$0xff]
        %v2450 = vld [vmem:[%s23 + $0x18] sm:$0xff]
        %v2451 = vld [vmem:[%s23 + $0x20] sm:$0xff]
        %v2452 = vld [vmem:[%s23 + $0x28] sm:$0xff]
        %v2453 = vld [vmem:[%s23 + $0x30] sm:$0xff]
        %v2454 = vld [vmem:[%s23 + $0x38] sm:$0xff]
        %v2455 = vld [vmem:[%s23 + $0x40] sm:$0xff]
        %v2456 = vld [vmem:[%s23 + $0x48] sm:$0xff]
        %v2457 = vld [vmem:[%s23 + $0x50] sm:$0xff]
        %v2458 = vld [vmem:[%s23 + $0x58] sm:$0xff]
        %v2459 = vld [vmem:[%s25] sm:$0x1]
        %v2461 = vlaneseq
        %v2462 = vshrl.u32 %v2461, 7
        %v2463 = vsub.s32 0, %v2462
        %v2464 = vrot.slane %v2445, %v2463
        %v2466 = vmul.f32 %v2442, %v2464
        %v2467 = vmul.f32 %v2443, %v2464
        %v2468 = vmul.f32 %v2444, %v2464
        %v2470 = vlaneseq
        %v2471 = vshrl.u32 %v2470, 7
        %v2472 = vsub.s32 0, %v2471
        %v2473 = vrot.slane %v2446, %v2472
        %v2475 = vadd.f32 %v2466, %v2473
        %v2476 = vadd.f32 %v2467, %v2473
        %v2477 = vadd.f32 %v2468, %v2473
        %v2481 = vrot.slane %v2475, 7
        %v2482 = vrot.slane %v2476, 7
        %v2483 = vsel %vm997, %v2481, %v2482
        %v2484 = vrot.slane %v2477, 7
        %v2485 = vsel %vm997, %v2482, %v2484
        %v2489 = vsel %vm997, 0.0, %v2481
        %v2490 = vsel %vm1278, %v2485, 0.0
        %v2492 = vrot.slane %v2489, 4
        %v2493 = vrot.slane %v2483, 4
        %v2494 = vsel %vm1217, %v2492, %v2493
        %2495 = vrot.lane.b32.xlu0 %v2494, 32
        %v2496 = vpop.permute.xlu0 %2495
        %2497 = vrot.lane.b32.xlu0 %v2493, 32
        %v2498 = vpop.permute.xlu0 %2497
        %2502 = vrot.lane.b32.xlu0 %v2483, 64
        %v2503 = vpop.permute.xlu0 %2502
        %2504 = vrot.lane.b32.xlu0 %v2490, 64
        %v2505 = vpop.permute.xlu0 %2504
        %v2508 = vsel %vm2128, %v2489, %v2496
        %v2509 = vsel %vm2128, %v2483, %v2498
        %v2510 = vsel %vm2134, %v2508, %v2503
        %v2511 = vsel %vm2134, %v2509, %v2505
        %v2513 = vlaneseq
        %v2514 = vshrl.u32 %v2513, 7
        %v2515 = vsub.s32 0, %v2514
        %v2516 = vrot.slane %v2459, %v2515
        %v2519 = vsel %vm2140, %v2510, 0
        %v2522 = vsel %vm2140, %v2511, 0
        %2524 = vmatprep.subr.mxu0 0.0
        %2525 = vmatpush1.msra.mxu0 %v2447
        %2526 = vmatprep.subr.mxu0 0.0
        %2527 = vmatpush1.msra.mxu0 %v2448
        %2528 = vmatprep.subr.mxu0 0.0
        %2529 = vmatpush1.msra.mxu0 %v2449
        %2530 = vmatprep.subr.mxu0 0.0
        %2531 = vmatpush1.msra.mxu0 %v2450
        %2532 = vmatprep.subr.mxu0 0.0
        %2533 = vmatpush1.msra.mxu0 %v2451
        %2534 = vmatprep.subr.mxu0 0.0
        %2535 = vmatpush1.msra.mxu0 %v2452
        %2536 = vmatprep.subr.mxu0 0.0
        %2537 = vmatpush1.msra.mxu0 %v2453
        %2538 = vmatprep.subr.mxu0 0.0
        %2539 = vmatpush1.msra.mxu0 %v2454
        %2540 = vmatprep.subr.mxu0 0.0
        %2541 = vmatpush1.msra.mxu0 %v2455
        %2542 = vmatprep.subr.mxu0 0.0
        %2543 = vmatpush1.msra.mxu0 %v2456
        %2544 = vmatprep.subr.mxu0 0.0
        %2545 = vmatpush1.msra.mxu0 %v2457
        %2546 = vmatprep.subr.mxu0 0.0
        %2547 = vmatpush1.msra.mxu0 %v2458
        %2548 = vmatprep.subr.mxu0 0.0
        %2549 = vmatpush1.msra.mxu0 0.0
        %2550 = vmatprep.subr.mxu0 0.0
        %2551 = vmatpush1.msra.mxu0 0.0
        %2552 = vmatprep.subr.mxu0 0.0
        %2553 = vmatpush1.msra.mxu0 0.0
        %2554 = vmatprep.subr.mxu0 0.0
        %2555 = vmatpush1.msra.mxu0 0.0
        %2556 = vmatprep.subr.mxu0 0.0
        %2557 = vmatpush1.msra.mxu0 0.0
        %2558 = vmatprep.subr.mxu0 0.0
        %2559 = vmatpush1.msra.mxu0 0.0
        %2560 = vmatprep.subr.mxu0 0.0
        %2561 = vmatpush1.msra.mxu0 0.0
        %2562 = vmatprep.subr.mxu0 0.0
        %2563 = vmatpush1.msra.mxu0 0.0
        %2564 = vmatprep.subr.mxu0 0.0
        %2565 = vmatpush1.msra.mxu0 0.0
        %2566 = vmatprep.subr.mxu0 0.0
        %2567 = vmatpush1.msra.mxu0 0.0
        %2568 = vmatprep.subr.mxu0 0.0
        %2569 = vmatpush1.msra.mxu0 0.0
        %2570 = vmatprep.subr.mxu0 0.0
        %2571 = vmatpush1.msra.mxu0 0.0
        %2572 = vmatprep.subr.mxu0 0.0
        %2573 = vmatpush1.msra.mxu0 0.0
        %2574 = vmatprep.subr.mxu0 0.0
        %2575 = vmatpush1.msra.mxu0 0.0
        %2576 = vmatprep.subr.mxu0 0.0
        %2577 = vmatpush1.msra.mxu0 0.0
        %2578 = vmatprep.subr.mxu0 0.0
        %2579 = vmatpush1.msra.mxu0 0.0
        %2580 = vmatprep.subr.mxu0 0.0
        %2581 = vmatpush1.msra.mxu0 0.0
        %2582 = vmatprep.subr.mxu0 0.0
        %2583 = vmatpush1.msra.mxu0 0.0
        %2584 = vmatprep.subr.mxu0 0.0
        %2585 = vmatpush1.msra.mxu0 0.0
        %2586 = vmatprep.subr.mxu0 0.0
        %2587 = vmatpush1.msra.mxu0 0.0
        %2588 = vmatprep.mubr.f32.mxu0 0.0
        %2589 = vmatmul.mubr.f32.gmra.mrb[0].mxu0 %v2519
        %v2590 = vpop.f32.mrb[0].mxu0
        %v2591 = vadd.f32 %v2516, %v2590
        %v2592 = vpop.f32.mrb[0].mxu0
        %2593 = vmatprep.mubr.f32.mxu0 0.0
        %2594 = vmatmul.mubr.f32.gmra.mrb[0].mxu0 %v2522
        %v2595 = vpop.f32.mrb[0].mxu0
        %v2596 = vadd.f32 %v2516, %v2595
        %v2597 = vpop.f32.mrb[0].mxu0
        %2598 = vdwg.mxu0
        %v2599 = vmax.f32 %v2591, 0.0
        %v2600 = vmax.f32 %v2596, 0.0
        %v2601 = vsel %vm1428, %v1690, 0
        %v2604 = vsel %vm1217, %v2600, 0
        %2606 = vmatprep.subr.mxu0 0.0
        %2607 = vmatpush1.msra.mxu0 %v2599
        %2608 = vmatprep.subr.mxu0 0.0
        %2609 = vmatpush1.msra.mxu0 %v2604
        %2610 = vmatprep.subr.mxu0 0.0
        %2611 = vmatpush1.msra.mxu0 0.0
        %2612 = vmatprep.subr.mxu0 0.0
        %2613 = vmatpush1.msra.mxu0 0.0
        %2614 = vmatprep.subr.mxu0 0.0
        %2615 = vmatpush1.msra.mxu0 0.0
        %2616 = vmatprep.subr.mxu0 0.0
        %2617 = vmatpush1.msra.mxu0 0.0
        %2618 = vmatprep.subr.mxu0 0.0
        %2619 = vmatpush1.msra.mxu0 0.0
        %2620 = vmatprep.subr.mxu0 0.0
        %2621 = vmatpush1.msra.mxu0 0.0
        %2622 = vmatprep.subr.mxu0 0.0
        %2623 = vmatpush1.msra.mxu0 0.0
        %2624 = vmatprep.subr.mxu0 0.0
        %2625 = vmatpush1.msra.mxu0 0.0
        %2626 = vmatprep.subr.mxu0 0.0
        %2627 = vmatpush1.msra.mxu0 0.0
        %2628 = vmatprep.subr.mxu0 0.0
        %2629 = vmatpush1.msra.mxu0 0.0
        %2630 = vmatprep.subr.mxu0 0.0
        %2631 = vmatpush1.msra.mxu0 0.0
        %2632 = vmatprep.subr.mxu0 0.0
        %2633 = vmatpush1.msra.mxu0 0.0
        %2634 = vmatprep.subr.mxu0 0.0
        %2635 = vmatpush1.msra.mxu0 0.0
        %2636 = vmatprep.subr.mxu0 0.0
        %2637 = vmatpush1.msra.mxu0 0.0
        %2638 = vmatprep.subr.mxu0 0.0
        %2639 = vmatpush1.msra.mxu0 0.0
        %2640 = vmatprep.subr.mxu0 0.0
        %2641 = vmatpush1.msra.mxu0 0.0
        %2642 = vmatprep.subr.mxu0 0.0
        %2643 = vmatpush1.msra.mxu0 0.0
        %2644 = vmatprep.subr.mxu0 0.0
        %2645 = vmatpush1.msra.mxu0 0.0
        %2646 = vmatprep.subr.mxu0 0.0
        %2647 = vmatpush1.msra.mxu0 0.0
        %2648 = vmatprep.subr.mxu0 0.0
        %2649 = vmatpush1.msra.mxu0 0.0
        %2650 = vmatprep.subr.mxu0 0.0
        %2651 = vmatpush1.msra.mxu0 0.0
        %2652 = vmatprep.subr.mxu0 0.0
        %2653 = vmatpush1.msra.mxu0 0.0
        %2654 = vmatprep.subr.mxu0 0.0
        %2655 = vmatpush1.msra.mxu0 0.0
        %2656 = vmatprep.subr.mxu0 0.0
        %2657 = vmatpush1.msra.mxu0 0.0
        %2658 = vmatprep.subr.mxu0 0.0
        %2659 = vmatpush1.msra.mxu0 0.0
        %2660 = vmatprep.subr.mxu0 0.0
        %2661 = vmatpush1.msra.mxu0 0.0
        %2662 = vmatprep.subr.mxu0 0.0
        %2663 = vmatpush1.msra.mxu0 0.0
        %2664 = vmatprep.subr.mxu0 0.0
        %2665 = vmatpush1.msra.mxu0 0.0
        %2666 = vmatprep.subr.mxu0 0.0
        %2667 = vmatpush1.msra.mxu0 0.0
        %2668 = vmatprep.subr.mxu0 0.0
        %2669 = vmatpush1.msra.mxu0 0.0
        %2670 = vmatprep.mubr.f32.mxu0 0.0
        %2671 = vmatmul.mubr.f32.gmra.mrb[0].mxu0 %v2601
        %v2672 = vpop.f32.mrb[0].mxu0
        %v2673 = vadd.f32 0.0, %v2672
        %v2674 = vpop.f32.mrb[0].mxu0
        %2675 = vdwg.mxu0
        %v2676 = vsel %vm1428, %v1714, 0
        %2678 = vmatprep.subr.mxu0 0.0
        %2679 = vmatpush1.msra.mxu0 %v2599
        %2680 = vmatprep.subr.mxu0 0.0
        %2681 = vmatpush1.msra.mxu0 %v2604
        %2682 = vmatprep.subr.mxu0 0.0
        %2683 = vmatpush1.msra.mxu0 0.0
        %2684 = vmatprep.subr.mxu0 0.0
        %2685 = vmatpush1.msra.mxu0 0.0
        %2686 = vmatprep.subr.mxu0 0.0
        %2687 = vmatpush1.msra.mxu0 0.0
        %2688 = vmatprep.subr.mxu0 0.0
        %2689 = vmatpush1.msra.mxu0 0.0
        %2690 = vmatprep.subr.mxu0 0.0
        %2691 = vmatpush1.msra.mxu0 0.0
        %2692 = vmatprep.subr.mxu0 0.0
        %2693 = vmatpush1.msra.mxu0 0.0
        %2694 = vmatprep.subr.mxu0 0.0
        %2695 = vmatpush1.msra.mxu0 0.0
        %2696 = vmatprep.subr.mxu0 0.0
        %2697 = vmatpush1.msra.mxu0 0.0
        %2698 = vmatprep.subr.mxu0 0.0
        %2699 = vmatpush1.msra.mxu0 0.0
        %2700 = vmatprep.subr.mxu0 0.0
        %2701 = vmatpush1.msra.mxu0 0.0
        %2702 = vmatprep.subr.mxu0 0.0
        %2703 = vmatpush1.msra.mxu0 0.0
        %2704 = vmatprep.subr.mxu0 0.0
        %2705 = vmatpush1.msra.mxu0 0.0
        %2706 = vmatprep.subr.mxu0 0.0
        %2707 = vmatpush1.msra.mxu0 0.0
        %2708 = vmatprep.subr.mxu0 0.0
        %2709 = vmatpush1.msra.mxu0 0.0
        %2710 = vmatprep.subr.mxu0 0.0
        %2711 = vmatpush1.msra.mxu0 0.0
        %2712 = vmatprep.subr.mxu0 0.0
        %2713 = vmatpush1.msra.mxu0 0.0
        %2714 = vmatprep.subr.mxu0 0.0
        %2715 = vmatpush1.msra.mxu0 0.0
        %2716 = vmatprep.subr.mxu0 0.0
        %2717 = vmatpush1.msra.mxu0 0.0
        %2718 = vmatprep.subr.mxu0 0.0
        %2719 = vmatpush1.msra.mxu0 0.0
        %2720 = vmatprep.subr.mxu0 0.0
        %2721 = vmatpush1.msra.mxu0 0.0
        %2722 = vmatprep.subr.mxu0 0.0
        %2723 = vmatpush1.msra.mxu0 0.0
        %2724 = vmatprep.subr.mxu0 0.0
        %2725 = vmatpush1.msra.mxu0 0.0
        %2726 = vmatprep.subr.mxu0 0.0
        %2727 = vmatpush1.msra.mxu0 0.0
        %2728 = vmatprep.subr.mxu0 0.0
        %2729 = vmatpush1.msra.mxu0 0.0
        %2730 = vmatprep.subr.mxu0 0.0
        %2731 = vmatpush1.msra.mxu0 0.0
        %2732 = vmatprep.subr.mxu0 0.0
        %2733 = vmatpush1.msra.mxu0 0.0
        %2734 = vmatprep.subr.mxu0 0.0
        %2735 = vmatpush1.msra.mxu0 0.0
        %2736 = vmatprep.subr.mxu0 0.0
        %2737 = vmatpush1.msra.mxu0 0.0
        %2738 = vmatprep.subr.mxu0 0.0
        %2739 = vmatpush1.msra.mxu0 0.0
        %2740 = vmatprep.subr.mxu0 0.0
        %2741 = vmatpush1.msra.mxu0 0.0
        %2742 = vmatprep.mubr.f32.mxu0 0.0
        %2743 = vmatmul.mubr.f32.gmra.mrb[0].mxu0 %v2676
        %v2744 = vpop.f32.mrb[0].mxu0
        %v2745 = vadd.f32 0.0, %v2744
        %v2746 = vpop.f32.mrb[0].mxu0
        %2747 = vdwg.mxu0
        %v2748 = vmax.f32 %v2673, %v2745
        %v2749 = vld [vmem:[%s27] sm:$0xff]
        %v2750 = vld [vmem:[%s27 + $0x8] sm:$0xff]
        %v2751 = vld [vmem:[%s27 + $0x10] sm:$0xff]
        %v2752 = vld [vmem:[%s27 + $0x18] sm:$0xff]
        %v2753 = vld [vmem:[%s29] sm:$0x1]
        %v2755 = vlaneseq
        %v2756 = vshrl.u32 %v2755, 7
        %v2757 = vsub.s32 0, %v2756
        %v2758 = vrot.slane %v2753, %v2757
        %v2761 = vsel %vm2128, %v2748, 0
        %2763 = vmatprep.subr.mxu0 0.0
        %2764 = vmatpush1.msra.mxu0 %v2749
        %2765 = vmatprep.subr.mxu0 0.0
        %2766 = vmatpush1.msra.mxu0 %v2750
        %2767 = vmatprep.subr.mxu0 0.0
        %2768 = vmatpush1.msra.mxu0 %v2751
        %2769 = vmatprep.subr.mxu0 0.0
        %2770 = vmatpush1.msra.mxu0 %v2752
        %2771 = vmatprep.subr.mxu0 0.0
        %2772 = vmatpush1.msra.mxu0 0.0
        %2773 = vmatprep.subr.mxu0 0.0
        %2774 = vmatpush1.msra.mxu0 0.0
        %2775 = vmatprep.subr.mxu0 0.0
        %2776 = vmatpush1.msra.mxu0 0.0
        %2777 = vmatprep.subr.mxu0 0.0
        %2778 = vmatpush1.msra.mxu0 0.0
        %2779 = vmatprep.subr.mxu0 0.0
        %2780 = vmatpush1.msra.mxu0 0.0
        %2781 = vmatprep.subr.mxu0 0.0
        %2782 = vmatpush1.msra.mxu0 0.0
        %2783 = vmatprep.subr.mxu0 0.0
        %2784 = vmatpush1.msra.mxu0 0.0
        %2785 = vmatprep.subr.mxu0 0.0
        %2786 = vmatpush1.msra.mxu0 0.0
        %2787 = vmatprep.subr.mxu0 0.0
        %2788 = vmatpush1.msra.mxu0 0.0
        %2789 = vmatprep.subr.mxu0 0.0
        %2790 = vmatpush1.msra.mxu0 0.0
        %2791 = vmatprep.subr.mxu0 0.0
        %2792 = vmatpush1.msra.mxu0 0.0
        %2793 = vmatprep.subr.mxu0 0.0
        %2794 = vmatpush1.msra.mxu0 0.0
        %2795 = vmatprep.subr.mxu0 0.0
        %2796 = vmatpush1.msra.mxu0 0.0
        %2797 = vmatprep.subr.mxu0 0.0
        %2798 = vmatpush1.msra.mxu0 0.0
        %2799 = vmatprep.subr.mxu0 0.0
        %2800 = vmatpush1.msra.mxu0 0.0
        %2801 = vmatprep.subr.mxu0 0.0
        %2802 = vmatpush1.msra.mxu0 0.0
        %2803 = vmatprep.subr.mxu0 0.0
        %2804 = vmatpush1.msra.mxu0 0.0
        %2805 = vmatprep.subr.mxu0 0.0
        %2806 = vmatpush1.msra.mxu0 0.0
        %2807 = vmatprep.subr.mxu0 0.0
        %2808 = vmatpush1.msra.mxu0 0.0
        %2809 = vmatprep.subr.mxu0 0.0
        %2810 = vmatpush1.msra.mxu0 0.0
        %2811 = vmatprep.subr.mxu0 0.0
        %2812 = vmatpush1.msra.mxu0 0.0
        %2813 = vmatprep.subr.mxu0 0.0
        %2814 = vmatpush1.msra.mxu0 0.0
        %2815 = vmatprep.subr.mxu0 0.0
        %2816 = vmatpush1.msra.mxu0 0.0
        %2817 = vmatprep.subr.mxu0 0.0
        %2818 = vmatpush1.msra.mxu0 0.0
        %2819 = vmatprep.subr.mxu0 0.0
        %2820 = vmatpush1.msra.mxu0 0.0
        %2821 = vmatprep.subr.mxu0 0.0
        %2822 = vmatpush1.msra.mxu0 0.0
        %2823 = vmatprep.subr.mxu0 0.0
        %2824 = vmatpush1.msra.mxu0 0.0
        %2825 = vmatprep.subr.mxu0 0.0
        %2826 = vmatpush1.msra.mxu0 0.0
        %2827 = vmatprep.mubr.f32.mxu0 0.0
        %2828 = vmatmul.mubr.f32.gmra.mrb[0].mxu0 %v2761
        %v2829 = vpop.f32.mrb[0].mxu0
        %v2830 = vadd.f32 %v2758, %v2829
        %v2831 = vpop.f32.mrb[0].mxu0
        %2832 = vdwg.mxu0
        %v2833 = vld [vmem:[%s31] sm:$0xff]
        %v2834 = vld [vmem:[%s31 + $0x8] sm:$0xff]
        %v2835 = vld [vmem:[%s31 + $0x10] sm:$0xff]
        %v2836 = vld [vmem:[%s31 + $0x18] sm:$0xff]
        %v2837 = vld [vmem:[%s33] sm:$0x1]
        %v2839 = vlaneseq
        %v2840 = vshrl.u32 %v2839, 7
        %v2841 = vsub.s32 0, %v2840
        %v2842 = vrot.slane %v2837, %v2841
        %2844 = vmatprep.subr.mxu0 0.0
        %2845 = vmatpush1.msra.mxu0 %v2833
        %2846 = vmatprep.subr.mxu0 0.0
        %2847 = vmatpush1.msra.mxu0 %v2834
        %2848 = vmatprep.subr.mxu0 0.0
        %2849 = vmatpush1.msra.mxu0 %v2835
        %2850 = vmatprep.subr.mxu0 0.0
        %2851 = vmatpush1.msra.mxu0 %v2836
        %2852 = vmatprep.subr.mxu0 0.0
        %2853 = vmatpush1.msra.mxu0 0.0
        %2854 = vmatprep.subr.mxu0 0.0
        %2855 = vmatpush1.msra.mxu0 0.0
        %2856 = vmatprep.subr.mxu0 0.0
        %2857 = vmatpush1.msra.mxu0 0.0
        %2858 = vmatprep.subr.mxu0 0.0
        %2859 = vmatpush1.msra.mxu0 0.0
        %2860 = vmatprep.subr.mxu0 0.0
        %2861 = vmatpush1.msra.mxu0 0.0
        %2862 = vmatprep.subr.mxu0 0.0
        %2863 = vmatpush1.msra.mxu0 0.0
        %2864 = vmatprep.subr.mxu0 0.0
        %2865 = vmatpush1.msra.mxu0 0.0
        %2866 = vmatprep.subr.mxu0 0.0
        %2867 = vmatpush1.msra.mxu0 0.0
        %2868 = vmatprep.subr.mxu0 0.0
        %2869 = vmatpush1.msra.mxu0 0.0
        %2870 = vmatprep.subr.mxu0 0.0
        %2871 = vmatpush1.msra.mxu0 0.0
        %2872 = vmatprep.subr.mxu0 0.0
        %2873 = vmatpush1.msra.mxu0 0.0
        %2874 = vmatprep.subr.mxu0 0.0
        %2875 = vmatpush1.msra.mxu0 0.0
        %2876 = vmatprep.subr.mxu0 0.0
        %2877 = vmatpush1.msra.mxu0 0.0
        %2878 = vmatprep.subr.mxu0 0.0
        %2879 = vmatpush1.msra.mxu0 0.0
        %2880 = vmatprep.subr.mxu0 0.0
        %2881 = vmatpush1.msra.mxu0 0.0
        %2882 = vmatprep.subr.mxu0 0.0
        %2883 = vmatpush1.msra.mxu0 0.0
        %2884 = vmatprep.subr.mxu0 0.0
        %2885 = vmatpush1.msra.mxu0 0.0
        %2886 = vmatprep.subr.mxu0 0.0
        %2887 = vmatpush1.msra.mxu0 0.0
        %2888 = vmatprep.subr.mxu0 0.0
        %2889 = vmatpush1.msra.mxu0 0.0
        %2890 = vmatprep.subr.mxu0 0.0
        %2891 = vmatpush1.msra.mxu0 0.0
        %2892 = vmatprep.subr.mxu0 0.0
        %2893 = vmatpush1.msra.mxu0 0.0
        %2894 = vmatprep.subr.mxu0 0.0
        %2895 = vmatpush1.msra.mxu0 0.0
        %2896 = vmatprep.subr.mxu0 0.0
        %2897 = vmatpush1.msra.mxu0 0.0
        %2898 = vmatprep.subr.mxu0 0.0
        %2899 = vmatpush1.msra.mxu0 0.0
        %2900 = vmatprep.subr.mxu0 0.0
        %2901 = vmatpush1.msra.mxu0 0.0
        %2902 = vmatprep.subr.mxu0 0.0
        %2903 = vmatpush1.msra.mxu0 0.0
        %2904 = vmatprep.subr.mxu0 0.0
        %2905 = vmatpush1.msra.mxu0 0.0
        %2906 = vmatprep.subr.mxu0 0.0
        %2907 = vmatpush1.msra.mxu0 0.0
        %2908 = vmatprep.mubr.f32.mxu0 0.0
        %2909 = vmatmul.mubr.f32.gmra.mrb[0].mxu0 %v2761
        %v2910 = vpop.f32.mrb[0].mxu0
        %v2911 = vadd.f32 %v2842, %v2910
        %v2912 = vpop.f32.mrb[0].mxu0
        %2913 = vdwg.mxu0
        %v2914 = vld [vmem:[%s35] sm:$0xff]
        %v2915 = vld [vmem:[%s35 + $0x8] sm:$0xff]
        %v2916 = vld [vmem:[%s35 + $0x10] sm:$0xff]
        %v2917 = vld [vmem:[%s35 + $0x18] sm:$0xff]
        %v2918 = vld [vmem:[%s37] sm:$0x1]
        %v2920 = vlaneseq
        %v2921 = vshrl.u32 %v2920, 7
        %v2922 = vsub.s32 0, %v2921
        %v2923 = vrot.slane %v2918, %v2922
        %2925 = vmatprep.subr.mxu0 0.0
        %2926 = vmatpush1.msra.mxu0 %v2914
        %2927 = vmatprep.subr.mxu0 0.0
        %2928 = vmatpush1.msra.mxu0 %v2915
        %2929 = vmatprep.subr.mxu0 0.0
        %2930 = vmatpush1.msra.mxu0 %v2916
        %2931 = vmatprep.subr.mxu0 0.0
        %2932 = vmatpush1.msra.mxu0 %v2917
        %2933 = vmatprep.subr.mxu0 0.0
        %2934 = vmatpush1.msra.mxu0 0.0
        %2935 = vmatprep.subr.mxu0 0.0
        %2936 = vmatpush1.msra.mxu0 0.0
        %2937 = vmatprep.subr.mxu0 0.0
        %2938 = vmatpush1.msra.mxu0 0.0
        %2939 = vmatprep.subr.mxu0 0.0
        %2940 = vmatpush1.msra.mxu0 0.0
        %2941 = vmatprep.subr.mxu0 0.0
        %2942 = vmatpush1.msra.mxu0 0.0
        %2943 = vmatprep.subr.mxu0 0.0
        %2944 = vmatpush1.msra.mxu0 0.0
        %2945 = vmatprep.subr.mxu0 0.0
        %2946 = vmatpush1.msra.mxu0 0.0
        %2947 = vmatprep.subr.mxu0 0.0
        %2948 = vmatpush1.msra.mxu0 0.0
        %2949 = vmatprep.subr.mxu0 0.0
        %2950 = vmatpush1.msra.mxu0 0.0
        %2951 = vmatprep.subr.mxu0 0.0
        %2952 = vmatpush1.msra.mxu0 0.0
        %2953 = vmatprep.subr.mxu0 0.0
        %2954 = vmatpush1.msra.mxu0 0.0
        %2955 = vmatprep.subr.mxu0 0.0
        %2956 = vmatpush1.msra.mxu0 0.0
        %2957 = vmatprep.subr.mxu0 0.0
        %2958 = vmatpush1.msra.mxu0 0.0
        %2959 = vmatprep.subr.mxu0 0.0
        %2960 = vmatpush1.msra.mxu0 0.0
        %2961 = vmatprep.subr.mxu0 0.0
        %2962 = vmatpush1.msra.mxu0 0.0
        %2963 = vmatprep.subr.mxu0 0.0
        %2964 = vmatpush1.msra.mxu0 0.0
        %2965 = vmatprep.subr.mxu0 0.0
        %2966 = vmatpush1.msra.mxu0 0.0
        %2967 = vmatprep.subr.mxu0 0.0
        %2968 = vmatpush1.msra.mxu0 0.0
        %2969 = vmatprep.subr.mxu0 0.0
        %2970 = vmatpush1.msra.mxu0 0.0
        %2971 = vmatprep.subr.mxu0 0.0
        %2972 = vmatpush1.msra.mxu0 0.0
        %2973 = vmatprep.subr.mxu0 0.0
        %2974 = vmatpush1.msra.mxu0 0.0
        %2975 = vmatprep.subr.mxu0 0.0
        %2976 = vmatpush1.msra.mxu0 0.0
        %2977 = vmatprep.subr.mxu0 0.0
        %2978 = vmatpush1.msra.mxu0 0.0
        %2979 = vmatprep.subr.mxu0 0.0
        %2980 = vmatpush1.msra.mxu0 0.0
        %2981 = vmatprep.subr.mxu0 0.0
        %2982 = vmatpush1.msra.mxu0 0.0
        %2983 = vmatprep.subr.mxu0 0.0
        %2984 = vmatpush1.msra.mxu0 0.0
        %2985 = vmatprep.subr.mxu0 0.0
        %2986 = vmatpush1.msra.mxu0 0.0
        %2987 = vmatprep.subr.mxu0 0.0
        %2988 = vmatpush1.msra.mxu0 0.0
        %2989 = vmatprep.mubr.f32.mxu0 0.0
        %2990 = vmatmul.mubr.f32.gmra.mrb[0].mxu0 %v2761
        %v2991 = vpop.f32.mrb[0].mxu0
        %v2992 = vadd.f32 %v2923, %v2991
        %v2993 = vpop.f32.mrb[0].mxu0
        %2994 = vdwg.mxu0
        %v2996 = vsel %vm1415, %v2830, 0
        %v2999 = vsel %vm1415, %v2911, 0
        %3001 = vmatprep.subr.mxu0 0.0
        %3002 = vmatpush1.xpose.msra.mxu0 %v2999
        %3003 = vmatprep.subr.mxu0 0.0
        %3004 = vmatpush1.xpose.msra.mxu0 0.0
        %3005 = vmatprep.subr.mxu0 0.0
        %3006 = vmatpush1.xpose.msra.mxu0 0.0
        %3007 = vmatprep.subr.mxu0 0.0
        %3008 = vmatpush1.xpose.msra.mxu0 0.0
        %3009 = vmatprep.subr.mxu0 0.0
        %3010 = vmatpush1.xpose.msra.mxu0 0.0
        %3011 = vmatprep.subr.mxu0 0.0
        %3012 = vmatpush1.xpose.msra.mxu0 0.0
        %3013 = vmatprep.subr.mxu0 0.0
        %3014 = vmatpush1.xpose.msra.mxu0 0.0
        %3015 = vmatprep.subr.mxu0 0.0
        %3016 = vmatpush1.xpose.msra.mxu0 0.0
        %3017 = vmatprep.subr.mxu0 0.0
        %3018 = vmatpush1.xpose.msra.mxu0 0.0
        %3019 = vmatprep.subr.mxu0 0.0
        %3020 = vmatpush1.xpose.msra.mxu0 0.0
        %3021 = vmatprep.subr.mxu0 0.0
        %3022 = vmatpush1.xpose.msra.mxu0 0.0
        %3023 = vmatprep.subr.mxu0 0.0
        %3024 = vmatpush1.xpose.msra.mxu0 0.0
        %3025 = vmatprep.subr.mxu0 0.0
        %3026 = vmatpush1.xpose.msra.mxu0 0.0
        %3027 = vmatprep.subr.mxu0 0.0
        %3028 = vmatpush1.xpose.msra.mxu0 0.0
        %3029 = vmatprep.subr.mxu0 0.0
        %3030 = vmatpush1.xpose.msra.mxu0 0.0
        %3031 = vmatprep.subr.mxu0 0.0
        %3032 = vmatpush1.xpose.msra.mxu0 0.0
        %3033 = vmatprep.subr.mxu0 0.0
        %3034 = vmatpush1.xpose.msra.mxu0 0.0
        %3035 = vmatprep.subr.mxu0 0.0
        %3036 = vmatpush1.xpose.msra.mxu0 0.0
        %3037 = vmatprep.subr.mxu0 0.0
        %3038 = vmatpush1.xpose.msra.mxu0 0.0
        %3039 = vmatprep.subr.mxu0 0.0
        %3040 = vmatpush1.xpose.msra.mxu0 0.0
        %3041 = vmatprep.subr.mxu0 0.0
        %3042 = vmatpush1.xpose.msra.mxu0 0.0
        %3043 = vmatprep.subr.mxu0 0.0
        %3044 = vmatpush1.xpose.msra.mxu0 0.0
        %3045 = vmatprep.subr.mxu0 0.0
        %3046 = vmatpush1.xpose.msra.mxu0 0.0
        %3047 = vmatprep.subr.mxu0 0.0
        %3048 = vmatpush1.xpose.msra.mxu0 0.0
        %3049 = vmatprep.subr.mxu0 0.0
        %3050 = vmatpush1.xpose.msra.mxu0 0.0
        %3051 = vmatprep.subr.mxu0 0.0
        %3052 = vmatpush1.xpose.msra.mxu0 0.0
        %3053 = vmatprep.subr.mxu0 0.0
        %3054 = vmatpush1.xpose.msra.mxu0 0.0
        %3055 = vmatprep.subr.mxu0 0.0
        %3056 = vmatpush1.xpose.msra.mxu0 0.0
        %3057 = vmatprep.subr.mxu0 0.0
        %3058 = vmatpush1.xpose.msra.mxu0 0.0
        %3059 = vmatprep.subr.mxu0 0.0
        %3060 = vmatpush1.xpose.msra.mxu0 0.0
        %3061 = vmatprep.subr.mxu0 0.0
        %3062 = vmatpush1.xpose.msra.mxu0 0.0
        %3063 = vmatprep.subr.mxu0 0.0
        %3064 = vmatpush1.xpose.msra.mxu0 0.0
        %3065 = vmatprep.mubr.f32.mxu0 0.0
        %3066 = vmatmul.mubr.f32.gmra.mrb[0].mxu0 %v2996
        %v3067 = vpop.f32.mrb[0].mxu0
        %v3068 = vadd.f32 0.0, %v3067
        %v3069 = vpop.f32.mrb[0].mxu0
        %3070 = vdwg.mxu0
        %v3071 = vmul.f32 %v3068, 0.35355338
        %vm3072 = vcmask 46080
        %v3073 = vsel %vm3072, %v3071, -inf
        %3074 = vmax.xlane.f32.xlu0 %v3073
        %v3075 = vpop.xlane.xlu0 %3074
        %v3076 = vsub.f32 %v3071, %v3075
        %v3077 = vmul.f32 %v3076, 1.442695
        %v3078 = vpow.pop %v3077
        %v3079 = vsel %vm3072, %v3078, 0.0
        %3080 = vadd.xlane.f32.xlu0 %v3079
        %v3081 = vpop.xlane.xlu0 %3080
        %v3082 = vrcp.pop %v3081
        %v3083 = vmul.f32 %v3078, %v3082
        %vm3084 = vcmask 48128
        %v3086 = vsel %vm3084, %v3083, 0
        %v3089 = vsel %vm1097, %v2992, 0
        %3091 = vmatprep.subr.mxu0 0.0
        %3092 = vmatpush1.msra.mxu0 %v3089
        %3093 = vmatprep.subr.mxu0 0.0
        %3094 = vmatpush1.msra.mxu0 0.0
        %3095 = vmatprep.subr.mxu0 0.0
        %3096 = vmatpush1.msra.mxu0 0.0
        %3097 = vmatprep.subr.mxu0 0.0
        %3098 = vmatpush1.msra.mxu0 0.0
        %3099 = vmatprep.subr.mxu0 0.0
        %3100 = vmatpush1.msra.mxu0 0.0
        %3101 = vmatprep.subr.mxu0 0.0
        %3102 = vmatpush1.msra.mxu0 0.0
        %3103 = vmatprep.subr.mxu0 0.0
        %3104 = vmatpush1.msra.mxu0 0.0
        %3105 = vmatprep.subr.mxu0 0.0
        %3106 = vmatpush1.msra.mxu0 0.0
        %3107 = vmatprep.subr.mxu0 0.0
        %3108 = vmatpush1.msra.mxu0 0.0
        %3109 = vmatprep.subr.mxu0 0.0
        %3110 = vmatpush1.msra.mxu0 0.0
        %3111 = vmatprep.subr.mxu0 0.0
        %3112 = vmatpush1.msra.mxu0 0.0
        %3113 = vmatprep.subr.mxu0 0.0
        %3114 = vmatpush1.msra.mxu0 0.0
        %3115 = vmatprep.subr.mxu0 0.0
        %3116 = vmatpush1.msra.mxu0 0.0
        %3117 = vmatprep.subr.mxu0 0.0
        %3118 = vmatpush1.msra.mxu0 0.0
        %3119 = vmatprep.subr.mxu0 0.0
        %3120 = vmatpush1.msra.mxu0 0.0
        %3121 = vmatprep.subr.mxu0 0.0
        %3122 = vmatpush1.msra.mxu0 0.0
        %3123 = vmatprep.subr.mxu0 0.0
        %3124 = vmatpush1.msra.mxu0 0.0
        %3125 = vmatprep.subr.mxu0 0.0
        %3126 = vmatpush1.msra.mxu0 0.0
        %3127 = vmatprep.subr.mxu0 0.0
        %3128 = vmatpush1.msra.mxu0 0.0
        %3129 = vmatprep.subr.mxu0 0.0
        %3130 = vmatpush1.msra.mxu0 0.0
        %3131 = vmatprep.subr.mxu0 0.0
        %3132 = vmatpush1.msra.mxu0 0.0
        %3133 = vmatprep.subr.mxu0 0.0
        %3134 = vmatpush1.msra.mxu0 0.0
        %3135 = vmatprep.subr.mxu0 0.0
        %3136 = vmatpush1.msra.mxu0 0.0
        %3137 = vmatprep.subr.mxu0 0.0
        %3138 = vmatpush1.msra.mxu0 0.0
        %3139 = vmatprep.subr.mxu0 0.0
        %3140 = vmatpush1.msra.mxu0 0.0
        %3141 = vmatprep.subr.mxu0 0.0
        %3142 = vmatpush1.msra.mxu0 0.0
        %3143 = vmatprep.subr.mxu0 0.0
        %3144 = vmatpush1.msra.mxu0 0.0
        %3145 = vmatprep.subr.mxu0 0.0
        %3146 = vmatpush1.msra.mxu0 0.0
        %3147 = vmatprep.subr.mxu0 0.0
        %3148 = vmatpush1.msra.mxu0 0.0
        %3149 = vmatprep.subr.mxu0 0.0
        %3150 = vmatpush1.msra.mxu0 0.0
        %3151 = vmatprep.subr.mxu0 0.0
        %3152 = vmatpush1.msra.mxu0 0.0
        %3153 = vmatprep.subr.mxu0 0.0
        %3154 = vmatpush1.msra.mxu0 0.0
        %3155 = vmatprep.mubr.f32.mxu0 0.0
        %3156 = vmatmul.mubr.f32.gmra.mrb[0].mxu0 %v3086
        %v3157 = vpop.f32.mrb[0].mxu0
        %v3158 = vadd.f32 0.0, %v3157
        %v3159 = vpop.f32.mrb[0].mxu0
        %3160 = vdwg.mxu0
        %3161 = vrot.lane.b32.xlu0 %v2830, 120
        %v3162 = vpop.permute.xlu0 %3161
        %3163 = vrot.lane.b32.xlu0 %v2911, 120
        %v3164 = vpop.permute.xlu0 %3163
        %v3165 = vsel %vm1415, %v3162, 0
        %v3167 = vsel %vm1415, %v3164, 0
        %3169 = vmatprep.subr.mxu0 0.0
        %3170 = vmatpush1.xpose.msra.mxu0 %v3167
        %3171 = vmatprep.subr.mxu0 0.0
        %3172 = vmatpush1.xpose.msra.mxu0 0.0
        %3173 = vmatprep.subr.mxu0 0.0
        %3174 = vmatpush1.xpose.msra.mxu0 0.0
        %3175 = vmatprep.subr.mxu0 0.0
        %3176 = vmatpush1.xpose.msra.mxu0 0.0
        %3177 = vmatprep.subr.mxu0 0.0
        %3178 = vmatpush1.xpose.msra.mxu0 0.0
        %3179 = vmatprep.subr.mxu0 0.0
        %3180 = vmatpush1.xpose.msra.mxu0 0.0
        %3181 = vmatprep.subr.mxu0 0.0
        %3182 = vmatpush1.xpose.msra.mxu0 0.0
        %3183 = vmatprep.subr.mxu0 0.0
        %3184 = vmatpush1.xpose.msra.mxu0 0.0
        %3185 = vmatprep.subr.mxu0 0.0
        %3186 = vmatpush1.xpose.msra.mxu0 0.0
        %3187 = vmatprep.subr.mxu0 0.0
        %3188 = vmatpush1.xpose.msra.mxu0 0.0
        %3189 = vmatprep.subr.mxu0 0.0
        %3190 = vmatpush1.xpose.msra.mxu0 0.0
        %3191 = vmatprep.subr.mxu0 0.0
        %3192 = vmatpush1.xpose.msra.mxu0 0.0
        %3193 = vmatprep.subr.mxu0 0.0
        %3194 = vmatpush1.xpose.msra.mxu0 0.0
        %3195 = vmatprep.subr.mxu0 0.0
        %3196 = vmatpush1.xpose.msra.mxu0 0.0
        %3197 = vmatprep.subr.mxu0 0.0
        %3198 = vmatpush1.xpose.msra.mxu0 0.0
        %3199 = vmatprep.subr.mxu0 0.0
        %3200 = vmatpush1.xpose.msra.mxu0 0.0
        %3201 = vmatprep.subr.mxu0 0.0
        %3202 = vmatpush1.xpose.msra.mxu0 0.0
        %3203 = vmatprep.subr.mxu0 0.0
        %3204 = vmatpush1.xpose.msra.mxu0 0.0
        %3205 = vmatprep.subr.mxu0 0.0
        %3206 = vmatpush1.xpose.msra.mxu0 0.0
        %3207 = vmatprep.subr.mxu0 0.0
        %3208 = vmatpush1.xpose.msra.mxu0 0.0
        %3209 = vmatprep.subr.mxu0 0.0
        %3210 = vmatpush1.xpose.msra.mxu0 0.0
        %3211 = vmatprep.subr.mxu0 0.0
        %3212 = vmatpush1.xpose.msra.mxu0 0.0
        %3213 = vmatprep.subr.mxu0 0.0
        %3214 = vmatpush1.xpose.msra.mxu0 0.0
        %3215 = vmatprep.subr.mxu0 0.0
        %3216 = vmatpush1.xpose.msra.mxu0 0.0
        %3217 = vmatprep.subr.mxu0 0.0
        %3218 = vmatpush1.xpose.msra.mxu0 0.0
        %3219 = vmatprep.subr.mxu0 0.0
        %3220 = vmatpush1.xpose.msra.mxu0 0.0
        %3221 = vmatprep.subr.mxu0 0.0
        %3222 = vmatpush1.xpose.msra.mxu0 0.0
        %3223 = vmatprep.subr.mxu0 0.0
        %3224 = vmatpush1.xpose.msra.mxu0 0.0
        %3225 = vmatprep.subr.mxu0 0.0
        %3226 = vmatpush1.xpose.msra.mxu0 0.0
        %3227 = vmatprep.subr.mxu0 0.0
        %3228 = vmatpush1.xpose.msra.mxu0 0.0
        %3229 = vmatprep.subr.mxu0 0.0
        %3230 = vmatpush1.xpose.msra.mxu0 0.0
        %3231 = vmatprep.subr.mxu0 0.0
        %3232 = vmatpush1.xpose.msra.mxu0 0.0
        %3233 = vmatprep.mubr.f32.mxu0 0.0
        %3234 = vmatmul.mubr.f32.gmra.mrb[0].mxu0 %v3165
        %v3235 = vpop.f32.mrb[0].mxu0
        %v3236 = vadd.f32 0.0, %v3235
        %v3237 = vpop.f32.mrb[0].mxu0
        %3238 = vdwg.mxu0
        %v3239 = vmul.f32 %v3236, 0.35355338
        %v3240 = vsel %vm3072, %v3239, -inf
        %3241 = vmax.xlane.f32.xlu0 %v3240
        %v3242 = vpop.xlane.xlu0 %3241
        %v3243 = vsub.f32 %v3239, %v3242
        %v3244 = vmul.f32 %v3243, 1.442695
        %v3245 = vpow.pop %v3244
        %v3246 = vsel %vm3072, %v3245, 0.0
        %3247 = vadd.xlane.f32.xlu0 %v3246
        %v3248 = vpop.xlane.xlu0 %3247
        %v3249 = vrcp.pop %v3248
        %v3250 = vmul.f32 %v3245, %v3249
        %3251 = vrot.lane.b32.xlu0 %v2992, 120
        %v3252 = vpop.permute.xlu0 %3251
        %v3254 = vsel %vm3084, %v3250, 0
        %v3256 = vsel %vm1097, %v3252, 0
        %3258 = vmatprep.subr.mxu0 0.0
        %3259 = vmatpush1.msra.mxu0 %v3256
        %3260 = vmatprep.subr.mxu0 0.0
        %3261 = vmatpush1.msra.mxu0 0.0
        %3262 = vmatprep.subr.mxu0 0.0
        %3263 = vmatpush1.msra.mxu0 0.0
        %3264 = vmatprep.subr.mxu0 0.0
        %3265 = vmatpush1.msra.mxu0 0.0
        %3266 = vmatprep.subr.mxu0 0.0
        %3267 = vmatpush1.msra.mxu0 0.0
        %3268 = vmatprep.subr.mxu0 0.0
        %3269 = vmatpush1.msra.mxu0 0.0
        %3270 = vmatprep.subr.mxu0 0.0
        %3271 = vmatpush1.msra.mxu0 0.0
        %3272 = vmatprep.subr.mxu0 0.0
        %3273 = vmatpush1.msra.mxu0 0.0
        %3274 = vmatprep.subr.mxu0 0.0
        %3275 = vmatpush1.msra.mxu0 0.0
        %3276 = vmatprep.subr.mxu0 0.0
        %3277 = vmatpush1.msra.mxu0 0.0
        %3278 = vmatprep.subr.mxu0 0.0
        %3279 = vmatpush1.msra.mxu0 0.0
        %3280 = vmatprep.subr.mxu0 0.0
        %3281 = vmatpush1.msra.mxu0 0.0
        %3282 = vmatprep.subr.mxu0 0.0
        %3283 = vmatpush1.msra.mxu0 0.0
        %3284 = vmatprep.subr.mxu0 0.0
        %3285 = vmatpush1.msra.mxu0 0.0
        %3286 = vmatprep.subr.mxu0 0.0
        %3287 = vmatpush1.msra.mxu0 0.0
        %3288 = vmatprep.subr.mxu0 0.0
        %3289 = vmatpush1.msra.mxu0 0.0
        %3290 = vmatprep.subr.mxu0 0.0
        %3291 = vmatpush1.msra.mxu0 0.0
        %3292 = vmatprep.subr.mxu0 0.0
        %3293 = vmatpush1.msra.mxu0 0.0
        %3294 = vmatprep.subr.mxu0 0.0
        %3295 = vmatpush1.msra.mxu0 0.0
        %3296 = vmatprep.subr.mxu0 0.0
        %3297 = vmatpush1.msra.mxu0 0.0
        %3298 = vmatprep.subr.mxu0 0.0
        %3299 = vmatpush1.msra.mxu0 0.0
        %3300 = vmatprep.subr.mxu0 0.0
        %3301 = vmatpush1.msra.mxu0 0.0
        %3302 = vmatprep.subr.mxu0 0.0
        %3303 = vmatpush1.msra.mxu0 0.0
        %3304 = vmatprep.subr.mxu0 0.0
        %3305 = vmatpush1.msra.mxu0 0.0
        %3306 = vmatprep.subr.mxu0 0.0
        %3307 = vmatpush1.msra.mxu0 0.0
        %3308 = vmatprep.subr.mxu0 0.0
        %3309 = vmatpush1.msra.mxu0 0.0
        %3310 = vmatprep.subr.mxu0 0.0
        %3311 = vmatpush1.msra.mxu0 0.0
        %3312 = vmatprep.subr.mxu0 0.0
        %3313 = vmatpush1.msra.mxu0 0.0
        %3314 = vmatprep.subr.mxu0 0.0
        %3315 = vmatpush1.msra.mxu0 0.0
        %3316 = vmatprep.subr.mxu0 0.0
        %3317 = vmatpush1.msra.mxu0 0.0
        %3318 = vmatprep.subr.mxu0 0.0
        %3319 = vmatpush1.msra.mxu0 0.0
        %3320 = vmatprep.subr.mxu0 0.0
        %3321 = vmatpush1.msra.mxu0 0.0
        %3322 = vmatprep.mubr.f32.mxu0 0.0
        %3323 = vmatmul.mubr.f32.gmra.mrb[0].mxu0 %v3254
        %v3324 = vpop.f32.mrb[0].mxu0
        %v3325 = vadd.f32 0.0, %v3324
        %v3326 = vpop.f32.mrb[0].mxu0
        %3327 = vdwg.mxu0
        %3328 = vrot.lane.b32.xlu0 %v2830, 112
        %v3329 = vpop.permute.xlu0 %3328
        %3330 = vrot.lane.b32.xlu0 %v2911, 112
        %v3331 = vpop.permute.xlu0 %3330
        %v3332 = vsel %vm1415, %v3329, 0
        %v3334 = vsel %vm1415, %v3331, 0
        %3336 = vmatprep.subr.mxu0 0.0
        %3337 = vmatpush1.xpose.msra.mxu0 %v3334
        %3338 = vmatprep.subr.mxu0 0.0
        %3339 = vmatpush1.xpose.msra.mxu0 0.0
        %3340 = vmatprep.subr.mxu0 0.0
        %3341 = vmatpush1.xpose.msra.mxu0 0.0
        %3342 = vmatprep.subr.mxu0 0.0
        %3343 = vmatpush1.xpose.msra.mxu0 0.0
        %3344 = vmatprep.subr.mxu0 0.0
        %3345 = vmatpush1.xpose.msra.mxu0 0.0
        %3346 = vmatprep.subr.mxu0 0.0
        %3347 = vmatpush1.xpose.msra.mxu0 0.0
        %3348 = vmatprep.subr.mxu0 0.0
        %3349 = vmatpush1.xpose.msra.mxu0 0.0
        %3350 = vmatprep.subr.mxu0 0.0
        %3351 = vmatpush1.xpose.msra.mxu0 0.0
        %3352 = vmatprep.subr.mxu0 0.0
        %3353 = vmatpush1.xpose.msra.mxu0 0.0
        %3354 = vmatprep.subr.mxu0 0.0
        %3355 = vmatpush1.xpose.msra.mxu0 0.0
        %3356 = vmatprep.subr.mxu0 0.0
        %3357 = vmatpush1.xpose.msra.mxu0 0.0
        %3358 = vmatprep.subr.mxu0 0.0
        %3359 = vmatpush1.xpose.msra.mxu0 0.0
        %3360 = vmatprep.subr.mxu0 0.0
        %3361 = vmatpush1.xpose.msra.mxu0 0.0
        %3362 = vmatprep.subr.mxu0 0.0
        %3363 = vmatpush1.xpose.msra.mxu0 0.0
        %3364 = vmatprep.subr.mxu0 0.0
        %3365 = vmatpush1.xpose.msra.mxu0 0.0
        %3366 = vmatprep.subr.mxu0 0.0
        %3367 = vmatpush1.xpose.msra.mxu0 0.0
        %3368 = vmatprep.subr.mxu0 0.0
        %3369 = vmatpush1.xpose.msra.mxu0 0.0
        %3370 = vmatprep.subr.mxu0 0.0
        %3371 = vmatpush1.xpose.msra.mxu0 0.0
        %3372 = vmatprep.subr.mxu0 0.0
        %3373 = vmatpush1.xpose.msra.mxu0 0.0
        %3374 = vmatprep.subr.mxu0 0.0
        %3375 = vmatpush1.xpose.msra.mxu0 0.0
        %3376 = vmatprep.subr.mxu0 0.0
        %3377 = vmatpush1.xpose.msra.mxu0 0.0
        %3378 = vmatprep.subr.mxu0 0.0
        %3379 = vmatpush1.xpose.msra.mxu0 0.0
        %3380 = vmatprep.subr.mxu0 0.0
        %3381 = vmatpush1.xpose.msra.mxu0 0.0
        %3382 = vmatprep.subr.mxu0 0.0
        %3383 = vmatpush1.xpose.msra.mxu0 0.0
        %3384 = vmatprep.subr.mxu0 0.0
        %3385 = vmatpush1.xpose.msra.mxu0 0.0
        %3386 = vmatprep.subr.mxu0 0.0
        %3387 = vmatpush1.xpose.msra.mxu0 0.0
        %3388 = vmatprep.subr.mxu0 0.0
        %3389 = vmatpush1.xpose.msra.mxu0 0.0
        %3390 = vmatprep.subr.mxu0 0.0
        %3391 = vmatpush1.xpose.msra.mxu0 0.0
        %3392 = vmatprep.subr.mxu0 0.0
        %3393 = vmatpush1.xpose.msra.mxu0 0.0
        %3394 = vmatprep.subr.mxu0 0.0
        %3395 = vmatpush1.xpose.msra.mxu0 0.0
        %3396 = vmatprep.subr.mxu0 0.0
        %3397 = vmatpush1.xpose.msra.mxu0 0.0
        %3398 = vmatprep.subr.mxu0 0.0
        %3399 = vmatpush1.xpose.msra.mxu0 0.0
        %3400 = vmatprep.mubr.f32.mxu0 0.0
        %3401 = vmatmul.mubr.f32.gmra.mrb[0].mxu0 %v3332
        %v3402 = vpop.f32.mrb[0].mxu0
        %v3403 = vadd.f32 0.0, %v3402
        %v3404 = vpop.f32.mrb[0].mxu0
        %3405 = vdwg.mxu0
        %v3406 = vmul.f32 %v3403, 0.35355338
        %v3407 = vsel %vm3072, %v3406, -inf
        %3408 = vmax.xlane.f32.xlu0 %v3407
        %v3409 = vpop.xlane.xlu0 %3408
        %v3410 = vsub.f32 %v3406, %v3409
        %v3411 = vmul.f32 %v3410, 1.442695
        %v3412 = vpow.pop %v3411
        %v3413 = vsel %vm3072, %v3412, 0.0
        %3414 = vadd.xlane.f32.xlu0 %v3413
        %v3415 = vpop.xlane.xlu0 %3414
        %v3416 = vrcp.pop %v3415
        %v3417 = vmul.f32 %v3412, %v3416
        %3418 = vrot.lane.b32.xlu0 %v2992, 112
        %v3419 = vpop.permute.xlu0 %3418
        %v3421 = vsel %vm3084, %v3417, 0
        %v3423 = vsel %vm1097, %v3419, 0
        %3425 = vmatprep.subr.mxu0 0.0
        %3426 = vmatpush1.msra.mxu0 %v3423
        %3427 = vmatprep.subr.mxu0 0.0
        %3428 = vmatpush1.msra.mxu0 0.0
        %3429 = vmatprep.subr.mxu0 0.0
        %3430 = vmatpush1.msra.mxu0 0.0
        %3431 = vmatprep.subr.mxu0 0.0
        %3432 = vmatpush1.msra.mxu0 0.0
        %3433 = vmatprep.subr.mxu0 0.0
        %3434 = vmatpush1.msra.mxu0 0.0
        %3435 = vmatprep.subr.mxu0 0.0
        %3436 = vmatpush1.msra.mxu0 0.0
        %3437 = vmatprep.subr.mxu0 0.0
        %3438 = vmatpush1.msra.mxu0 0.0
        %3439 = vmatprep.subr.mxu0 0.0
        %3440 = vmatpush1.msra.mxu0 0.0
        %3441 = vmatprep.subr.mxu0 0.0
        %3442 = vmatpush1.msra.mxu0 0.0
        %3443 = vmatprep.subr.mxu0 0.0
        %3444 = vmatpush1.msra.mxu0 0.0
        %3445 = vmatprep.subr.mxu0 0.0
        %3446 = vmatpush1.msra.mxu0 0.0
        %3447 = vmatprep.subr.mxu0 0.0
        %3448 = vmatpush1.msra.mxu0 0.0
        %3449 = vmatprep.subr.mxu0 0.0
        %3450 = vmatpush1.msra.mxu0 0.0
        %3451 = vmatprep.subr.mxu0 0.0
        %3452 = vmatpush1.msra.mxu0 0.0
        %3453 = vmatprep.subr.mxu0 0.0
        %3454 = vmatpush1.msra.mxu0 0.0
        %3455 = vmatprep.subr.mxu0 0.0
        %3456 = vmatpush1.msra.mxu0 0.0
        %3457 = vmatprep.subr.mxu0 0.0
        %3458 = vmatpush1.msra.mxu0 0.0
        %3459 = vmatprep.subr.mxu0 0.0
        %3460 = vmatpush1.msra.mxu0 0.0
        %3461 = vmatprep.subr.mxu0 0.0
        %3462 = vmatpush1.msra.mxu0 0.0
        %3463 = vmatprep.subr.mxu0 0.0
        %3464 = vmatpush1.msra.mxu0 0.0
        %3465 = vmatprep.subr.mxu0 0.0
        %3466 = vmatpush1.msra.mxu0 0.0
        %3467 = vmatprep.subr.mxu0 0.0
        %3468 = vmatpush1.msra.mxu0 0.0
        %3469 = vmatprep.subr.mxu0 0.0
        %3470 = vmatpush1.msra.mxu0 0.0
        %3471 = vmatprep.subr.mxu0 0.0
        %3472 = vmatpush1.msra.mxu0 0.0
        %3473 = vmatprep.subr.mxu0 0.0
        %3474 = vmatpush1.msra.mxu0 0.0
        %3475 = vmatprep.subr.mxu0 0.0
        %3476 = vmatpush1.msra.mxu0 0.0
        %3477 = vmatprep.subr.mxu0 0.0
        %3478 = vmatpush1.msra.mxu0 0.0
        %3479 = vmatprep.subr.mxu0 0.0
        %3480 = vmatpush1.msra.mxu0 0.0
        %3481 = vmatprep.subr.mxu0 0.0
        %3482 = vmatpush1.msra.mxu0 0.0
        %3483 = vmatprep.subr.mxu0 0.0
        %3484 = vmatpush1.msra.mxu0 0.0
        %3485 = vmatprep.subr.mxu0 0.0
        %3486 = vmatpush1.msra.mxu0 0.0
        %3487 = vmatprep.subr.mxu0 0.0
        %3488 = vmatpush1.msra.mxu0 0.0
        %3489 = vmatprep.mubr.f32.mxu0 0.0
        %3490 = vmatmul.mubr.f32.gmra.mrb[0].mxu0 %v3421
        %v3491 = vpop.f32.mrb[0].mxu0
        %v3492 = vadd.f32 0.0, %v3491
        %v3493 = vpop.f32.mrb[0].mxu0
        %3494 = vdwg.mxu0
        %3495 = vrot.lane.b32.xlu0 %v2830, 104
        %v3496 = vpop.permute.xlu0 %3495
        %3497 = vrot.lane.b32.xlu0 %v2911, 104
        %v3498 = vpop.permute.xlu0 %3497
        %v3499 = vsel %vm1415, %v3496, 0
        %v3501 = vsel %vm1415, %v3498, 0
        %3503 = vmatprep.subr.mxu0 0.0
        %3504 = vmatpush1.xpose.msra.mxu0 %v3501
        %3505 = vmatprep.subr.mxu0 0.0
        %3506 = vmatpush1.xpose.msra.mxu0 0.0
        %3507 = vmatprep.subr.mxu0 0.0
        %3508 = vmatpush1.xpose.msra.mxu0 0.0
        %3509 = vmatprep.subr.mxu0 0.0
        %3510 = vmatpush1.xpose.msra.mxu0 0.0
        %3511 = vmatprep.subr.mxu0 0.0
        %3512 = vmatpush1.xpose.msra.mxu0 0.0
        %3513 = vmatprep.subr.mxu0 0.0
        %3514 = vmatpush1.xpose.msra.mxu0 0.0
        %3515 = vmatprep.subr.mxu0 0.0
        %3516 = vmatpush1.xpose.msra.mxu0 0.0
        %3517 = vmatprep.subr.mxu0 0.0
        %3518 = vmatpush1.xpose.msra.mxu0 0.0
        %3519 = vmatprep.subr.mxu0 0.0
        %3520 = vmatpush1.xpose.msra.mxu0 0.0
        %3521 = vmatprep.subr.mxu0 0.0
        %3522 = vmatpush1.xpose.msra.mxu0 0.0
        %3523 = vmatprep.subr.mxu0 0.0
        %3524 = vmatpush1.xpose.msra.mxu0 0.0
        %3525 = vmatprep.subr.mxu0 0.0
        %3526 = vmatpush1.xpose.msra.mxu0 0.0
        %3527 = vmatprep.subr.mxu0 0.0
        %3528 = vmatpush1.xpose.msra.mxu0 0.0
        %3529 = vmatprep.subr.mxu0 0.0
        %3530 = vmatpush1.xpose.msra.mxu0 0.0
        %3531 = vmatprep.subr.mxu0 0.0
        %3532 = vmatpush1.xpose.msra.mxu0 0.0
        %3533 = vmatprep.subr.mxu0 0.0
        %3534 = vmatpush1.xpose.msra.mxu0 0.0
        %3535 = vmatprep.subr.mxu0 0.0
        %3536 = vmatpush1.xpose.msra.mxu0 0.0
        %3537 = vmatprep.subr.mxu0 0.0
        %3538 = vmatpush1.xpose.msra.mxu0 0.0
        %3539 = vmatprep.subr.mxu0 0.0
        %3540 = vmatpush1.xpose.msra.mxu0 0.0
        %3541 = vmatprep.subr.mxu0 0.0
        %3542 = vmatpush1.xpose.msra.mxu0 0.0
        %3543 = vmatprep.subr.mxu0 0.0
        %3544 = vmatpush1.xpose.msra.mxu0 0.0
        %3545 = vmatprep.subr.mxu0 0.0
        %3546 = vmatpush1.xpose.msra.mxu0 0.0
        %3547 = vmatprep.subr.mxu0 0.0
        %3548 = vmatpush1.xpose.msra.mxu0 0.0
        %3549 = vmatprep.subr.mxu0 0.0
        %3550 = vmatpush1.xpose.msra.mxu0 0.0
        %3551 = vmatprep.subr.mxu0 0.0
        %3552 = vmatpush1.xpose.msra.mxu0 0.0
        %3553 = vmatprep.subr.mxu0 0.0
        %3554 = vmatpush1.xpose.msra.mxu0 0.0
        %3555 = vmatprep.subr.mxu0 0.0
        %3556 = vmatpush1.xpose.msra.mxu0 0.0
        %3557 = vmatprep.subr.mxu0 0.0
        %3558 = vmatpush1.xpose.msra.mxu0 0.0
        %3559 = vmatprep.subr.mxu0 0.0
        %3560 = vmatpush1.xpose.msra.mxu0 0.0
        %3561 = vmatprep.subr.mxu0 0.0
        %3562 = vmatpush1.xpose.msra.mxu0 0.0
        %3563 = vmatprep.subr.mxu0 0.0
        %3564 = vmatpush1.xpose.msra.mxu0 0.0
        %3565 = vmatprep.subr.mxu0 0.0
        %3566 = vmatpush1.xpose.msra.mxu0 0.0
        %3567 = vmatprep.mubr.f32.mxu0 0.0
        %3568 = vmatmul.mubr.f32.gmra.mrb[0].mxu0 %v3499
        %v3569 = vpop.f32.mrb[0].mxu0
        %v3570 = vadd.f32 0.0, %v3569
        %v3571 = vpop.f32.mrb[0].mxu0
        %3572 = vdwg.mxu0
        %v3573 = vmul.f32 %v3570, 0.35355338
        %v3574 = vsel %vm3072, %v3573, -inf
        %3575 = vmax.xlane.f32.xlu0 %v3574
        %v3576 = vpop.xlane.xlu0 %3575
        %v3577 = vsub.f32 %v3573, %v3576
        %v3578 = vmul.f32 %v3577, 1.442695
        %v3579 = vpow.pop %v3578
        %v3580 = vsel %vm3072, %v3579, 0.0
        %3581 = vadd.xlane.f32.xlu0 %v3580
        %v3582 = vpop.xlane.xlu0 %3581
        %v3583 = vrcp.pop %v3582
        %v3584 = vmul.f32 %v3579, %v3583
        %3585 = vrot.lane.b32.xlu0 %v2992, 104
        %v3586 = vpop.permute.xlu0 %3585
        %v3588 = vsel %vm3084, %v3584, 0
        %v3590 = vsel %vm1097, %v3586, 0
        %3592 = vmatprep.subr.mxu0 0.0
        %3593 = vmatpush1.msra.mxu0 %v3590
        %3594 = vmatprep.subr.mxu0 0.0
        %3595 = vmatpush1.msra.mxu0 0.0
        %3596 = vmatprep.subr.mxu0 0.0
        %3597 = vmatpush1.msra.mxu0 0.0
        %3598 = vmatprep.subr.mxu0 0.0
        %3599 = vmatpush1.msra.mxu0 0.0
        %3600 = vmatprep.subr.mxu0 0.0
        %3601 = vmatpush1.msra.mxu0 0.0
        %3602 = vmatprep.subr.mxu0 0.0
        %3603 = vmatpush1.msra.mxu0 0.0
        %3604 = vmatprep.subr.mxu0 0.0
        %3605 = vmatpush1.msra.mxu0 0.0
        %3606 = vmatprep.subr.mxu0 0.0
        %3607 = vmatpush1.msra.mxu0 0.0
        %3608 = vmatprep.subr.mxu0 0.0
        %3609 = vmatpush1.msra.mxu0 0.0
        %3610 = vmatprep.subr.mxu0 0.0
        %3611 = vmatpush1.msra.mxu0 0.0
        %3612 = vmatprep.subr.mxu0 0.0
        %3613 = vmatpush1.msra.mxu0 0.0
        %3614 = vmatprep.subr.mxu0 0.0
        %3615 = vmatpush1.msra.mxu0 0.0
        %3616 = vmatprep.subr.mxu0 0.0
        %3617 = vmatpush1.msra.mxu0 0.0
        %3618 = vmatprep.subr.mxu0 0.0
        %3619 = vmatpush1.msra.mxu0 0.0
        %3620 = vmatprep.subr.mxu0 0.0
        %3621 = vmatpush1.msra.mxu0 0.0
        %3622 = vmatprep.subr.mxu0 0.0
        %3623 = vmatpush1.msra.mxu0 0.0
        %3624 = vmatprep.subr.mxu0 0.0
        %3625 = vmatpush1.msra.mxu0 0.0
        %3626 = vmatprep.subr.mxu0 0.0
        %3627 = vmatpush1.msra.mxu0 0.0
        %3628 = vmatprep.subr.mxu0 0.0
        %3629 = vmatpush1.msra.mxu0 0.0
        %3630 = vmatprep.subr.mxu0 0.0
        %3631 = vmatpush1.msra.mxu0 0.0
        %3632 = vmatprep.subr.mxu0 0.0
        %3633 = vmatpush1.msra.mxu0 0.0
        %3634 = vmatprep.subr.mxu0 0.0
        %3635 = vmatpush1.msra.mxu0 0.0
        %3636 = vmatprep.subr.mxu0 0.0
        %3637 = vmatpush1.msra.mxu0 0.0
        %3638 = vmatprep.subr.mxu0 0.0
        %3639 = vmatpush1.msra.mxu0 0.0
        %3640 = vmatprep.subr.mxu0 0.0
        %3641 = vmatpush1.msra.mxu0 0.0
        %3642 = vmatprep.subr.mxu0 0.0
        %3643 = vmatpush1.msra.mxu0 0.0
        %3644 = vmatprep.subr.mxu0 0.0
        %3645 = vmatpush1.msra.mxu0 0.0
        %3646 = vmatprep.subr.mxu0 0.0
        %3647 = vmatpush1.msra.mxu0 0.0
        %3648 = vmatprep.subr.mxu0 0.0
        %3649 = vmatpush1.msra.mxu0 0.0
        %3650 = vmatprep.subr.mxu0 0.0
        %3651 = vmatpush1.msra.mxu0 0.0
        %3652 = vmatprep.subr.mxu0 0.0
        %3653 = vmatpush1.msra.mxu0 0.0
        %3654 = vmatprep.subr.mxu0 0.0
        %3655 = vmatpush1.msra.mxu0 0.0
        %3656 = vmatprep.mubr.f32.mxu0 0.0
        %3657 = vmatmul.mubr.f32.gmra.mrb[0].mxu0 %v3588
        %v3658 = vpop.f32.mrb[0].mxu0
        %v3659 = vadd.f32 0.0, %v3658
        %v3660 = vpop.f32.mrb[0].mxu0
        %3661 = vdwg.mxu0
        %3663 = vrot.lane.b32.xlu0 %v3325, 8
        %v3664 = vpop.permute.xlu0 %3663
        %3667 = vrot.lane.b32.xlu0 %v3492, 16
        %v3668 = vpop.permute.xlu0 %3667
        %3671 = vrot.lane.b32.xlu0 %v3659, 24
        %v3672 = vpop.permute.xlu0 %3671
        %v3674 = vsel %vm1415, %v3158, %v3664
        %v3675 = vsel %vm1441, %v3674, %v3668
        %v3676 = vsel %vm1467, %v3675, %v3672
        %v3677 = vld [vmem:[%s39] sm:$0xff]
        %v3678 = vld [vmem:[%s39 + $0x8] sm:$0xff]
        %v3679 = vld [vmem:[%s39 + $0x10] sm:$0xff]
        %v3680 = vld [vmem:[%s39 + $0x18] sm:$0xff]
        %v3681 = vld [vmem:[%s41] sm:$0x1]
        %v3683 = vlaneseq
        %v3684 = vshrl.u32 %v3683, 7
        %v3685 = vsub.s32 0, %v3684
        %v3686 = vrot.slane %v3681, %v3685
        %v3689 = vsel %vm2128, %v3676, 0
        %3691 = vmatprep.subr.mxu0 0.0
        %3692 = vmatpush1.msra.mxu0 %v3677
        %3693 = vmatprep.subr.mxu0 0.0
        %3694 = vmatpush1.msra.mxu0 %v3678
        %3695 = vmatprep.subr.mxu0 0.0
        %3696 = vmatpush1.msra.mxu0 %v3679
        %3697 = vmatprep.subr.mxu0 0.0
        %3698 = vmatpush1.msra.mxu0 %v3680
        %3699 = vmatprep.subr.mxu0 0.0
        %3700 = vmatpush1.msra.mxu0 0.0
        %3701 = vmatprep.subr.mxu0 0.0
        %3702 = vmatpush1.msra.mxu0 0.0
        %3703 = vmatprep.subr.mxu0 0.0
        %3704 = vmatpush1.msra.mxu0 0.0
        %3705 = vmatprep.subr.mxu0 0.0
        %3706 = vmatpush1.msra.mxu0 0.0
        %3707 = vmatprep.subr.mxu0 0.0
        %3708 = vmatpush1.msra.mxu0 0.0
        %3709 = vmatprep.subr.mxu0 0.0
        %3710 = vmatpush1.msra.mxu0 0.0
        %3711 = vmatprep.subr.mxu0 0.0
        %3712 = vmatpush1.msra.mxu0 0.0
        %3713 = vmatprep.subr.mxu0 0.0
        %3714 = vmatpush1.msra.mxu0 0.0
        %3715 = vmatprep.subr.mxu0 0.0
        %3716 = vmatpush1.msra.mxu0 0.0
        %3717 = vmatprep.subr.mxu0 0.0
        %3718 = vmatpush1.msra.mxu0 0.0
        %3719 = vmatprep.subr.mxu0 0.0
        %3720 = vmatpush1.msra.mxu0 0.0
        %3721 = vmatprep.subr.mxu0 0.0
        %3722 = vmatpush1.msra.mxu0 0.0
        %3723 = vmatprep.subr.mxu0 0.0
        %3724 = vmatpush1.msra.mxu0 0.0
        %3725 = vmatprep.subr.mxu0 0.0
        %3726 = vmatpush1.msra.mxu0 0.0
        %3727 = vmatprep.subr.mxu0 0.0
        %3728 = vmatpush1.msra.mxu0 0.0
        %3729 = vmatprep.subr.mxu0 0.0
        %3730 = vmatpush1.msra.mxu0 0.0
        %3731 = vmatprep.subr.mxu0 0.0
        %3732 = vmatpush1.msra.mxu0 0.0
        %3733 = vmatprep.subr.mxu0 0.0
        %3734 = vmatpush1.msra.mxu0 0.0
        %3735 = vmatprep.subr.mxu0 0.0
        %3736 = vmatpush1.msra.mxu0 0.0
        %3737 = vmatprep.subr.mxu0 0.0
        %3738 = vmatpush1.msra.mxu0 0.0
        %3739 = vmatprep.subr.mxu0 0.0
        %3740 = vmatpush1.msra.mxu0 0.0
        %3741 = vmatprep.subr.mxu0 0.0
        %3742 = vmatpush1.msra.mxu0 0.0
        %3743 = vmatprep.subr.mxu0 0.0
        %3744 = vmatpush1.msra.mxu0 0.0
        %3745 = vmatprep.subr.mxu0 0.0
        %3746 = vmatpush1.msra.mxu0 0.0
        %3747 = vmatprep.subr.mxu0 0.0
        %3748 = vmatpush1.msra.mxu0 0.0
        %3749 = vmatprep.subr.mxu0 0.0
        %3750 = vmatpush1.msra.mxu0 0.0
        %3751 = vmatprep.subr.mxu0 0.0
        %3752 = vmatpush1.msra.mxu0 0.0
        %3753 = vmatprep.subr.mxu0 0.0
        %3754 = vmatpush1.msra.mxu0 0.0
        %3755 = vmatprep.mubr.f32.mxu0 0.0
        %3756 = vmatmul.mubr.f32.gmra.mrb[0].mxu0 %v3689
        %v3757 = vpop.f32.mrb[0].mxu0
        %v3758 = vadd.f32 %v3686, %v3757
        %v3759 = vpop.f32.mrb[0].mxu0
        %3760 = vdwg.mxu0
        %v3761 = vld [vmem:[%s43] sm:$0xff]
        %v3762 = vld [vmem:[%s43 + $0x8] sm:$0xff]
        %v3763 = vld [vmem:[%s43 + $0x10] sm:$0xff]
        %v3764 = vld [vmem:[%s43 + $0x18] sm:$0xff]
        %v3765 = vld [vmem:[%s45] sm:$0x1]
        %v3767 = vlaneseq
        %v3768 = vshrl.u32 %v3767, 7
        %v3769 = vsub.s32 0, %v3768
        %v3770 = vrot.slane %v3765, %v3769
        %v3773 = vsel %vm2128, %v3758, 0
        %3775 = vmatprep.subr.mxu0 0.0
        %3776 = vmatpush1.msra.mxu0 %v3761
        %3777 = vmatprep.subr.mxu0 0.0
        %3778 = vmatpush1.msra.mxu0 %v3762
        %3779 = vmatprep.subr.mxu0 0.0
        %3780 = vmatpush1.msra.mxu0 %v3763
        %3781 = vmatprep.subr.mxu0 0.0
        %3782 = vmatpush1.msra.mxu0 %v3764
        %3783 = vmatprep.subr.mxu0 0.0
        %3784 = vmatpush1.msra.mxu0 0.0
        %3785 = vmatprep.subr.mxu0 0.0
        %3786 = vmatpush1.msra.mxu0 0.0
        %3787 = vmatprep.subr.mxu0 0.0
        %3788 = vmatpush1.msra.mxu0 0.0
        %3789 = vmatprep.subr.mxu0 0.0
        %3790 = vmatpush1.msra.mxu0 0.0
        %3791 = vmatprep.subr.mxu0 0.0
        %3792 = vmatpush1.msra.mxu0 0.0
        %3793 = vmatprep.subr.mxu0 0.0
        %3794 = vmatpush1.msra.mxu0 0.0
        %3795 = vmatprep.subr.mxu0 0.0
        %3796 = vmatpush1.msra.mxu0 0.0
        %3797 = vmatprep.subr.mxu0 0.0
        %3798 = vmatpush1.msra.mxu0 0.0
        %3799 = vmatprep.subr.mxu0 0.0
        %3800 = vmatpush1.msra.mxu0 0.0
        %3801 = vmatprep.subr.mxu0 0.0
        %3802 = vmatpush1.msra.mxu0 0.0
        %3803 = vmatprep.subr.mxu0 0.0
        %3804 = vmatpush1.msra.mxu0 0.0
        %3805 = vmatprep.subr.mxu0 0.0
        %3806 = vmatpush1.msra.mxu0 0.0
        %3807 = vmatprep.subr.mxu0 0.0
        %3808 = vmatpush1.msra.mxu0 0.0
        %3809 = vmatprep.subr.mxu0 0.0
        %3810 = vmatpush1.msra.mxu0 0.0
        %3811 = vmatprep.subr.mxu0 0.0
        %3812 = vmatpush1.msra.mxu0 0.0
        %3813 = vmatprep.subr.mxu0 0.0
        %3814 = vmatpush1.msra.mxu0 0.0
        %3815 = vmatprep.subr.mxu0 0.0
        %3816 = vmatpush1.msra.mxu0 0.0
        %3817 = vmatprep.subr.mxu0 0.0
        %3818 = vmatpush1.msra.mxu0 0.0
        %3819 = vmatprep.subr.mxu0 0.0
        %3820 = vmatpush1.msra.mxu0 0.0
        %3821 = vmatprep.subr.mxu0 0.0
        %3822 = vmatpush1.msra.mxu0 0.0
        %3823 = vmatprep.subr.mxu0 0.0
        %3824 = vmatpush1.msra.mxu0 0.0
        %3825 = vmatprep.subr.mxu0 0.0
        %3826 = vmatpush1.msra.mxu0 0.0
        %3827 = vmatprep.subr.mxu0 0.0
        %3828 = vmatpush1.msra.mxu0 0.0
        %3829 = vmatprep.subr.mxu0 0.0
        %3830 = vmatpush1.msra.mxu0 0.0
        %3831 = vmatprep.subr.mxu0 0.0
        %3832 = vmatpush1.msra.mxu0 0.0
        %3833 = vmatprep.subr.mxu0 0.0
        %3834 = vmatpush1.msra.mxu0 0.0
        %3835 = vmatprep.subr.mxu0 0.0
        %3836 = vmatpush1.msra.mxu0 0.0
        %3837 = vmatprep.subr.mxu0 0.0
        %3838 = vmatpush1.msra.mxu0 0.0
        %3839 = vmatprep.mubr.f32.mxu0 0.0
        %3840 = vmatmul.mubr.f32.gmra.mrb[0].mxu0 %v3773
        %v3841 = vpop.f32.mrb[0].mxu0
        %v3842 = vadd.f32 %v3770, %v3841
        %v3843 = vpop.f32.mrb[0].mxu0
        %3844 = vdwg.mxu0
        %v3845 = vld [vmem:[%s47] sm:$0xff]
        %v3846 = vld [vmem:[%s47 + $0x8] sm:$0xff]
        %v3847 = vld [vmem:[%s47 + $0x10] sm:$0xff]
        %v3848 = vld [vmem:[%s47 + $0x18] sm:$0xff]
        %v3849 = vld [vmem:[%s49] sm:$0x1]
        %v3851 = vsel %vm2128, 0.0, 0
        %3853 = vmatprep.subr.mxu0 0.0
        %3854 = vmatpush1.msra.mxu0 %v3845
        %3855 = vmatprep.subr.mxu0 0.0
        %3856 = vmatpush1.msra.mxu0 %v3846
        %3857 = vmatprep.subr.mxu0 0.0
        %3858 = vmatpush1.msra.mxu0 %v3847
        %3859 = vmatprep.subr.mxu0 0.0
        %3860 = vmatpush1.msra.mxu0 %v3848
        %3861 = vmatprep.subr.mxu0 0.0
        %3862 = vmatpush1.msra.mxu0 0.0
        %3863 = vmatprep.subr.mxu0 0.0
        %3864 = vmatpush1.msra.mxu0 0.0
        %3865 = vmatprep.subr.mxu0 0.0
        %3866 = vmatpush1.msra.mxu0 0.0
        %3867 = vmatprep.subr.mxu0 0.0
        %3868 = vmatpush1.msra.mxu0 0.0
        %3869 = vmatprep.subr.mxu0 0.0
        %3870 = vmatpush1.msra.mxu0 0.0
        %3871 = vmatprep.subr.mxu0 0.0
        %3872 = vmatpush1.msra.mxu0 0.0
        %3873 = vmatprep.subr.mxu0 0.0
        %3874 = vmatpush1.msra.mxu0 0.0
        %3875 = vmatprep.subr.mxu0 0.0
        %3876 = vmatpush1.msra.mxu0 0.0
        %3877 = vmatprep.subr.mxu0 0.0
        %3878 = vmatpush1.msra.mxu0 0.0
        %3879 = vmatprep.subr.mxu0 0.0
        %3880 = vmatpush1.msra.mxu0 0.0
        %3881 = vmatprep.subr.mxu0 0.0
        %3882 = vmatpush1.msra.mxu0 0.0
        %3883 = vmatprep.subr.mxu0 0.0
        %3884 = vmatpush1.msra.mxu0 0.0
        %3885 = vmatprep.subr.mxu0 0.0
        %3886 = vmatpush1.msra.mxu0 0.0
        %3887 = vmatprep.subr.mxu0 0.0
        %3888 = vmatpush1.msra.mxu0 0.0
        %3889 = vmatprep.subr.mxu0 0.0
        %3890 = vmatpush1.msra.mxu0 0.0
        %3891 = vmatprep.subr.mxu0 0.0
        %3892 = vmatpush1.msra.mxu0 0.0
        %3893 = vmatprep.subr.mxu0 0.0
        %3894 = vmatpush1.msra.mxu0 0.0
        %3895 = vmatprep.subr.mxu0 0.0
        %3896 = vmatpush1.msra.mxu0 0.0
        %3897 = vmatprep.subr.mxu0 0.0
        %3898 = vmatpush1.msra.mxu0 0.0
        %3899 = vmatprep.subr.mxu0 0.0
        %3900 = vmatpush1.msra.mxu0 0.0
        %3901 = vmatprep.subr.mxu0 0.0
        %3902 = vmatpush1.msra.mxu0 0.0
        %3903 = vmatprep.subr.mxu0 0.0
        %3904 = vmatpush1.msra.mxu0 0.0
        %3905 = vmatprep.subr.mxu0 0.0
        %3906 = vmatpush1.msra.mxu0 0.0
        %3907 = vmatprep.subr.mxu0 0.0
        %3908 = vmatpush1.msra.mxu0 0.0
        %3909 = vmatprep.subr.mxu0 0.0
        %3910 = vmatpush1.msra.mxu0 0.0
        %3911 = vmatprep.subr.mxu0 0.0
        %3912 = vmatpush1.msra.mxu0 0.0
        %3913 = vmatprep.subr.mxu0 0.0
        %3914 = vmatpush1.msra.mxu0 0.0
        %3915 = vmatprep.subr.mxu0 0.0
        %3916 = vmatpush1.msra.mxu0 0.0
        %3917 = vmatprep.mubr.f32.mxu0 0.0
        %3918 = vmatmul.mubr.f32.gmra.mrb[0].mxu0 %v3851
        %v3919 = vpop.f32.mrb[0].mxu0
        %v3920 = vadd.f32 %v3849, %v3919
        %v3921 = vpop.f32.mrb[0].mxu0
        %3922 = vdwg.mxu0
        %v3923 = vadd.f32 %v3842, %v3920
        %v3924 = vxor.u32 %v3923, 2147483648
        %v3925 = vmul.f32 %v3924, 1.442695
        %v3926 = vpow.pop %v3925
        %v3927 = vadd.f32 %v3926, 1.0
        %v3928 = vrcp.pop %v3927
        %v3929 = vmul.f32 1.0, %v3928
        %3931 = vrot.lane.b32.xlu0 %v3920, 64
        %v3932 = vpop.permute.xlu0 %3931
        %v3934 = vmul.f32 %v3929, %v3932
        %3936 = vrot.lane.b32.xlu0 %v3934, 64
        %v3937 = vpop.permute.xlu0 %3936
        %v3939 = vadd.f32 %v3842, %v3937
        %v3940 = vtanh.pop %v3939
        %v3941 = vsub.f32 1.0, %v3929
        %3943 = vrot.lane.b32.xlu0 %v3940, 96
        %v3944 = vpop.permute.xlu0 %3943
        %v3946 = vmul.f32 %v3941, %v3944
        %v3947 = vmul.f32 %v3929, 0.0
        %v3948 = vadd.f32 %v3946, %v3947
        %3950 = vrot.lane.b32.xlu0 %v3948, 96
        %v3951 = vpop.permute.xlu0 %3950
        %v3952 = vsel %vm2128, %v3951, 0
        %3954 = vmatprep.subr.mxu0 0.0
        %3955 = vmatpush1.msra.mxu0 %v3845
        %3956 = vmatprep.subr.mxu0 0.0
        %3957 = vmatpush1.msra.mxu0 %v3846
        %3958 = vmatprep.subr.mxu0 0.0
        %3959 = vmatpush1.msra.mxu0 %v3847
        %3960 = vmatprep.subr.mxu0 0.0
        %3961 = vmatpush1.msra.mxu0 %v3848
        %3962 = vmatprep.subr.mxu0 0.0
        %3963 = vmatpush1.msra.mxu0 0.0
        %3964 = vmatprep.subr.mxu0 0.0
        %3965 = vmatpush1.msra.mxu0 0.0
        %3966 = vmatprep.subr.mxu0 0.0
        %3967 = vmatpush1.msra.mxu0 0.0
        %3968 = vmatprep.subr.mxu0 0.0
        %3969 = vmatpush1.msra.mxu0 0.0
        %3970 = vmatprep.subr.mxu0 0.0
        %3971 = vmatpush1.msra.mxu0 0.0
        %3972 = vmatprep.subr.mxu0 0.0
        %3973 = vmatpush1.msra.mxu0 0.0
        %3974 = vmatprep.subr.mxu0 0.0
        %3975 = vmatpush1.msra.mxu0 0.0
        %3976 = vmatprep.subr.mxu0 0.0
        %3977 = vmatpush1.msra.mxu0 0.0
        %3978 = vmatprep.subr.mxu0 0.0
        %3979 = vmatpush1.msra.mxu0 0.0
        %3980 = vmatprep.subr.mxu0 0.0
        %3981 = vmatpush1.msra.mxu0 0.0
        %3982 = vmatprep.subr.mxu0 0.0
        %3983 = vmatpush1.msra.mxu0 0.0
        %3984 = vmatprep.subr.mxu0 0.0
        %3985 = vmatpush1.msra.mxu0 0.0
        %3986 = vmatprep.subr.mxu0 0.0
        %3987 = vmatpush1.msra.mxu0 0.0
        %3988 = vmatprep.subr.mxu0 0.0
        %3989 = vmatpush1.msra.mxu0 0.0
        %3990 = vmatprep.subr.mxu0 0.0
        %3991 = vmatpush1.msra.mxu0 0.0
        %3992 = vmatprep.subr.mxu0 0.0
        %3993 = vmatpush1.msra.mxu0 0.0
        %3994 = vmatprep.subr.mxu0 0.0
        %3995 = vmatpush1.msra.mxu0 0.0
        %3996 = vmatprep.subr.mxu0 0.0
        %3997 = vmatpush1.msra.mxu0 0.0
        %3998 = vmatprep.subr.mxu0 0.0
        %3999 = vmatpush1.msra.mxu0 0.0
        %4000 = vmatprep.subr.mxu0 0.0
        %4001 = vmatpush1.msra.mxu0 0.0
        %4002 = vmatprep.subr.mxu0 0.0
        %4003 = vmatpush1.msra.mxu0 0.0
        %4004 = vmatprep.subr.mxu0 0.0
        %4005 = vmatpush1.msra.mxu0 0.0
        %4006 = vmatprep.subr.mxu0 0.0
        %4007 = vmatpush1.msra.mxu0 0.0
        %4008 = vmatprep.subr.mxu0 0.0
        %4009 = vmatpush1.msra.mxu0 0.0
        %4010 = vmatprep.subr.mxu0 0.0
        %4011 = vmatpush1.msra.mxu0 0.0
        %4012 = vmatprep.subr.mxu0 0.0
        %4013 = vmatpush1.msra.mxu0 0.0
        %4014 = vmatprep.subr.mxu0 0.0
        %4015 = vmatpush1.msra.mxu0 0.0
        %4016 = vmatprep.subr.mxu0 0.0
        %4017 = vmatpush1.msra.mxu0 0.0
        %4018 = vmatprep.mubr.f32.mxu0 0.0
        %4019 = vmatmul.mubr.f32.gmra.mrb[0].mxu0 %v3952
        %v4020 = vpop.f32.mrb[0].mxu0
        %v4021 = vadd.f32 %v3849, %v4020
        %v4022 = vpop.f32.mrb[0].mxu0
        %4023 = vdwg.mxu0
        %v4025 = vrot.slane %v4021, 7
        %v4027 = vadd.f32 %v3842, %v4025
        %v4028 = vxor.u32 %v4027, 2147483648
        %v4029 = vmul.f32 %v4028, 1.442695
        %v4030 = vpow.pop %v4029
        %v4031 = vadd.f32 %v4030, 1.0
        %v4032 = vrcp.pop %v4031
        %v4033 = vmul.f32 1.0, %v4032
        %4034 = vrot.lane.b32.xlu0 %v4025, 64
        %v4035 = vpop.permute.xlu0 %4034
        %v4037 = vmul.f32 %v4033, %v4035
        %4039 = vrot.lane.b32.xlu0 %v4037, 64
        %v4040 = vpop.permute.xlu0 %4039
        %v4042 = vadd.f32 %v3842, %v4040
        %v4043 = vtanh.pop %v4042
        %v4044 = vsub.f32 1.0, %v4033
        %4046 = vrot.lane.b32.xlu0 %v4043, 96
        %v4047 = vpop.permute.xlu0 %4046
        %v4049 = vmul.f32 %v4044, %v4047
        %v4050 = vrot.slane %v3948, 7
        %v4052 = vmul.f32 %v4033, %v4050
        %v4053 = vadd.f32 %v4049, %v4052
        %v4055 = vrot.slane %v4053, 1
        %4056 = vrot.lane.b32.xlu0 %v4055, 96
        %v4057 = vpop.permute.xlu0 %4056
        %v4058 = vsel %vm2128, %v4057, 0
        %4060 = vmatprep.subr.mxu0 0.0
        %4061 = vmatpush1.msra.mxu0 %v3845
        %4062 = vmatprep.subr.mxu0 0.0
        %4063 = vmatpush1.msra.mxu0 %v3846
        %4064 = vmatprep.subr.mxu0 0.0
        %4065 = vmatpush1.msra.mxu0 %v3847
        %4066 = vmatprep.subr.mxu0 0.0
        %4067 = vmatpush1.msra.mxu0 %v3848
        %4068 = vmatprep.subr.mxu0 0.0
        %4069 = vmatpush1.msra.mxu0 0.0
        %4070 = vmatprep.subr.mxu0 0.0
        %4071 = vmatpush1.msra.mxu0 0.0
        %4072 = vmatprep.subr.mxu0 0.0
        %4073 = vmatpush1.msra.mxu0 0.0
        %4074 = vmatprep.subr.mxu0 0.0
        %4075 = vmatpush1.msra.mxu0 0.0
        %4076 = vmatprep.subr.mxu0 0.0
        %4077 = vmatpush1.msra.mxu0 0.0
        %4078 = vmatprep.subr.mxu0 0.0
        %4079 = vmatpush1.msra.mxu0 0.0
        %4080 = vmatprep.subr.mxu0 0.0
        %4081 = vmatpush1.msra.mxu0 0.0
        %4082 = vmatprep.subr.mxu0 0.0
        %4083 = vmatpush1.msra.mxu0 0.0
        %4084 = vmatprep.subr.mxu0 0.0
        %4085 = vmatpush1.msra.mxu0 0.0
        %4086 = vmatprep.subr.mxu0 0.0
        %4087 = vmatpush1.msra.mxu0 0.0
        %4088 = vmatprep.subr.mxu0 0.0
        %4089 = vmatpush1.msra.mxu0 0.0
        %4090 = vmatprep.subr.mxu0 0.0
        %4091 = vmatpush1.msra.mxu0 0.0
        %4092 = vmatprep.subr.mxu0 0.0
        %4093 = vmatpush1.msra.mxu0 0.0
        %4094 = vmatprep.subr.mxu0 0.0
        %4095 = vmatpush1.msra.mxu0 0.0
        %4096 = vmatprep.subr.mxu0 0.0
        %4097 = vmatpush1.msra.mxu0 0.0
        %4098 = vmatprep.subr.mxu0 0.0
        %4099 = vmatpush1.msra.mxu0 0.0
        %4100 = vmatprep.subr.mxu0 0.0
        %4101 = vmatpush1.msra.mxu0 0.0
        %4102 = vmatprep.subr.mxu0 0.0
        %4103 = vmatpush1.msra.mxu0 0.0
        %4104 = vmatprep.subr.mxu0 0.0
        %4105 = vmatpush1.msra.mxu0 0.0
        %4106 = vmatprep.subr.mxu0 0.0
        %4107 = vmatpush1.msra.mxu0 0.0
        %4108 = vmatprep.subr.mxu0 0.0
        %4109 = vmatpush1.msra.mxu0 0.0
        %4110 = vmatprep.subr.mxu0 0.0
        %4111 = vmatpush1.msra.mxu0 0.0
        %4112 = vmatprep.subr.mxu0 0.0
        %4113 = vmatpush1.msra.mxu0 0.0
        %4114 = vmatprep.subr.mxu0 0.0
        %4115 = vmatpush1.msra.mxu0 0.0
        %4116 = vmatprep.subr.mxu0 0.0
        %4117 = vmatpush1.msra.mxu0 0.0
        %4118 = vmatprep.subr.mxu0 0.0
        %4119 = vmatpush1.msra.mxu0 0.0
        %4120 = vmatprep.subr.mxu0 0.0
        %4121 = vmatpush1.msra.mxu0 0.0
        %4122 = vmatprep.subr.mxu0 0.0
        %4123 = vmatpush1.msra.mxu0 0.0
        %4124 = vmatprep.mubr.f32.mxu0 0.0
        %4125 = vmatmul.mubr.f32.gmra.mrb[0].mxu0 %v4058
        %v4126 = vpop.f32.mrb[0].mxu0
        %v4127 = vadd.f32 %v3849, %v4126
        %v4128 = vpop.f32.mrb[0].mxu0
        %4129 = vdwg.mxu0
        %v4131 = vrot.slane %v4127, 6
        %v4133 = vadd.f32 %v3842, %v4131
        %v4134 = vxor.u32 %v4133, 2147483648
        %v4135 = vmul.f32 %v4134, 1.442695
        %v4136 = vpow.pop %v4135
        %v4137 = vadd.f32 %v4136, 1.0
        %v4138 = vrcp.pop %v4137
        %v4139 = vmul.f32 1.0, %v4138
        %4140 = vrot.lane.b32.xlu0 %v4131, 64
        %v4141 = vpop.permute.xlu0 %4140
        %v4143 = vmul.f32 %v4139, %v4141
        %4145 = vrot.lane.b32.xlu0 %v4143, 64
        %v4146 = vpop.permute.xlu0 %4145
        %v4148 = vadd.f32 %v3842, %v4146
        %v4149 = vtanh.pop %v4148
        %v4150 = vsub.f32 1.0, %v4139
        %4152 = vrot.lane.b32.xlu0 %v4149, 96
        %v4153 = vpop.permute.xlu0 %4152
        %v4155 = vmul.f32 %v4150, %v4153
        %v4156 = vrot.slane %v4053, 7
        %v4158 = vmul.f32 %v4139, %v4156
        %v4159 = vadd.f32 %v4155, %v4158
        %v4161 = vrot.slane %v4159, 2
        %4162 = vrot.lane.b32.xlu0 %v4161, 96
        %v4163 = vpop.permute.xlu0 %4162
        %v4164 = vsel %vm2128, %v4163, 0
        %4166 = vmatprep.subr.mxu0 0.0
        %4167 = vmatpush1.msra.mxu0 %v3845
        %4168 = vmatprep.subr.mxu0 0.0
        %4169 = vmatpush1.msra.mxu0 %v3846
        %4170 = vmatprep.subr.mxu0 0.0
        %4171 = vmatpush1.msra.mxu0 %v3847
        %4172 = vmatprep.subr.mxu0 0.0
        %4173 = vmatpush1.msra.mxu0 %v3848
        %4174 = vmatprep.subr.mxu0 0.0
        %4175 = vmatpush1.msra.mxu0 0.0
        %4176 = vmatprep.subr.mxu0 0.0
        %4177 = vmatpush1.msra.mxu0 0.0
        %4178 = vmatprep.subr.mxu0 0.0
        %4179 = vmatpush1.msra.mxu0 0.0
        %4180 = vmatprep.subr.mxu0 0.0
        %4181 = vmatpush1.msra.mxu0 0.0
        %4182 = vmatprep.subr.mxu0 0.0
        %4183 = vmatpush1.msra.mxu0 0.0
        %4184 = vmatprep.subr.mxu0 0.0
        %4185 = vmatpush1.msra.mxu0 0.0
        %4186 = vmatprep.subr.mxu0 0.0
        %4187 = vmatpush1.msra.mxu0 0.0
        %4188 = vmatprep.subr.mxu0 0.0
        %4189 = vmatpush1.msra.mxu0 0.0
        %4190 = vmatprep.subr.mxu0 0.0
        %4191 = vmatpush1.msra.mxu0 0.0
        %4192 = vmatprep.subr.mxu0 0.0
        %4193 = vmatpush1.msra.mxu0 0.0
        %4194 = vmatprep.subr.mxu0 0.0
        %4195 = vmatpush1.msra.mxu0 0.0
        %4196 = vmatprep.subr.mxu0 0.0
        %4197 = vmatpush1.msra.mxu0 0.0
        %4198 = vmatprep.subr.mxu0 0.0
        %4199 = vmatpush1.msra.mxu0 0.0
        %4200 = vmatprep.subr.mxu0 0.0
        %4201 = vmatpush1.msra.mxu0 0.0
        %4202 = vmatprep.subr.mxu0 0.0
        %4203 = vmatpush1.msra.mxu0 0.0
        %4204 = vmatprep.subr.mxu0 0.0
        %4205 = vmatpush1.msra.mxu0 0.0
        %4206 = vmatprep.subr.mxu0 0.0
        %4207 = vmatpush1.msra.mxu0 0.0
        %4208 = vmatprep.subr.mxu0 0.0
        %4209 = vmatpush1.msra.mxu0 0.0
        %4210 = vmatprep.subr.mxu0 0.0
        %4211 = vmatpush1.msra.mxu0 0.0
        %4212 = vmatprep.subr.mxu0 0.0
        %4213 = vmatpush1.msra.mxu0 0.0
        %4214 = vmatprep.subr.mxu0 0.0
        %4215 = vmatpush1.msra.mxu0 0.0
        %4216 = vmatprep.subr.mxu0 0.0
        %4217 = vmatpush1.msra.mxu0 0.0
        %4218 = vmatprep.subr.mxu0 0.0
        %4219 = vmatpush1.msra.mxu0 0.0
        %4220 = vmatprep.subr.mxu0 0.0
        %4221 = vmatpush1.msra.mxu0 0.0
        %4222 = vmatprep.subr.mxu0 0.0
        %4223 = vmatpush1.msra.mxu0 0.0
        %4224 = vmatprep.subr.mxu0 0.0
        %4225 = vmatpush1.msra.mxu0 0.0
        %4226 = vmatprep.subr.mxu0 0.0
        %4227 = vmatpush1.msra.mxu0 0.0
        %4228 = vmatprep.subr.mxu0 0.0
        %4229 = vmatpush1.msra.mxu0 0.0
        %4230 = vmatprep.mubr.f32.mxu0 0.0
        %4231 = vmatmul.mubr.f32.gmra.mrb[0].mxu0 %v4164
        %v4232 = vpop.f32.mrb[0].mxu0
        %v4233 = vadd.f32 %v3849, %v4232
        %v4234 = vpop.f32.mrb[0].mxu0
        %4235 = vdwg.mxu0
        %v4237 = vrot.slane %v4233, 5
        %v4239 = vadd.f32 %v3842, %v4237
        %v4240 = vxor.u32 %v4239, 2147483648
        %v4241 = vmul.f32 %v4240, 1.442695
        %v4242 = vpow.pop %v4241
        %v4243 = vadd.f32 %v4242, 1.0
        %v4244 = vrcp.pop %v4243
        %v4245 = vmul.f32 1.0, %v4244
        %4246 = vrot.lane.b32.xlu0 %v4237, 64
        %v4247 = vpop.permute.xlu0 %4246
        %v4249 = vmul.f32 %v4245, %v4247
        %4251 = vrot.lane.b32.xlu0 %v4249, 64
        %v4252 = vpop.permute.xlu0 %4251
        %v4254 = vadd.f32 %v3842, %v4252
        %v4255 = vtanh.pop %v4254
        %v4256 = vsub.f32 1.0, %v4245
        %4258 = vrot.lane.b32.xlu0 %v4255, 96
        %v4259 = vpop.permute.xlu0 %4258
        %v4261 = vmul.f32 %v4256, %v4259
        %v4262 = vrot.slane %v4159, 7
        %v4264 = vmul.f32 %v4245, %v4262
        %v4265 = vadd.f32 %v4261, %v4264
        %v4267 = vrot.slane %v4265, 3
        %4268 = vrot.lane.b32.xlu0 %v4267, 96
        %v4269 = vpop.permute.xlu0 %4268
        %v4270 = vsel %vm2128, %v4269, 0
        %4272 = vmatprep.subr.mxu0 0.0
        %4273 = vmatpush1.msra.mxu0 %v3845
        %4274 = vmatprep.subr.mxu0 0.0
        %4275 = vmatpush1.msra.mxu0 %v3846
        %4276 = vmatprep.subr.mxu0 0.0
        %4277 = vmatpush1.msra.mxu0 %v3847
        %4278 = vmatprep.subr.mxu0 0.0
        %4279 = vmatpush1.msra.mxu0 %v3848
        %4280 = vmatprep.subr.mxu0 0.0
        %4281 = vmatpush1.msra.mxu0 0.0
        %4282 = vmatprep.subr.mxu0 0.0
        %4283 = vmatpush1.msra.mxu0 0.0
        %4284 = vmatprep.subr.mxu0 0.0
        %4285 = vmatpush1.msra.mxu0 0.0
        %4286 = vmatprep.subr.mxu0 0.0
        %4287 = vmatpush1.msra.mxu0 0.0
        %4288 = vmatprep.subr.mxu0 0.0
        %4289 = vmatpush1.msra.mxu0 0.0
        %4290 = vmatprep.subr.mxu0 0.0
        %4291 = vmatpush1.msra.mxu0 0.0
        %4292 = vmatprep.subr.mxu0 0.0
        %4293 = vmatpush1.msra.mxu0 0.0
        %4294 = vmatprep.subr.mxu0 0.0
        %4295 = vmatpush1.msra.mxu0 0.0
        %4296 = vmatprep.subr.mxu0 0.0
        %4297 = vmatpush1.msra.mxu0 0.0
        %4298 = vmatprep.subr.mxu0 0.0
        %4299 = vmatpush1.msra.mxu0 0.0
        %4300 = vmatprep.subr.mxu0 0.0
        %4301 = vmatpush1.msra.mxu0 0.0
        %4302 = vmatprep.subr.mxu0 0.0
        %4303 = vmatpush1.msra.mxu0 0.0
        %4304 = vmatprep.subr.mxu0 0.0
        %4305 = vmatpush1.msra.mxu0 0.0
        %4306 = vmatprep.subr.mxu0 0.0
        %4307 = vmatpush1.msra.mxu0 0.0
        %4308 = vmatprep.subr.mxu0 0.0
        %4309 = vmatpush1.msra.mxu0 0.0
        %4310 = vmatprep.subr.mxu0 0.0
        %4311 = vmatpush1.msra.mxu0 0.0
        %4312 = vmatprep.subr.mxu0 0.0
        %4313 = vmatpush1.msra.mxu0 0.0
        %4314 = vmatprep.subr.mxu0 0.0
        %4315 = vmatpush1.msra.mxu0 0.0
        %4316 = vmatprep.subr.mxu0 0.0
        %4317 = vmatpush1.msra.mxu0 0.0
        %4318 = vmatprep.subr.mxu0 0.0
        %4319 = vmatpush1.msra.mxu0 0.0
        %4320 = vmatprep.subr.mxu0 0.0
        %4321 = vmatpush1.msra.mxu0 0.0
        %4322 = vmatprep.subr.mxu0 0.0
        %4323 = vmatpush1.msra.mxu0 0.0
        %4324 = vmatprep.subr.mxu0 0.0
        %4325 = vmatpush1.msra.mxu0 0.0
        %4326 = vmatprep.subr.mxu0 0.0
        %4327 = vmatpush1.msra.mxu0 0.0
        %4328 = vmatprep.subr.mxu0 0.0
        %4329 = vmatpush1.msra.mxu0 0.0
        %4330 = vmatprep.subr.mxu0 0.0
        %4331 = vmatpush1.msra.mxu0 0.0
        %4332 = vmatprep.subr.mxu0 0.0
        %4333 = vmatpush1.msra.mxu0 0.0
        %4334 = vmatprep.subr.mxu0 0.0
        %4335 = vmatpush1.msra.mxu0 0.0
        %4336 = vmatprep.mubr.f32.mxu0 0.0
        %4337 = vmatmul.mubr.f32.gmra.mrb[0].mxu0 %v4270
        %v4338 = vpop.f32.mrb[0].mxu0
        %v4339 = vadd.f32 %v3849, %v4338
        %v4340 = vpop.f32.mrb[0].mxu0
        %4341 = vdwg.mxu0
        %v4343 = vrot.slane %v4339, 4
        %v4345 = vadd.f32 %v3842, %v4343
        %v4346 = vxor.u32 %v4345, 2147483648
        %v4347 = vmul.f32 %v4346, 1.442695
        %v4348 = vpow.pop %v4347
        %v4349 = vadd.f32 %v4348, 1.0
        %v4350 = vrcp.pop %v4349
        %v4351 = vmul.f32 1.0, %v4350
        %4352 = vrot.lane.b32.xlu0 %v4343, 64
        %v4353 = vpop.permute.xlu0 %4352
        %v4355 = vmul.f32 %v4351, %v4353
        %4357 = vrot.lane.b32.xlu0 %v4355, 64
        %v4358 = vpop.permute.xlu0 %4357
        %v4360 = vadd.f32 %v3842, %v4358
        %v4361 = vtanh.pop %v4360
        %v4362 = vsub.f32 1.0, %v4351
        %4364 = vrot.lane.b32.xlu0 %v4361, 96
        %v4365 = vpop.permute.xlu0 %4364
        %v4367 = vmul.f32 %v4362, %v4365
        %v4368 = vrot.slane %v4265, 7
        %v4370 = vmul.f32 %v4351, %v4368
        %v4371 = vadd.f32 %v4367, %v4370
        %v4373 = vrot.slane %v4371, 4
        %4374 = vrot.lane.b32.xlu0 %v4373, 96
        %v4375 = vpop.permute.xlu0 %4374
        %v4376 = vsel %vm2128, %v4375, 0
        %4378 = vmatprep.subr.mxu0 0.0
        %4379 = vmatpush1.msra.mxu0 %v3845
        %4380 = vmatprep.subr.mxu0 0.0
        %4381 = vmatpush1.msra.mxu0 %v3846
        %4382 = vmatprep.subr.mxu0 0.0
        %4383 = vmatpush1.msra.mxu0 %v3847
        %4384 = vmatprep.subr.mxu0 0.0
        %4385 = vmatpush1.msra.mxu0 %v3848
        %4386 = vmatprep.subr.mxu0 0.0
        %4387 = vmatpush1.msra.mxu0 0.0
        %4388 = vmatprep.subr.mxu0 0.0
        %4389 = vmatpush1.msra.mxu0 0.0
        %4390 = vmatprep.subr.mxu0 0.0
        %4391 = vmatpush1.msra.mxu0 0.0
        %4392 = vmatprep.subr.mxu0 0.0
        %4393 = vmatpush1.msra.mxu0 0.0
        %4394 = vmatprep.subr.mxu0 0.0
        %4395 = vmatpush1.msra.mxu0 0.0
        %4396 = vmatprep.subr.mxu0 0.0
        %4397 = vmatpush1.msra.mxu0 0.0
        %4398 = vmatprep.subr.mxu0 0.0
        %4399 = vmatpush1.msra.mxu0 0.0
        %4400 = vmatprep.subr.mxu0 0.0
        %4401 = vmatpush1.msra.mxu0 0.0
        %4402 = vmatprep.subr.mxu0 0.0
        %4403 = vmatpush1.msra.mxu0 0.0
        %4404 = vmatprep.subr.mxu0 0.0
        %4405 = vmatpush1.msra.mxu0 0.0
        %4406 = vmatprep.subr.mxu0 0.0
        %4407 = vmatpush1.msra.mxu0 0.0
        %4408 = vmatprep.subr.mxu0 0.0
        %4409 = vmatpush1.msra.mxu0 0.0
        %4410 = vmatprep.subr.mxu0 0.0
        %4411 = vmatpush1.msra.mxu0 0.0
        %4412 = vmatprep.subr.mxu0 0.0
        %4413 = vmatpush1.msra.mxu0 0.0
        %4414 = vmatprep.subr.mxu0 0.0
        %4415 = vmatpush1.msra.mxu0 0.0
        %4416 = vmatprep.subr.mxu0 0.0
        %4417 = vmatpush1.msra.mxu0 0.0
        %4418 = vmatprep.subr.mxu0 0.0
        %4419 = vmatpush1.msra.mxu0 0.0
        %4420 = vmatprep.subr.mxu0 0.0
        %4421 = vmatpush1.msra.mxu0 0.0
        %4422 = vmatprep.subr.mxu0 0.0
        %4423 = vmatpush1.msra.mxu0 0.0
        %4424 = vmatprep.subr.mxu0 0.0
        %4425 = vmatpush1.msra.mxu0 0.0
        %4426 = vmatprep.subr.mxu0 0.0
        %4427 = vmatpush1.msra.mxu0 0.0
        %4428 = vmatprep.subr.mxu0 0.0
        %4429 = vmatpush1.msra.mxu0 0.0
        %4430 = vmatprep.subr.mxu0 0.0
        %4431 = vmatpush1.msra.mxu0 0.0
        %4432 = vmatprep.subr.mxu0 0.0
        %4433 = vmatpush1.msra.mxu0 0.0
        %4434 = vmatprep.subr.mxu0 0.0
        %4435 = vmatpush1.msra.mxu0 0.0
        %4436 = vmatprep.subr.mxu0 0.0
        %4437 = vmatpush1.msra.mxu0 0.0
        %4438 = vmatprep.subr.mxu0 0.0
        %4439 = vmatpush1.msra.mxu0 0.0
        %4440 = vmatprep.subr.mxu0 0.0
        %4441 = vmatpush1.msra.mxu0 0.0
        %4442 = vmatprep.mubr.f32.mxu0 0.0
        %4443 = vmatmul.mubr.f32.gmra.mrb[0].mxu0 %v4376
        %v4444 = vpop.f32.mrb[0].mxu0
        %v4445 = vadd.f32 %v3849, %v4444
        %v4446 = vpop.f32.mrb[0].mxu0
        %4447 = vdwg.mxu0
        %v4449 = vrot.slane %v4445, 3
        %v4451 = vadd.f32 %v3842, %v4449
        %v4452 = vxor.u32 %v4451, 2147483648
        %v4453 = vmul.f32 %v4452, 1.442695
        %v4454 = vpow.pop %v4453
        %v4455 = vadd.f32 %v4454, 1.0
        %v4456 = vrcp.pop %v4455
        %v4457 = vmul.f32 1.0, %v4456
        %4458 = vrot.lane.b32.xlu0 %v4449, 64
        %v4459 = vpop.permute.xlu0 %4458
        %v4461 = vmul.f32 %v4457, %v4459
        %4463 = vrot.lane.b32.xlu0 %v4461, 64
        %v4464 = vpop.permute.xlu0 %4463
        %v4466 = vadd.f32 %v3842, %v4464
        %v4467 = vtanh.pop %v4466
        %v4468 = vsub.f32 1.0, %v4457
        %4470 = vrot.lane.b32.xlu0 %v4467, 96
        %v4471 = vpop.permute.xlu0 %4470
        %v4473 = vmul.f32 %v4468, %v4471
        %v4474 = vrot.slane %v4371, 7
        %v4476 = vmul.f32 %v4457, %v4474
        %v4477 = vadd.f32 %v4473, %v4476
        %v4478 = vld [vmem:[%s51] sm:$0xff]
        %v4479 = vld [vmem:[%s51 + $0x8] sm:$0xff]
        %v4480 = vld [vmem:[%s51 + $0x10] sm:$0xff]
        %v4481 = vld [vmem:[%s51 + $0x18] sm:$0xff]
        %v4482 = vld [vmem:[%s53] sm:$0x1]
        %v4484 = vrot.slane %v4477, 5
        %4485 = vrot.lane.b32.xlu0 %v4484, 96
        %v4486 = vpop.permute.xlu0 %4485
        %v4487 = vsel %vm2128, %v4486, 0
        %4489 = vmatprep.subr.mxu0 0.0
        %4490 = vmatpush1.msra.mxu0 %v4478
        %4491 = vmatprep.subr.mxu0 0.0
        %4492 = vmatpush1.msra.mxu0 %v4479
        %4493 = vmatprep.subr.mxu0 0.0
        %4494 = vmatpush1.msra.mxu0 %v4480
        %4495 = vmatprep.subr.mxu0 0.0
        %4496 = vmatpush1.msra.mxu0 %v4481
        %4497 = vmatprep.subr.mxu0 0.0
        %4498 = vmatpush1.msra.mxu0 0.0
        %4499 = vmatprep.subr.mxu0 0.0
        %4500 = vmatpush1.msra.mxu0 0.0
        %4501 = vmatprep.subr.mxu0 0.0
        %4502 = vmatpush1.msra.mxu0 0.0
        %4503 = vmatprep.subr.mxu0 0.0
        %4504 = vmatpush1.msra.mxu0 0.0
        %4505 = vmatprep.subr.mxu0 0.0
        %4506 = vmatpush1.msra.mxu0 0.0
        %4507 = vmatprep.subr.mxu0 0.0
        %4508 = vmatpush1.msra.mxu0 0.0
        %4509 = vmatprep.subr.mxu0 0.0
        %4510 = vmatpush1.msra.mxu0 0.0
        %4511 = vmatprep.subr.mxu0 0.0
        %4512 = vmatpush1.msra.mxu0 0.0
        %4513 = vmatprep.subr.mxu0 0.0
        %4514 = vmatpush1.msra.mxu0 0.0
        %4515 = vmatprep.subr.mxu0 0.0
        %4516 = vmatpush1.msra.mxu0 0.0
        %4517 = vmatprep.subr.mxu0 0.0
        %4518 = vmatpush1.msra.mxu0 0.0
        %4519 = vmatprep.subr.mxu0 0.0
        %4520 = vmatpush1.msra.mxu0 0.0
        %4521 = vmatprep.subr.mxu0 0.0
        %4522 = vmatpush1.msra.mxu0 0.0
        %4523 = vmatprep.subr.mxu0 0.0
        %4524 = vmatpush1.msra.mxu0 0.0
        %4525 = vmatprep.subr.mxu0 0.0
        %4526 = vmatpush1.msra.mxu0 0.0
        %4527 = vmatprep.subr.mxu0 0.0
        %4528 = vmatpush1.msra.mxu0 0.0
        %4529 = vmatprep.subr.mxu0 0.0
        %4530 = vmatpush1.msra.mxu0 0.0
        %4531 = vmatprep.subr.mxu0 0.0
        %4532 = vmatpush1.msra.mxu0 0.0
        %4533 = vmatprep.subr.mxu0 0.0
        %4534 = vmatpush1.msra.mxu0 0.0
        %4535 = vmatprep.subr.mxu0 0.0
        %4536 = vmatpush1.msra.mxu0 0.0
        %4537 = vmatprep.subr.mxu0 0.0
        %4538 = vmatpush1.msra.mxu0 0.0
        %4539 = vmatprep.subr.mxu0 0.0
        %4540 = vmatpush1.msra.mxu0 0.0
        %4541 = vmatprep.subr.mxu0 0.0
        %4542 = vmatpush1.msra.mxu0 0.0
        %4543 = vmatprep.subr.mxu0 0.0
        %4544 = vmatpush1.msra.mxu0 0.0
        %4545 = vmatprep.subr.mxu0 0.0
        %4546 = vmatpush1.msra.mxu0 0.0
        %4547 = vmatprep.subr.mxu0 0.0
        %4548 = vmatpush1.msra.mxu0 0.0
        %4549 = vmatprep.subr.mxu0 0.0
        %4550 = vmatpush1.msra.mxu0 0.0
        %4551 = vmatprep.subr.mxu0 0.0
        %4552 = vmatpush1.msra.mxu0 0.0
        %4553 = vmatprep.mubr.f32.mxu0 0.0
        %4554 = vmatmul.mubr.f32.gmra.mrb[0].mxu0 %v4487
        %v4555 = vpop.f32.mrb[0].mxu0
        %v4556 = vadd.f32 %v4482, %v4555
        %v4557 = vpop.f32.mrb[0].mxu0
        %4558 = vdwg.mxu0
        %v4559 = vmax.f32 %v4556, 0.0
        %v4560 = vld [vmem:[%s55] sm:$0xff]
        %v4561 = vld [vmem:[%s55 + $0x8] sm:$0xff]
        %v4562 = vld [vmem:[%s55 + $0x10] sm:$0xff]
        %v4563 = vld [vmem:[%s55 + $0x18] sm:$0xff]
        %v4564 = vld [vmem:[%s57] sm:$0x1]
        %v4566 = vsel %vm2128, %v4559, 0
        %4568 = vmatprep.subr.mxu0 0.0
        %4569 = vmatpush1.msra.mxu0 %v4560
        %4570 = vmatprep.subr.mxu0 0.0
        %4571 = vmatpush1.msra.mxu0 %v4561
        %4572 = vmatprep.subr.mxu0 0.0
        %4573 = vmatpush1.msra.mxu0 %v4562
        %4574 = vmatprep.subr.mxu0 0.0
        %4575 = vmatpush1.msra.mxu0 %v4563
        %4576 = vmatprep.subr.mxu0 0.0
        %4577 = vmatpush1.msra.mxu0 0.0
        %4578 = vmatprep.subr.mxu0 0.0
        %4579 = vmatpush1.msra.mxu0 0.0
        %4580 = vmatprep.subr.mxu0 0.0
        %4581 = vmatpush1.msra.mxu0 0.0
        %4582 = vmatprep.subr.mxu0 0.0
        %4583 = vmatpush1.msra.mxu0 0.0
        %4584 = vmatprep.subr.mxu0 0.0
        %4585 = vmatpush1.msra.mxu0 0.0
        %4586 = vmatprep.subr.mxu0 0.0
        %4587 = vmatpush1.msra.mxu0 0.0
        %4588 = vmatprep.subr.mxu0 0.0
        %4589 = vmatpush1.msra.mxu0 0.0
        %4590 = vmatprep.subr.mxu0 0.0
        %4591 = vmatpush1.msra.mxu0 0.0
        %4592 = vmatprep.subr.mxu0 0.0
        %4593 = vmatpush1.msra.mxu0 0.0
        %4594 = vmatprep.subr.mxu0 0.0
        %4595 = vmatpush1.msra.mxu0 0.0
        %4596 = vmatprep.subr.mxu0 0.0
        %4597 = vmatpush1.msra.mxu0 0.0
        %4598 = vmatprep.subr.mxu0 0.0
        %4599 = vmatpush1.msra.mxu0 0.0
        %4600 = vmatprep.subr.mxu0 0.0
        %4601 = vmatpush1.msra.mxu0 0.0
        %4602 = vmatprep.subr.mxu0 0.0
        %4603 = vmatpush1.msra.mxu0 0.0
        %4604 = vmatprep.subr.mxu0 0.0
        %4605 = vmatpush1.msra.mxu0 0.0
        %4606 = vmatprep.subr.mxu0 0.0
        %4607 = vmatpush1.msra.mxu0 0.0
        %4608 = vmatprep.subr.mxu0 0.0
        %4609 = vmatpush1.msra.mxu0 0.0
        %4610 = vmatprep.subr.mxu0 0.0
        %4611 = vmatpush1.msra.mxu0 0.0
        %4612 = vmatprep.subr.mxu0 0.0
        %4613 = vmatpush1.msra.mxu0 0.0
        %4614 = vmatprep.subr.mxu0 0.0
        %4615 = vmatpush1.msra.mxu0 0.0
        %4616 = vmatprep.subr.mxu0 0.0
        %4617 = vmatpush1.msra.mxu0 0.0
        %4618 = vmatprep.subr.mxu0 0.0
        %4619 = vmatpush1.msra.mxu0 0.0
        %4620 = vmatprep.subr.mxu0 0.0
        %4621 = vmatpush1.msra.mxu0 0.0
        %4622 = vmatprep.subr.mxu0 0.0
        %4623 = vmatpush1.msra.mxu0 0.0
        %4624 = vmatprep.subr.mxu0 0.0
        %4625 = vmatpush1.msra.mxu0 0.0
        %4626 = vmatprep.subr.mxu0 0.0
        %4627 = vmatpush1.msra.mxu0 0.0
        %4628 = vmatprep.subr.mxu0 0.0
        %4629 = vmatpush1.msra.mxu0 0.0
        %4630 = vmatprep.subr.mxu0 0.0
        %4631 = vmatpush1.msra.mxu0 0.0
        %4632 = vmatprep.mubr.f32.mxu0 0.0
        %4633 = vmatmul.mubr.f32.gmra.mrb[0].mxu0 %v4566
        %v4634 = vpop.f32.mrb[0].mxu0
        %v4635 = vadd.f32 %v4564, %v4634
        %v4636 = vpop.f32.mrb[0].mxu0
        %4637 = vdwg.mxu0
        %v4638 = vld [vmem:[#allocation2] sm:$0x1]
        %4640 = vset.pattern.permute.xlu0 0
        %4641 = vperm.xlu0 %4640, %v4638
        %v4642 = vpop.permute.xlu0 %4641
        %v4644 = vlaneseq
        %v4645 = vshrl.u32 %v4644, 7
        %v4646 = vsub.s32 0, %v4645
        %v4647 = vrot.slane %v4642, %v4646
        %v4648 = vmul.f32 %v4635, %v4647
        %vm4649 = vcmask 16384
        %4650 = vst.msk [vmem:[%s924] sm:$0x1] %vm4649, %v4648
        %s4651 = sand.u32 %s720, 1
        %s4652 = scalar_lea.sflag [#allocation4], %s4651
        %s4653 = sand.u32 %s720, 1
        %s4654 = scalar_lea.vmem [#allocation3], %s4653
        // Predicated region
        $region141: #{tpu_custom_call.1} parent=139 // pred_check
          %p4655 = pneg %p730
        $region142: #{tpu_custom_call.1} parent=139 // pred_check_branch
          %4657 = sbr.rel (%p4655) target = $region144
        $region143: #{tpu_custom_call.1} parent=139 // pred_region
          %s4659 = ssub.s32 16, 16
          %4660 = vsyncadd %s4652, %s4659
          %s4661 = smul.addr %s77, 16
          %s4662 = scalar_lea.hbm %s61, %s4661
          %s4664 = sshll.u32 %s4654, 4
          %s4665 = int_to_ptr.vmem [resolvable:$true] %s4664
          %4667 = dma.vmem_to_hbm [thread:$0]  %s4665, 16, %s4662, %s4652
        $region144: #{tpu_custom_call.1} parent=139 // pred_fallthru
          _
      $region140: #{tpu_custom_call.1} parent=5 // pred_fallthru
        _
      %p4668 = scmp.le.s32.totalorder 2, %s72
      // Predicated region
      $region145: #{tpu_custom_call.1} parent=5 // pred_check
        %p4669 = pneg %p4668
      $region146: #{tpu_custom_call.1} parent=5 // pred_check_branch
        %4671 = sbr.rel (%p4669) target = $region148
      $region147: #{tpu_custom_call.1} parent=5 // pred_region
        %s4672 = ssub.s32 %s72, 2
        // Predicated region
        $region149: #{tpu_custom_call.1} parent=147 // pred_check
          %p4673 = pneg %p736
        $region150: #{tpu_custom_call.1} parent=147 // pred_check_branch
          %4675 = sbr.rel (%p4673) target = $region152
        $region151: #{tpu_custom_call.1} parent=147 // pred_region
          %s4676 = sand.u32 %s721, 1
          %s4677 = scalar_lea.sflag [#allocation4], %s4676
          %s4678 = sand.u32 %s721, 1
          %s4679 = scalar_lea.vmem [#allocation3], %s4678
          %4680 = dma.done %s4677, 16
        $region152: #{tpu_custom_call.1} parent=147 // pred_fallthru
          _
      $region148: #{tpu_custom_call.1} parent=5 // pred_fallthru
        _
    $region6: #{tpu_custom_call.1} parent=1 // loop_footer
      %s76 = sadd.s32 1, %s72
    $region7: #{tpu_custom_call.1} parent=1 // loop_footer_branch
      %71 = sbr.rel target = $region3
    $region8: #{tpu_custom_call.1} parent=1 // loop_exit
      _
    %4681 = vsyncpa [#allocation4], 1
    %s4682 = scalar_lea.sflag [#allocation4], 1
    %4683 = vsyncpa %s4682, 1

</llo_original>
